<compile_context>
chip_gen: v6e
topology: v6e:2x2x1
jax: 0.10.0
libtpu: 0.0.40
codegen_flags: <defaults>
</compile_context>

<pallas_src>
import numpy as np
import jax
import jax.numpy as jnp
from jax import lax
from jax.experimental import pallas as pl
from jax.experimental.pallas import tpu as pltpu

# -------------------- small, deterministic configuration --------------------
B = 2                      # batch
H = W = 8                  # spatial size (x_size = (T, H, W))
T = 4                      # t_length (must divide C)
C = 16                     # dim
NUM_HEADS = 4
WINDOW = 4                 # window_size (divides H, W)
SHIFT = 2                  # shift_size (0 < SHIFT < WINDOW)
HEAD_DIM = C // NUM_HEADS
SCALE = HEAD_DIM ** (-0.5)
N = WINDOW * WINDOW        # tokens per window
NW = (H // WINDOW) * (W // WINDOW)
L = H * W                  # tokens per batch
CG = C // T                # depthwise-conv channels (groups)
NTAP = 9                   # spatial 3x3 taps of the conv
EPS = 1e-5
MASK_RATIO = (30, 80)
USE_MASK = True
NEG = -1e9                 # structural (cross-window) additive mask


# ======================= static tables (numpy, built once) =======================
def rel_pos_index(ws):
    coords = np.stack(np.meshgrid(np.arange(ws), np.arange(ws), indexing="ij"))
    cf = coords.reshape(2, -1)
    rel = (cf[:, :, None] - cf[:, None, :]).transpose(1, 2, 0).astype(np.int64)
    rel[:, :, 0] += ws - 1
    rel[:, :, 1] += ws - 1
    rel[:, :, 0] *= 2 * ws - 1
    return rel.sum(-1)                                        # (N, N)


def calculate_mask(Hh, Ww, ws, s):
    img_mask = np.zeros((1, Hh, Ww, 1), np.float32)
    h_slices = (slice(0, -ws), slice(-ws, -s), slice(-s, None))
    w_slices = (slice(0, -ws), slice(-ws, -s), slice(-s, None))
    cnt = 0
    for hs in h_slices:
        for wsl in w_slices:
            img_mask[:, hs, wsl, :] = cnt
            cnt += 1
    mw = img_mask.reshape(1, Hh // ws, ws, Ww // ws, ws, 1)
    mw = mw.transpose(0, 1, 3, 2, 4, 5).reshape(-1, ws * ws)
    attn_mask = mw[:, None, :] - mw[:, :, None]
    return np.where(attn_mask != 0, -100.0, 0.0).astype(np.float32)   # (NW, N, N)


def build_window_perm(Hh, Ww, ws, s):
    # fwd[p] = original spatial index of the token at windowed position p
    idx = np.arange(Hh * Ww).reshape(Hh, Ww)
    idx = np.roll(idx, (-s, -s), axis=(0, 1))
    idx = idx.reshape(Hh // ws, ws, Ww // ws, ws).transpose(0, 2, 1, 3).reshape(-1)
    fwd = idx.astype(np.int32)
    inv = np.argsort(fwd).astype(np.int32)          # windowed position per token
    return fwd, inv


REL_INDEX = rel_pos_index(WINDOW)                   # (N, N)
ATTN_MASK = calculate_mask(H, W, WINDOW, SHIFT)     # (NW, N, N)
_, PERM_INV = build_window_perm(H, W, WINDOW, SHIFT)

# attention bias permuted into ORIGINAL token order (static part)
POS = PERM_INV                                      # windowed position of token i
PW = POS // N                                       # window id per token
PN = POS % N                                        # within-window position
SAME = (PW[:, None] == PW[None, :])                                   # (L, L)
IDX_ORIG = REL_INDEX[PN[:, None], PN[None, :]].astype(np.int32)       # (L, L)
SMASK_ORIG = ATTN_MASK[PW[:, None], PN[:, None], PN[None, :]]         # (L, L)
BIAS_STATIC = np.where(SAME, SMASK_ORIG, NEG).astype(np.float32)      # (L, L)

HEAD_MASK = (np.arange(C)[None, :] // HEAD_DIM ==
             np.arange(NUM_HEADS)[:, None]).astype(np.float32)        # (NH, C)


def build_spatial_shift():
    # S_k[r_out, r_in] = 1 iff input spatial site (h+kh-1, w+kw-1) is in range,
    # stacked vertically over the 9 spatial taps -> (9*L, L)
    S = np.zeros((NTAP, L, L), np.float32)
    for kh in range(3):
        for kw in range(3):
            k = kh * 3 + kw
            dh, dw = kh - 1, kw - 1
            for h in range(H):
                for w in range(W):
                    hh, ww = h + dh, w + dw
                    if 0 <= hh < H and 0 <= ww < W:
                        S[k, h * W + w, hh * W + ww] = 1.0
    return S.reshape(NTAP * L, L)


S_VERT = build_spatial_shift()                       # (576, 64)


def build_conv_sel():
    # index tables to turn conv_w (CG,1,3,3,3) into the 9 lane-mixing matrices
    # M_k[c_in = cg*T + t_in, c_out = cg*T + t_out] = w[cg, t_in - t_out + 1, kh, kw]
    ksp = np.arange(NTAP)
    kh, kw = ksp // 3, ksp % 3
    cin = np.arange(C)
    cg_in, t_in = cin // T, cin % T
    cout = np.arange(C)
    cg_out, t_out = cout // T, cout % T
    kd = t_in[:, None] - t_out[None, :] + 1                              # (C, C)
    valid = (cg_in[:, None] == cg_out[None, :]) & (kd >= 0) & (kd <= 2)  # (C, C)
    widx = np.clip(kd, 0, 2)[None, :, :] * 9 + (kh * 3 + kw)[:, None, None]
    cgidx = np.broadcast_to(cg_out[None, None, :], (NTAP, C, C))
    return (cgidx.astype(np.int32).copy(), widx.astype(np.int32).copy(),
            np.broadcast_to(valid[None], (NTAP, C, C)).astype(np.float32).copy())


CONV_CG_IDX, CONV_W_IDX, CONV_VALID = build_conv_sel()                 # (9, C, C)


# ======================= single fused Swin-block kernel =======================
def _swin_block_kernel(x_ref, keep_ref, bias_ref, hm_ref,
                       g1_ref, b1_ref, g2_ref, b2_ref,
                       qkvw_ref, qkvb_ref, projw_ref, projb_ref,
                       sconv_ref, mconv_ref, cb_ref, o_ref):
    # ---- mask_feature (feature drop) ; shortcut ----
    x = x_ref[...] * keep_ref[...]                                   # (L, C)

    # ---- LayerNorm 1 (biased variance, like torch) ----
    mu = jnp.mean(x, axis=-1, keepdims=True)
    var = jnp.mean((x - mu) ** 2, axis=-1, keepdims=True)
    xn = (x - mu) * lax.rsqrt(var + EPS) * g1_ref[...] + b1_ref[...]

    # ---- single QKV matmul (qk scale pre-folded into Q columns/bias) ----
    qkv = (jnp.dot(xn, qkvw_ref[...], preferred_element_type=jnp.float32)
           + qkvb_ref[...])                                          # (L, 3C)
    qp = qkv[:, :C]
    kp = qkv[:, C:2 * C]
    vp = qkv[:, 2 * C:]

    # stack heads on the sublane axis with 0/1 lane masks
    q_stack = jnp.concatenate(
        [qp * hm_ref[h] for h in range(NUM_HEADS)], axis=0)          # (NH*L, C)

    # all heads x all tokens in ONE matmul; bias carries rel-pos + shift mask
    # inside a window and -1e9 across windows (original token order)
    s = lax.dot_general(q_stack, kp, (((1,), (1,)), ((), ())),
                        preferred_element_type=jnp.float32)          # (NH*L, L)
    s = s + bias_ref[...]

    # one stacked softmax
    s = s - jnp.max(s, axis=-1, keepdims=True)
    e = jnp.exp(s)
    p = e * pl.reciprocal(jnp.sum(e, axis=-1, keepdims=True), approx=True)

    # one stacked P @ V, then re-assemble heads via the lane masks
    o_stack = jnp.dot(p, vp, preferred_element_type=jnp.float32)     # (NH*L, C)
    o = o_stack[:L, :] * hm_ref[0]
    for h in range(1, NUM_HEADS):
        o = o + o_stack[h * L:(h + 1) * L, :] * hm_ref[h]

    attn = (jnp.dot(o, projw_ref[...], preferred_element_type=jnp.float32)
            + projb_ref[...])
    x1 = x + attn                                                    # residual 1

    # ---- LayerNorm 2 ----
    mu2 = jnp.mean(x1, axis=-1, keepdims=True)
    var2 = jnp.mean((x1 - mu2) ** 2, axis=-1, keepdims=True)
    xn2 = (x1 - mu2) * lax.rsqrt(var2 + EPS) * g2_ref[...] + b2_ref[...]

    # ---- depthwise 3x3x3 Conv3d as matmuls:  sum_k (S_k @ xn2) @ M_k ----
    u = jnp.dot(sconv_ref[...], xn2,
                preferred_element_type=jnp.float32)                  # (9L, C)
    m_all = mconv_ref[...]                                           # (9C, C)
    acc = x1 + cb_ref[...]                                           # residual 2 + bias
    for k in range(NTAP):
        acc = acc + jnp.dot(u[k * L:(k + 1) * L, :],
                            m_all[k * C:(k + 1) * C, :],
                            preferred_element_type=jnp.float32)
    o_ref[...] = acc


def swin_block_pallas(x, keep, bias_big, head_mask, g1, b1, g2, b2,
                      qkv_w_p, qkv_b_p, proj_w_t, proj_b, s_vert, m_cat, cb):
    rep2 = lambda b: (0, 0)
    return pl.pallas_call(
        _swin_block_kernel,
        out_shape=jax.ShapeDtypeStruct((B, L, C), jnp.float32),
        grid=(B,),
        in_specs=[
            pl.BlockSpec((None, L, C), lambda b: (b, 0, 0)),      # x
            pl.BlockSpec((None, L, 1), lambda b: (b, 0, 0)),      # keep mask
            pl.BlockSpec((NUM_HEADS * L, L), rep2),               # attn bias
            pl.BlockSpec((NUM_HEADS, C), rep2),                   # head lane masks
            pl.BlockSpec((1, C), rep2),                           # norm1 gamma
            pl.BlockSpec((1, C), rep2),                           # norm1 beta
            pl.BlockSpec((1, C), rep2),                           # norm2 gamma
            pl.BlockSpec((1, C), rep2),                           # norm2 beta
            pl.BlockSpec((C, 3 * C), rep2),                       # qkv weight (scaled Q)
            pl.BlockSpec((1, 3 * C), rep2),                       # qkv bias
            pl.BlockSpec((C, C), rep2),                           # proj weight
            pl.BlockSpec((1, C), rep2),                           # proj bias
            pl.BlockSpec((NTAP * L, L), rep2),                    # spatial shift matrices
            pl.BlockSpec((NTAP * C, C), rep2),                    # conv lane-mix matrices
            pl.BlockSpec((1, C), rep2),                           # conv bias per lane
        ],
        out_specs=pl.BlockSpec((None, L, C), lambda b: (b, 0, 0)),
        compiler_params=pltpu.CompilerParams(dimension_semantics=("parallel",)),
    )(x, keep, bias_big, head_mask, g1, b1, g2, b2,
      qkv_w_p, qkv_b_p, proj_w_t, proj_b, s_vert, m_cat, cb)


# ================================ parameters ================================
def init_params(key):
    ks = jax.random.split(key, 7)
    p = {}
    p["norm1_g"] = jnp.ones((C,), jnp.float32)
    p["norm1_b"] = jnp.zeros((C,), jnp.float32)
    p["norm2_g"] = jnp.ones((C,), jnp.float32)
    p["norm2_b"] = jnp.zeros((C,), jnp.float32)
    p["qkv_w"] = 0.02 * jax.random.normal(ks[0], (3 * C, C), jnp.float32)
    p["qkv_b"] = 0.02 * jax.random.normal(ks[1], (3 * C,), jnp.float32)
    p["proj_w"] = 0.02 * jax.random.normal(ks[2], (C, C), jnp.float32)
    p["proj_b"] = 0.02 * jax.random.normal(ks[3], (C,), jnp.float32)
    p["rel_table"] = 0.02 * jax.random.normal(
        ks[4], ((2 * WINDOW - 1) * (2 * WINDOW - 1), NUM_HEADS), jnp.float32)
    p["conv_w"] = 0.1 * jax.random.normal(ks[5], (CG, 1, 3, 3, 3), jnp.float32)
    p["conv_b"] = 0.1 * jax.random.normal(ks[6], (CG,), jnp.float32)
    return p


# ================================ forward ================================
@jax.jit
def swin_attention_forward(x, params, key):
    Bb, Ll, Cc = x.shape

    # mask_feature: deterministic jax.random stand-in for python/numpy RNG
    # TODO(synk): reference uses python random + np.random.choice; semantics
    # (Bernoulli drop with prob in [0.30, 0.80], no rescale) are preserved.
    if USE_MASK:
        k1, k2 = jax.random.split(key)
        prob = jax.random.randint(k1, (), MASK_RATIO[0],
                                  MASK_RATIO[1] + 1).astype(jnp.float32) / 100.0
        keep = (jax.random.uniform(k2, (Bb, Ll, 1)) >= prob).astype(jnp.float32)
    else:
        keep = jnp.ones((Bb, Ll, 1), jnp.float32)

    # combined attention bias in ORIGINAL token order:
    #   rel-pos bias + shift mask inside a window, -1e9 across windows
    rel = params["rel_table"][jnp.asarray(IDX_ORIG.reshape(-1))]       # (L*L, NH)
    rel = rel.reshape(L, L, NUM_HEADS).transpose(2, 0, 1)              # (NH, L, L)
    bias_big = (rel + jnp.asarray(BIAS_STATIC)[None]).reshape(NUM_HEADS * L, L)

    # qkv weights with the qk scale folded into the Q columns / bias
    qkv_w_t = params["qkv_w"].T                                        # (C, 3C)
    qkv_w_p = jnp.concatenate([qkv_w_t[:, :C] * SCALE, qkv_w_t[:, C:]], axis=1)
    qkv_b_p = jnp.concatenate([params["qkv_b"][:C] * SCALE, params["qkv_b"][C:]])

    # depthwise-conv lane-mixing matrices (t-shift x per-group weight) per tap
    w3 = params["conv_w"].reshape(CG, 27)
    m_cat = (w3[jnp.asarray(CONV_CG_IDX), jnp.asarray(CONV_W_IDX)]
             * jnp.asarray(CONV_VALID)).reshape(NTAP * C, C)
    cb = jnp.repeat(params["conv_b"], T).reshape(1, C)                 # per lane cg*T+t

    return swin_block_pallas(
        x, keep, bias_big, jnp.asarray(HEAD_MASK),
        params["norm1_g"].reshape(1, C), params["norm1_b"].reshape(1, C),
        params["norm2_g"].reshape(1, C), params["norm2_b"].reshape(1, C),
        qkv_w_p, qkv_b_p.reshape(1, 3 * C),
        params["proj_w"].T, params["proj_b"].reshape(1, C),
        jnp.asarray(S_VERT), m_cat, cb)


if __name__ == "__main__":
    key = jax.random.PRNGKey(0)
    kx, kp, km = jax.random.split(key, 3)
    params = init_params(kp)
    x = jax.random.normal(kx, (B, H * W, C), jnp.float32)              # (2, 64, 16)
    out = swin_attention_forward(x, params, km)
    out = jax.block_until_ready(out)
    assert out.shape == (B, H * W, C) and bool(jnp.all(jnp.isfinite(out)))
    print("KERNEL_OK")
</pallas_src>

<mosaic_0001>
module attributes {stable_mosaic.version = 11 : i64} {
  func.func @_swin_block_kernel(%arg0: i32, %arg1: memref<1x64x16xf32, #tpu.memory_space<vmem>>, %arg2: memref<1x64x1xf32, #tpu.memory_space<vmem>>, %arg3: memref<256x64xf32, #tpu.memory_space<vmem>>, %arg4: memref<4x16xf32, #tpu.memory_space<vmem>>, %arg5: memref<1x16xf32, #tpu.memory_space<vmem>>, %arg6: memref<1x16xf32, #tpu.memory_space<vmem>>, %arg7: memref<1x16xf32, #tpu.memory_space<vmem>>, %arg8: memref<1x16xf32, #tpu.memory_space<vmem>>, %arg9: memref<16x48xf32, #tpu.memory_space<vmem>>, %arg10: memref<1x48xf32, #tpu.memory_space<vmem>>, %arg11: memref<16x16xf32, #tpu.memory_space<vmem>>, %arg12: memref<1x16xf32, #tpu.memory_space<vmem>>, %arg13: memref<576x64xf32, #tpu.memory_space<vmem>>, %arg14: memref<144x16xf32, #tpu.memory_space<vmem>>, %arg15: memref<1x16xf32, #tpu.memory_space<vmem>>, %arg16: memref<1x64x16xf32, #tpu.memory_space<vmem>>) attributes {dimension_semantics = [#tpu.dimension_semantics<parallel>], iteration_bounds = array<i64: 2>, scalar_prefetch = 0 : i64, scratch_operands = 0 : i64, tpu.core_type = #tpu.core_type<tc>, window_params = [{transform_indices = @transform_0, window_bounds = array<i64: 1, 64, 16>}, {transform_indices = @transform_1, window_bounds = array<i64: 1, 64, 1>}, {pipeline_mode = #tpu.pipeline_mode<synchronous>, transform_indices = @transform_2, window_bounds = array<i64: 256, 64>}, {pipeline_mode = #tpu.pipeline_mode<synchronous>, transform_indices = @transform_3, window_bounds = array<i64: 4, 16>}, {pipeline_mode = #tpu.pipeline_mode<synchronous>, transform_indices = @transform_4, window_bounds = array<i64: 1, 16>}, {pipeline_mode = #tpu.pipeline_mode<synchronous>, transform_indices = @transform_5, window_bounds = array<i64: 1, 16>}, {pipeline_mode = #tpu.pipeline_mode<synchronous>, transform_indices = @transform_6, window_bounds = array<i64: 1, 16>}, {pipeline_mode = #tpu.pipeline_mode<synchronous>, transform_indices = @transform_7, window_bounds = array<i64: 1, 16>}, {pipeline_mode = #tpu.pipeline_mode<synchronous>, transform_indices = @transform_8, window_bounds = array<i64: 16, 48>}, {pipeline_mode = #tpu.pipeline_mode<synchronous>, transform_indices = @transform_9, window_bounds = array<i64: 1, 48>}, {pipeline_mode = #tpu.pipeline_mode<synchronous>, transform_indices = @transform_10, window_bounds = array<i64: 16, 16>}, {pipeline_mode = #tpu.pipeline_mode<synchronous>, transform_indices = @transform_11, window_bounds = array<i64: 1, 16>}, {pipeline_mode = #tpu.pipeline_mode<synchronous>, transform_indices = @transform_12, window_bounds = array<i64: 576, 64>}, {pipeline_mode = #tpu.pipeline_mode<synchronous>, transform_indices = @transform_13, window_bounds = array<i64: 144, 16>}, {pipeline_mode = #tpu.pipeline_mode<synchronous>, transform_indices = @transform_14, window_bounds = array<i64: 1, 16>}, {transform_indices = @transform_15, window_bounds = array<i64: 1, 64, 16>}]} {
    %c0 = arith.constant 0 : index
    %c0_0 = arith.constant 0 : index
    %c0_1 = arith.constant 0 : index
    %0 = vector.load %arg1[%c0, %c0_0, %c0_1] : memref<1x64x16xf32, #tpu.memory_space<vmem>>, vector<1x64x16xf32>
    %1 = vector.shape_cast %0 : vector<1x64x16xf32> to vector<64x16xf32>
    %c0_2 = arith.constant 0 : index
    %c0_3 = arith.constant 0 : index
    %c0_4 = arith.constant 0 : index
    %2 = vector.load %arg2[%c0_2, %c0_3, %c0_4] : memref<1x64x1xf32, #tpu.memory_space<vmem>>, vector<1x64x1xf32>
    %3 = vector.shape_cast %2 : vector<1x64x1xf32> to vector<64x1xf32>
    %4 = vector.broadcast %3 : vector<64x1xf32> to vector<64x16xf32>
    %5 = arith.mulf %1, %4 : vector<64x16xf32>
    %cst = arith.constant dense<0.000000e+00> : vector<64xf32>
    %6 = vector.multi_reduction <add>, %5, %cst [1] : vector<64x16xf32> to vector<64xf32>
    %7 = vector.shape_cast %6 : vector<64xf32> to vector<64x1xf32>
    %cst_5 = arith.constant 1.600000e+01 : f32
    %8 = vector.broadcast %cst_5 : f32 to vector<64x1xf32>
    %9 = arith.divf %7, %8 : vector<64x1xf32>
    %10 = vector.broadcast %9 : vector<64x1xf32> to vector<64x16xf32>
    %11 = arith.subf %5, %10 : vector<64x16xf32>
    %12 = arith.mulf %11, %11 : vector<64x16xf32>
    %cst_6 = arith.constant dense<0.000000e+00> : vector<64xf32>
    %13 = vector.multi_reduction <add>, %12, %cst_6 [1] : vector<64x16xf32> to vector<64xf32>
    %14 = vector.shape_cast %13 : vector<64xf32> to vector<64x1xf32>
    %cst_7 = arith.constant 1.600000e+01 : f32
    %15 = vector.broadcast %cst_7 : f32 to vector<64x1xf32>
    %16 = arith.divf %14, %15 : vector<64x1xf32>
    %17 = vector.broadcast %9 : vector<64x1xf32> to vector<64x16xf32>
    %18 = arith.subf %5, %17 : vector<64x16xf32>
    %cst_8 = arith.constant 9.99999974E-6 : f32
    %19 = vector.broadcast %cst_8 : f32 to vector<64x1xf32>
    %20 = arith.addf %16, %19 : vector<64x1xf32>
    %21 = math.rsqrt %20 : vector<64x1xf32>
    %22 = vector.broadcast %21 : vector<64x1xf32> to vector<64x16xf32>
    %23 = arith.mulf %18, %22 : vector<64x16xf32>
    %c0_9 = arith.constant 0 : index
    %c0_10 = arith.constant 0 : index
    %24 = vector.load %arg5[%c0_9, %c0_10] : memref<1x16xf32, #tpu.memory_space<vmem>>, vector<1x16xf32>
    %25 = vector.broadcast %24 : vector<1x16xf32> to vector<64x16xf32>
    %26 = arith.mulf %23, %25 : vector<64x16xf32>
    %c0_11 = arith.constant 0 : index
    %c0_12 = arith.constant 0 : index
    %27 = vector.load %arg6[%c0_11, %c0_12] : memref<1x16xf32, #tpu.memory_space<vmem>>, vector<1x16xf32>
    %28 = vector.broadcast %27 : vector<1x16xf32> to vector<64x16xf32>
    %29 = arith.addf %26, %28 : vector<64x16xf32>
    %c0_13 = arith.constant 0 : index
    %c0_14 = arith.constant 0 : index
    %30 = vector.load %arg9[%c0_13, %c0_14] : memref<16x48xf32, #tpu.memory_space<vmem>>, vector<16x48xf32>
    %cst_15 = arith.constant dense<0.000000e+00> : vector<64x48xf32>
    %31 = tpu.matmul %29, %30, %cst_15 {dimension_numbers = #tpu.dot_dimension_numbers<[1], [0], [0], [1], [0, 0, 1, 1], [], []>} : vector<64x16xf32>, vector<16x48xf32>, vector<64x48xf32> -> vector<64x48xf32>
    %c0_16 = arith.constant 0 : index
    %c0_17 = arith.constant 0 : index
    %32 = vector.load %arg10[%c0_16, %c0_17] : memref<1x48xf32, #tpu.memory_space<vmem>>, vector<1x48xf32>
    %33 = vector.broadcast %32 : vector<1x48xf32> to vector<64x48xf32>
    %34 = arith.addf %31, %33 : vector<64x48xf32>
    %35 = vector.extract_strided_slice %34 {offsets = [0, 0], sizes = [64, 16], strides = [1, 1]} : vector<64x48xf32> to vector<64x16xf32>
    %36 = vector.extract_strided_slice %34 {offsets = [0, 16], sizes = [64, 16], strides = [1, 1]} : vector<64x48xf32> to vector<64x16xf32>
    %37 = vector.extract_strided_slice %34 {offsets = [0, 32], sizes = [64, 16], strides = [1, 1]} : vector<64x48xf32> to vector<64x16xf32>
    %c0_18 = arith.constant 0 : index
    %c0_19 = arith.constant 0 : index
    %38 = vector.load %arg4[%c0_18, %c0_19] : memref<4x16xf32, #tpu.memory_space<vmem>>, vector<1x16xf32>
    %39 = vector.shape_cast %38 : vector<1x16xf32> to vector<16xf32>
    %40 = vector.shape_cast %39 : vector<16xf32> to vector<1x16xf32>
    %41 = vector.broadcast %40 : vector<1x16xf32> to vector<64x16xf32>
    %42 = arith.mulf %35, %41 : vector<64x16xf32>
    %c1 = arith.constant 1 : index
    %c0_20 = arith.constant 0 : index
    %43 = vector.load %arg4[%c1, %c0_20] : memref<4x16xf32, #tpu.memory_space<vmem>>, vector<1x16xf32>
    %44 = vector.shape_cast %43 : vector<1x16xf32> to vector<16xf32>
    %45 = vector.shape_cast %44 : vector<16xf32> to vector<1x16xf32>
    %46 = vector.broadcast %45 : vector<1x16xf32> to vector<64x16xf32>
    %47 = arith.mulf %35, %46 : vector<64x16xf32>
    %c2 = arith.constant 2 : index
    %c0_21 = arith.constant 0 : index
    %48 = vector.load %arg4[%c2, %c0_21] : memref<4x16xf32, #tpu.memory_space<vmem>>, vector<1x16xf32>
    %49 = vector.shape_cast %48 : vector<1x16xf32> to vector<16xf32>
    %50 = vector.shape_cast %49 : vector<16xf32> to vector<1x16xf32>
    %51 = vector.broadcast %50 : vector<1x16xf32> to vector<64x16xf32>
    %52 = arith.mulf %35, %51 : vector<64x16xf32>
    %c3 = arith.constant 3 : index
    %c0_22 = arith.constant 0 : index
    %53 = vector.load %arg4[%c3, %c0_22] : memref<4x16xf32, #tpu.memory_space<vmem>>, vector<1x16xf32>
    %54 = vector.shape_cast %53 : vector<1x16xf32> to vector<16xf32>
    %55 = vector.shape_cast %54 : vector<16xf32> to vector<1x16xf32>
    %56 = vector.broadcast %55 : vector<1x16xf32> to vector<64x16xf32>
    %57 = arith.mulf %35, %56 : vector<64x16xf32>
    %58 = tpu.concatenate %42, %47, %52, %57 in 0 : vector<64x16xf32>, vector<64x16xf32>, vector<64x16xf32>, vector<64x16xf32> -> vector<256x16xf32>
    %cst_23 = arith.constant dense<0.000000e+00> : vector<256x64xf32>
    %59 = tpu.matmul %58, %36, %cst_23 {dimension_numbers = #tpu.dot_dimension_numbers<[1], [1], [0], [0], [0, 0, 1, 0], [], []>} : vector<256x16xf32>, vector<64x16xf32>, vector<256x64xf32> -> vector<256x64xf32>
    %c0_24 = arith.constant 0 : index
    %c0_25 = arith.constant 0 : index
    %60 = vector.load %arg3[%c0_24, %c0_25] : memref<256x64xf32, #tpu.memory_space<vmem>>, vector<256x64xf32>
    %61 = arith.addf %59, %60 : vector<256x64xf32>
    %cst_26 = arith.constant dense<0xFF800000> : vector<256xf32>
    %62 = vector.multi_reduction <maximumf>, %61, %cst_26 [1] : vector<256x64xf32> to vector<256xf32>
    %63 = vector.shape_cast %62 : vector<256xf32> to vector<256x1xf32>
    %64 = vector.broadcast %63 : vector<256x1xf32> to vector<256x64xf32>
    %65 = arith.subf %61, %64 : vector<256x64xf32>
    %66 = math.exp %65 : vector<256x64xf32>
    %cst_27 = arith.constant dense<0.000000e+00> : vector<256xf32>
    %67 = vector.multi_reduction <add>, %66, %cst_27 [1] : vector<256x64xf32> to vector<256xf32>
    %68 = vector.shape_cast %67 : vector<256xf32> to vector<256x1xf32>
    %69 = tpu.reciprocal %68 {approx = true} : vector<256x1xf32> -> vector<256x1xf32>
    %70 = vector.broadcast %69 : vector<256x1xf32> to vector<256x64xf32>
    %71 = arith.mulf %66, %70 : vector<256x64xf32>
    %cst_28 = arith.constant dense<0.000000e+00> : vector<256x16xf32>
    %72 = tpu.matmul %71, %37, %cst_28 {dimension_numbers = #tpu.dot_dimension_numbers<[1], [0], [0], [1], [0, 0, 1, 1], [], []>} : vector<256x64xf32>, vector<64x16xf32>, vector<256x16xf32> -> vector<256x16xf32>
    %73 = vector.extract_strided_slice %72 {offsets = [0, 0], sizes = [64, 16], strides = [1, 1]} : vector<256x16xf32> to vector<64x16xf32>
    %c0_29 = arith.constant 0 : index
    %c0_30 = arith.constant 0 : index
    %74 = vector.load %arg4[%c0_29, %c0_30] : memref<4x16xf32, #tpu.memory_space<vmem>>, vector<1x16xf32>
    %75 = vector.shape_cast %74 : vector<1x16xf32> to vector<16xf32>
    %76 = vector.shape_cast %75 : vector<16xf32> to vector<1x16xf32>
    %77 = vector.broadcast %76 : vector<1x16xf32> to vector<64x16xf32>
    %78 = arith.mulf %73, %77 : vector<64x16xf32>
    %79 = vector.extract_strided_slice %72 {offsets = [64, 0], sizes = [64, 16], strides = [1, 1]} : vector<256x16xf32> to vector<64x16xf32>
    %c1_31 = arith.constant 1 : index
    %c0_32 = arith.constant 0 : index
    %80 = vector.load %arg4[%c1_31, %c0_32] : memref<4x16xf32, #tpu.memory_space<vmem>>, vector<1x16xf32>
    %81 = vector.shape_cast %80 : vector<1x16xf32> to vector<16xf32>
    %82 = vector.shape_cast %81 : vector<16xf32> to vector<1x16xf32>
    %83 = vector.broadcast %82 : vector<1x16xf32> to vector<64x16xf32>
    %84 = arith.mulf %79, %83 : vector<64x16xf32>
    %85 = arith.addf %78, %84 : vector<64x16xf32>
    %86 = vector.extract_strided_slice %72 {offsets = [128, 0], sizes = [64, 16], strides = [1, 1]} : vector<256x16xf32> to vector<64x16xf32>
    %c2_33 = arith.constant 2 : index
    %c0_34 = arith.constant 0 : index
    %87 = vector.load %arg4[%c2_33, %c0_34] : memref<4x16xf32, #tpu.memory_space<vmem>>, vector<1x16xf32>
    %88 = vector.shape_cast %87 : vector<1x16xf32> to vector<16xf32>
    %89 = vector.shape_cast %88 : vector<16xf32> to vector<1x16xf32>
    %90 = vector.broadcast %89 : vector<1x16xf32> to vector<64x16xf32>
    %91 = arith.mulf %86, %90 : vector<64x16xf32>
    %92 = arith.addf %85, %91 : vector<64x16xf32>
    %93 = vector.extract_strided_slice %72 {offsets = [192, 0], sizes = [64, 16], strides = [1, 1]} : vector<256x16xf32> to vector<64x16xf32>
    %c3_35 = arith.constant 3 : index
    %c0_36 = arith.constant 0 : index
    %94 = vector.load %arg4[%c3_35, %c0_36] : memref<4x16xf32, #tpu.memory_space<vmem>>, vector<1x16xf32>
    %95 = vector.shape_cast %94 : vector<1x16xf32> to vector<16xf32>
    %96 = vector.shape_cast %95 : vector<16xf32> to vector<1x16xf32>
    %97 = vector.broadcast %96 : vector<1x16xf32> to vector<64x16xf32>
    %98 = arith.mulf %93, %97 : vector<64x16xf32>
    %99 = arith.addf %92, %98 : vector<64x16xf32>
    %c0_37 = arith.constant 0 : index
    %c0_38 = arith.constant 0 : index
    %100 = vector.load %arg11[%c0_37, %c0_38] : memref<16x16xf32, #tpu.memory_space<vmem>>, vector<16x16xf32>
    %cst_39 = arith.constant dense<0.000000e+00> : vector<64x16xf32>
    %101 = tpu.matmul %99, %100, %cst_39 {dimension_numbers = #tpu.dot_dimension_numbers<[1], [0], [0], [1], [0, 0, 1, 1], [], []>} : vector<64x16xf32>, vector<16x16xf32>, vector<64x16xf32> -> vector<64x16xf32>
    %c0_40 = arith.constant 0 : index
    %c0_41 = arith.constant 0 : index
    %102 = vector.load %arg12[%c0_40, %c0_41] : memref<1x16xf32, #tpu.memory_space<vmem>>, vector<1x16xf32>
    %103 = vector.broadcast %102 : vector<1x16xf32> to vector<64x16xf32>
    %104 = arith.addf %101, %103 : vector<64x16xf32>
    %105 = arith.addf %5, %104 : vector<64x16xf32>
    %cst_42 = arith.constant dense<0.000000e+00> : vector<64xf32>
    %106 = vector.multi_reduction <add>, %105, %cst_42 [1] : vector<64x16xf32> to vector<64xf32>
    %107 = vector.shape_cast %106 : vector<64xf32> to vector<64x1xf32>
    %cst_43 = arith.constant 1.600000e+01 : f32
    %108 = vector.broadcast %cst_43 : f32 to vector<64x1xf32>
    %109 = arith.divf %107, %108 : vector<64x1xf32>
    %110 = vector.broadcast %109 : vector<64x1xf32> to vector<64x16xf32>
    %111 = arith.subf %105, %110 : vector<64x16xf32>
    %112 = arith.mulf %111, %111 : vector<64x16xf32>
    %cst_44 = arith.constant dense<0.000000e+00> : vector<64xf32>
    %113 = vector.multi_reduction <add>, %112, %cst_44 [1] : vector<64x16xf32> to vector<64xf32>
    %114 = vector.shape_cast %113 : vector<64xf32> to vector<64x1xf32>
    %cst_45 = arith.constant 1.600000e+01 : f32
    %115 = vector.broadcast %cst_45 : f32 to vector<64x1xf32>
    %116 = arith.divf %114, %115 : vector<64x1xf32>
    %117 = vector.broadcast %109 : vector<64x1xf32> to vector<64x16xf32>
    %118 = arith.subf %105, %117 : vector<64x16xf32>
    %cst_46 = arith.constant 9.99999974E-6 : f32
    %119 = vector.broadcast %cst_46 : f32 to vector<64x1xf32>
    %120 = arith.addf %116, %119 : vector<64x1xf32>
    %121 = math.rsqrt %120 : vector<64x1xf32>
    %122 = vector.broadcast %121 : vector<64x1xf32> to vector<64x16xf32>
    %123 = arith.mulf %118, %122 : vector<64x16xf32>
    %c0_47 = arith.constant 0 : index
    %c0_48 = arith.constant 0 : index
    %124 = vector.load %arg7[%c0_47, %c0_48] : memref<1x16xf32, #tpu.memory_space<vmem>>, vector<1x16xf32>
    %125 = vector.broadcast %124 : vector<1x16xf32> to vector<64x16xf32>
    %126 = arith.mulf %123, %125 : vector<64x16xf32>
    %c0_49 = arith.constant 0 : index
    %c0_50 = arith.constant 0 : index
    %127 = vector.load %arg8[%c0_49, %c0_50] : memref<1x16xf32, #tpu.memory_space<vmem>>, vector<1x16xf32>
    %128 = vector.broadcast %127 : vector<1x16xf32> to vector<64x16xf32>
    %129 = arith.addf %126, %128 : vector<64x16xf32>
    %c0_51 = arith.constant 0 : index
    %c0_52 = arith.constant 0 : index
    %130 = vector.load %arg13[%c0_51, %c0_52] : memref<576x64xf32, #tpu.memory_space<vmem>>, vector<576x64xf32>
    %cst_53 = arith.constant dense<0.000000e+00> : vector<576x16xf32>
    %131 = tpu.matmul %130, %129, %cst_53 {dimension_numbers = #tpu.dot_dimension_numbers<[1], [0], [0], [1], [0, 0, 1, 1], [], []>} : vector<576x64xf32>, vector<64x16xf32>, vector<576x16xf32> -> vector<576x16xf32>
    %c0_54 = arith.constant 0 : index
    %c0_55 = arith.constant 0 : index
    %132 = vector.load %arg14[%c0_54, %c0_55] : memref<144x16xf32, #tpu.memory_space<vmem>>, vector<144x16xf32>
    %c0_56 = arith.constant 0 : index
    %c0_57 = arith.constant 0 : index
    %133 = vector.load %arg15[%c0_56, %c0_57] : memref<1x16xf32, #tpu.memory_space<vmem>>, vector<1x16xf32>
    %134 = vector.broadcast %133 : vector<1x16xf32> to vector<64x16xf32>
    %135 = arith.addf %105, %134 : vector<64x16xf32>
    %136 = vector.extract_strided_slice %131 {offsets = [0, 0], sizes = [64, 16], strides = [1, 1]} : vector<576x16xf32> to vector<64x16xf32>
    %137 = vector.extract_strided_slice %132 {offsets = [0, 0], sizes = [16, 16], strides = [1, 1]} : vector<144x16xf32> to vector<16x16xf32>
    %cst_58 = arith.constant dense<0.000000e+00> : vector<64x16xf32>
    %138 = tpu.matmul %136, %137, %cst_58 {dimension_numbers = #tpu.dot_dimension_numbers<[1], [0], [0], [1], [0, 0, 1, 1], [], []>} : vector<64x16xf32>, vector<16x16xf32>, vector<64x16xf32> -> vector<64x16xf32>
    %139 = arith.addf %135, %138 : vector<64x16xf32>
    %140 = vector.extract_strided_slice %131 {offsets = [64, 0], sizes = [64, 16], strides = [1, 1]} : vector<576x16xf32> to vector<64x16xf32>
    %141 = vector.extract_strided_slice %132 {offsets = [16, 0], sizes = [16, 16], strides = [1, 1]} : vector<144x16xf32> to vector<16x16xf32>
    %cst_59 = arith.constant dense<0.000000e+00> : vector<64x16xf32>
    %142 = tpu.matmul %140, %141, %cst_59 {dimension_numbers = #tpu.dot_dimension_numbers<[1], [0], [0], [1], [0, 0, 1, 1], [], []>} : vector<64x16xf32>, vector<16x16xf32>, vector<64x16xf32> -> vector<64x16xf32>
    %143 = arith.addf %139, %142 : vector<64x16xf32>
    %144 = vector.extract_strided_slice %131 {offsets = [128, 0], sizes = [64, 16], strides = [1, 1]} : vector<576x16xf32> to vector<64x16xf32>
    %145 = vector.extract_strided_slice %132 {offsets = [32, 0], sizes = [16, 16], strides = [1, 1]} : vector<144x16xf32> to vector<16x16xf32>
    %cst_60 = arith.constant dense<0.000000e+00> : vector<64x16xf32>
    %146 = tpu.matmul %144, %145, %cst_60 {dimension_numbers = #tpu.dot_dimension_numbers<[1], [0], [0], [1], [0, 0, 1, 1], [], []>} : vector<64x16xf32>, vector<16x16xf32>, vector<64x16xf32> -> vector<64x16xf32>
    %147 = arith.addf %143, %146 : vector<64x16xf32>
    %148 = vector.extract_strided_slice %131 {offsets = [192, 0], sizes = [64, 16], strides = [1, 1]} : vector<576x16xf32> to vector<64x16xf32>
    %149 = vector.extract_strided_slice %132 {offsets = [48, 0], sizes = [16, 16], strides = [1, 1]} : vector<144x16xf32> to vector<16x16xf32>
    %cst_61 = arith.constant dense<0.000000e+00> : vector<64x16xf32>
    %150 = tpu.matmul %148, %149, %cst_61 {dimension_numbers = #tpu.dot_dimension_numbers<[1], [0], [0], [1], [0, 0, 1, 1], [], []>} : vector<64x16xf32>, vector<16x16xf32>, vector<64x16xf32> -> vector<64x16xf32>
    %151 = arith.addf %147, %150 : vector<64x16xf32>
    %152 = vector.extract_strided_slice %131 {offsets = [256, 0], sizes = [64, 16], strides = [1, 1]} : vector<576x16xf32> to vector<64x16xf32>
    %153 = vector.extract_strided_slice %132 {offsets = [64, 0], sizes = [16, 16], strides = [1, 1]} : vector<144x16xf32> to vector<16x16xf32>
    %cst_62 = arith.constant dense<0.000000e+00> : vector<64x16xf32>
    %154 = tpu.matmul %152, %153, %cst_62 {dimension_numbers = #tpu.dot_dimension_numbers<[1], [0], [0], [1], [0, 0, 1, 1], [], []>} : vector<64x16xf32>, vector<16x16xf32>, vector<64x16xf32> -> vector<64x16xf32>
    %155 = arith.addf %151, %154 : vector<64x16xf32>
    %156 = vector.extract_strided_slice %131 {offsets = [320, 0], sizes = [64, 16], strides = [1, 1]} : vector<576x16xf32> to vector<64x16xf32>
    %157 = vector.extract_strided_slice %132 {offsets = [80, 0], sizes = [16, 16], strides = [1, 1]} : vector<144x16xf32> to vector<16x16xf32>
    %cst_63 = arith.constant dense<0.000000e+00> : vector<64x16xf32>
    %158 = tpu.matmul %156, %157, %cst_63 {dimension_numbers = #tpu.dot_dimension_numbers<[1], [0], [0], [1], [0, 0, 1, 1], [], []>} : vector<64x16xf32>, vector<16x16xf32>, vector<64x16xf32> -> vector<64x16xf32>
    %159 = arith.addf %155, %158 : vector<64x16xf32>
    %160 = vector.extract_strided_slice %131 {offsets = [384, 0], sizes = [64, 16], strides = [1, 1]} : vector<576x16xf32> to vector<64x16xf32>
    %161 = vector.extract_strided_slice %132 {offsets = [96, 0], sizes = [16, 16], strides = [1, 1]} : vector<144x16xf32> to vector<16x16xf32>
    %cst_64 = arith.constant dense<0.000000e+00> : vector<64x16xf32>
    %162 = tpu.matmul %160, %161, %cst_64 {dimension_numbers = #tpu.dot_dimension_numbers<[1], [0], [0], [1], [0, 0, 1, 1], [], []>} : vector<64x16xf32>, vector<16x16xf32>, vector<64x16xf32> -> vector<64x16xf32>
    %163 = arith.addf %159, %162 : vector<64x16xf32>
    %164 = vector.extract_strided_slice %131 {offsets = [448, 0], sizes = [64, 16], strides = [1, 1]} : vector<576x16xf32> to vector<64x16xf32>
    %165 = vector.extract_strided_slice %132 {offsets = [112, 0], sizes = [16, 16], strides = [1, 1]} : vector<144x16xf32> to vector<16x16xf32>
    %cst_65 = arith.constant dense<0.000000e+00> : vector<64x16xf32>
    %166 = tpu.matmul %164, %165, %cst_65 {dimension_numbers = #tpu.dot_dimension_numbers<[1], [0], [0], [1], [0, 0, 1, 1], [], []>} : vector<64x16xf32>, vector<16x16xf32>, vector<64x16xf32> -> vector<64x16xf32>
    %167 = arith.addf %163, %166 : vector<64x16xf32>
    %168 = vector.extract_strided_slice %131 {offsets = [512, 0], sizes = [64, 16], strides = [1, 1]} : vector<576x16xf32> to vector<64x16xf32>
    %169 = vector.extract_strided_slice %132 {offsets = [128, 0], sizes = [16, 16], strides = [1, 1]} : vector<144x16xf32> to vector<16x16xf32>
    %cst_66 = arith.constant dense<0.000000e+00> : vector<64x16xf32>
    %170 = tpu.matmul %168, %169, %cst_66 {dimension_numbers = #tpu.dot_dimension_numbers<[1], [0], [0], [1], [0, 0, 1, 1], [], []>} : vector<64x16xf32>, vector<16x16xf32>, vector<64x16xf32> -> vector<64x16xf32>
    %171 = arith.addf %167, %170 : vector<64x16xf32>
    %c0_67 = arith.constant 0 : index
    %c0_68 = arith.constant 0 : index
    %c0_69 = arith.constant 0 : index
    %172 = vector.load %arg16[%c0_67, %c0_68, %c0_69] : memref<1x64x16xf32, #tpu.memory_space<vmem>>, vector<1x64x16xf32>
    %173 = vector.shape_cast %172 : vector<1x64x16xf32> to vector<64x16xf32>
    %174 = vector.shape_cast %171 : vector<64x16xf32> to vector<1x64x16xf32>
    tpu.vector_store %arg16[%c0_67, %c0_68, %c0_69], %174 {strides = array<i32>} : memref<1x64x16xf32, #tpu.memory_space<vmem>>, vector<1x64x16xf32>,
    return
  }
  func.func @transform_0(%arg0: i32) -> (i32, i32, i32) {
    %c0_i32 = arith.constant 0 : i32
    %c0_i32_0 = arith.constant 0 : i32
    %c0_i32_1 = arith.constant 0 : i32
    return %arg0, %c0_i32, %c0_i32_0 : i32, i32, i32
  }
  func.func @transform_1(%arg0: i32) -> (i32, i32, i32) {
    %c0_i32 = arith.constant 0 : i32
    %c0_i32_0 = arith.constant 0 : i32
    %c0_i32_1 = arith.constant 0 : i32
    return %arg0, %c0_i32, %c0_i32_0 : i32, i32, i32
  }
  func.func @transform_2(%arg0: i32) -> (i32, i32) {
    %c0_i32 = arith.constant 0 : i32
    %c0_i32_0 = arith.constant 0 : i32
    %c0_i32_1 = arith.constant 0 : i32
    return %c0_i32, %c0_i32_0 : i32, i32
  }
  func.func @transform_3(%arg0: i32) -> (i32, i32) {
    %c0_i32 = arith.constant 0 : i32
    %c0_i32_0 = arith.constant 0 : i32
    %c0_i32_1 = arith.constant 0 : i32
    return %c0_i32, %c0_i32_0 : i32, i32
  }
  func.func @transform_4(%arg0: i32) -> (i32, i32) {
    %c0_i32 = arith.constant 0 : i32
    %c0_i32_0 = arith.constant 0 : i32
    %c0_i32_1 = arith.constant 0 : i32
    return %c0_i32, %c0_i32_0 : i32, i32
  }
  func.func @transform_5(%arg0: i32) -> (i32, i32) {
    %c0_i32 = arith.constant 0 : i32
    %c0_i32_0 = arith.constant 0 : i32
    %c0_i32_1 = arith.constant 0 : i32
    return %c0_i32, %c0_i32_0 : i32, i32
  }
  func.func @transform_6(%arg0: i32) -> (i32, i32) {
    %c0_i32 = arith.constant 0 : i32
    %c0_i32_0 = arith.constant 0 : i32
    %c0_i32_1 = arith.constant 0 : i32
    return %c0_i32, %c0_i32_0 : i32, i32
  }
  func.func @transform_7(%arg0: i32) -> (i32, i32) {
    %c0_i32 = arith.constant 0 : i32
    %c0_i32_0 = arith.constant 0 : i32
    %c0_i32_1 = arith.constant 0 : i32
    return %c0_i32, %c0_i32_0 : i32, i32
  }
  func.func @transform_8(%arg0: i32) -> (i32, i32) {
    %c0_i32 = arith.constant 0 : i32
    %c0_i32_0 = arith.constant 0 : i32
    %c0_i32_1 = arith.constant 0 : i32
    return %c0_i32, %c0_i32_0 : i32, i32
  }
  func.func @transform_9(%arg0: i32) -> (i32, i32) {
    %c0_i32 = arith.constant 0 : i32
    %c0_i32_0 = arith.constant 0 : i32
    %c0_i32_1 = arith.constant 0 : i32
    return %c0_i32, %c0_i32_0 : i32, i32
  }
  func.func @transform_10(%arg0: i32) -> (i32, i32) {
    %c0_i32 = arith.constant 0 : i32
    %c0_i32_0 = arith.constant 0 : i32
    %c0_i32_1 = arith.constant 0 : i32
    return %c0_i32, %c0_i32_0 : i32, i32
  }
  func.func @transform_11(%arg0: i32) -> (i32, i32) {
    %c0_i32 = arith.constant 0 : i32
    %c0_i32_0 = arith.constant 0 : i32
    %c0_i32_1 = arith.constant 0 : i32
    return %c0_i32, %c0_i32_0 : i32, i32
  }
  func.func @transform_12(%arg0: i32) -> (i32, i32) {
    %c0_i32 = arith.constant 0 : i32
    %c0_i32_0 = arith.constant 0 : i32
    %c0_i32_1 = arith.constant 0 : i32
    return %c0_i32, %c0_i32_0 : i32, i32
  }
  func.func @transform_13(%arg0: i32) -> (i32, i32) {
    %c0_i32 = arith.constant 0 : i32
    %c0_i32_0 = arith.constant 0 : i32
    %c0_i32_1 = arith.constant 0 : i32
    return %c0_i32, %c0_i32_0 : i32, i32
  }
  func.func @transform_14(%arg0: i32) -> (i32, i32) {
    %c0_i32 = arith.constant 0 : i32
    %c0_i32_0 = arith.constant 0 : i32
    %c0_i32_1 = arith.constant 0 : i32
    return %c0_i32, %c0_i32_0 : i32, i32
  }
  func.func @transform_15(%arg0: i32) -> (i32, i32, i32) {
    %c0_i32 = arith.constant 0 : i32
    %c0_i32_0 = arith.constant 0 : i32
    %c0_i32_1 = arith.constant 0 : i32
    return %arg0, %c0_i32, %c0_i32_0 : i32, i32, i32
  }
}

</mosaic_0001>

<llo_original>
// kernel: mul.10
$region0: #{mul.10}
  #allocation0 [shape = 's32[1]{0}', space=sflag, size = 0x4, scoped, tag = 'scoped memory for mul.10']
  %s0 = inlined_call_operand.vmem [shape: f32[2304], index: 0, kind: input, shape index: {}]
  %s1 = inlined_call_operand.vmem [shape: f32[2304], index: 1, kind: input, shape index: {}]
  %s2 = inlined_call_operand.vmem [shape: f32[2304], index: 2, kind: output, shape index: {}]
  %v3 = vld [vmem:[%s0] sm:$0xff]
  %v4 = vld [vmem:[%s1] sm:$0xff]
  %5 = xla_tuple %v3, %v4
  %6 = xla_tuple %5
  %v7 = vmul.f32 %v3, %v4
  %8 = xla_tuple %v7
  %9 = vst [vmem:[%s2] sm:$0xff] %v7
  %s10 = scalar_lea.vmem %s0, 8
  %v11 = vld [vmem:[%s10] sm:$0xff]
  %s12 = scalar_lea.vmem %s1, 8
  %v13 = vld [vmem:[%s12] sm:$0xff]
  %14 = xla_tuple %v11, %v13
  %15 = xla_tuple %14
  %v16 = vmul.f32 %v11, %v13
  %17 = xla_tuple %v16
  %s18 = scalar_lea.vmem %s2, 8
  %19 = vst [vmem:[%s18] sm:$0xff] %v16
  %s20 = scalar_lea.vmem %s0, 16
  %v21 = vld [vmem:[%s20] sm:$0xff]
  %s22 = scalar_lea.vmem %s1, 16
  %v23 = vld [vmem:[%s22] sm:$0xff]
  %24 = xla_tuple %v21, %v23
  %25 = xla_tuple %24
  %v26 = vmul.f32 %v21, %v23
  %27 = xla_tuple %v26
  %s28 = scalar_lea.vmem %s2, 16
  %29 = vst [vmem:[%s28] sm:$0xff] %v26

// kernel: swin_attention_forward.1
$region0: #{swin_attention_forward.1}
  #allocation0 [shape = 'u32[]', space=smem, size = 0x4, offset = 0x4, fixed_abs, tag = 'smem constant byte address 0x4 - core index']
  #allocation1 [shape = 'u32[144,128]{1,0:T(1,128)}', space=vmem, size = 0x12000, scoped, tag = 'internal scratch']
  %s0 = inlined_call_operand.vmem [shape: f32[2,64,16], index: 0, kind: input, shape index: {}]
  %s1 = inlined_call_operand.vmem [shape: f32[2,64,1], index: 1, kind: input, shape index: {}]
  %s2 = inlined_call_operand.vmem [shape: f32[256,64], index: 2, kind: input, shape index: {}]
  %s3 = inlined_call_operand.vmem [shape: f32[4,16], index: 3, kind: input, shape index: {}]
  %s4 = inlined_call_operand.vmem [shape: f32[1,16], index: 4, kind: input, shape index: {}]
  %s5 = inlined_call_operand.vmem [shape: f32[1,16], index: 5, kind: input, shape index: {}]
  %s6 = inlined_call_operand.vmem [shape: f32[1,16], index: 6, kind: input, shape index: {}]
  %s7 = inlined_call_operand.vmem [shape: f32[1,16], index: 7, kind: input, shape index: {}]
  %s8 = inlined_call_operand.vmem [shape: f32[16,48], index: 8, kind: input, shape index: {}]
  %s9 = inlined_call_operand.vmem [shape: f32[1,48], index: 9, kind: input, shape index: {}]
  %s10 = inlined_call_operand.vmem [shape: f32[16,16], index: 10, kind: input, shape index: {}]
  %s11 = inlined_call_operand.vmem [shape: f32[1,16], index: 11, kind: input, shape index: {}]
  %s12 = inlined_call_operand.vmem [shape: f32[576,64], index: 12, kind: input, shape index: {}]
  %s13 = inlined_call_operand.vmem [shape: f32[144,16], index: 13, kind: input, shape index: {}]
  %s14 = inlined_call_operand.vmem [shape: f32[1,16], index: 14, kind: input, shape index: {}]
  %s15 = inlined_call_operand.vmem [shape: f32[2,64,16], index: 15, kind: output, shape index: {}]
  %s16 = sld [smem:[#allocation0]]
  $region93: #{swin_attention_forward.1} parent=0
    _
  %s18 = ssub.s32 1, %s16
  %s19 = scalar_select 0, %s18, %s16
  loop: start=0, step=1, limit=4
  $region2: #{swin_attention_forward.1} parent=0 // loop_pre_header
    _
  $region3: #{swin_attention_forward.1} parent=0 // loop_header
    %s21 = sphi 0, %s25
    %p22 = scmp.ge.s32.totalorder %s21, 4
    %s31 = sphi 0, %s33
    %s34 = sphi 0, %s31
    %s35 = sphi 0, %s34
    %s51 = sphi 0, %s35
    %s57 = sphi 0, %s59
    %s60 = sphi 0, %s57
    %s61 = sphi 0, %s60
    %s77 = sphi 0, %s61
    %s81 = sphi 0, %s81
    %s83 = sphi 0, %s81
    %s84 = sphi 0, %s83
    %s98 = sphi 0, %s84
    %s102 = sphi 0, %s102
    %s104 = sphi 0, %s102
    %s105 = sphi 0, %s104
    %s119 = sphi 0, %s105
    %s123 = sphi 0, %s123
    %s125 = sphi 0, %s123
    %s126 = sphi 0, %s125
    %s140 = sphi 0, %s126
    %s144 = sphi 0, %s144
    %s146 = sphi 0, %s144
    %s147 = sphi 0, %s146
    %s161 = sphi 0, %s147
    %s165 = sphi 0, %s165
    %s167 = sphi 0, %s165
    %s168 = sphi 0, %s167
    %s182 = sphi 0, %s168
    %s186 = sphi 0, %s186
    %s188 = sphi 0, %s186
    %s189 = sphi 0, %s188
    %s203 = sphi 0, %s189
    %s207 = sphi 0, %s207
    %s209 = sphi 0, %s207
    %s210 = sphi 0, %s209
    %s224 = sphi 0, %s210
    %s228 = sphi 0, %s228
    %s230 = sphi 0, %s228
    %s231 = sphi 0, %s230
    %s245 = sphi 0, %s231
    %s249 = sphi 0, %s249
    %s251 = sphi 0, %s249
    %s252 = sphi 0, %s251
    %s266 = sphi 0, %s252
    %s270 = sphi 0, %s270
    %s272 = sphi 0, %s270
    %s273 = sphi 0, %s272
    %s287 = sphi 0, %s273
    %s291 = sphi 0, %s291
    %s293 = sphi 0, %s291
    %s294 = sphi 0, %s293
    %s308 = sphi 0, %s294
    %s312 = sphi 0, %s312
    %s314 = sphi 0, %s312
    %s315 = sphi 0, %s314
    %s329 = sphi 0, %s315
    %s333 = sphi 0, %s333
    %s335 = sphi 0, %s333
    %s336 = sphi 0, %s335
    %s350 = sphi 0, %s336
    %s356 = sphi 0, %s358
    %s359 = sphi 0, %s356
    %s360 = sphi 0, %s359
    %s376 = sphi 0, %s360
  $region4: #{swin_attention_forward.1} parent=0 // loop_header_branch
    %24 = sbr.rel (%p22) target = $region8
  $region5: #{swin_attention_forward.1} parent=0 // loop_body
    %s26 = ssub.s32 %s21, 1
    %s27 = ssub.s32 %s21, 2
    %s28 = sadd.s32 %s21, 1
    %s29 = ssub.s32 %s21, %s28
    %p30 = scmp.eq.s32.totalorder %s29, 0
    %s32 = sadd.s32 %s31, 1
    %s33 = scalar_select %p30, %s31, %s32
    %p36 = pneg %p30
    %p37 = scmp.eq.s32.totalorder %s21, 1
    %p38 = por %p36, %p37
    %p39 = scmp.ne.s32.totalorder %s31, %s34
    %p40 = scmp.eq.s32.totalorder %s21, 0
    %p41 = por %p39, %p40
    %p42 = scmp.ne.s32.totalorder %s31, %s34
    %p43 = scmp.eq.s32.totalorder %s26, 1
    %p44 = por %p42, %p43
    %p45 = scmp.ne.s32.totalorder %s34, %s35
    %p46 = scmp.eq.s32.totalorder %s26, 0
    %p47 = por %p45, %p46
    %p48 = scmp.ne.s32.totalorder %s34, %s35
    %p49 = scmp.eq.s32.totalorder %s27, 1
    %p50 = por %p48, %p49
    %p52 = scmp.ne.s32.totalorder %s35, %s51
    %p53 = scmp.eq.s32.totalorder %s27, 0
    %p54 = por %p52, %p53
    %s55 = ssub.s32 %s21, %s28
    %p56 = scmp.eq.s32.totalorder %s55, 0
    %s58 = sadd.s32 %s57, 1
    %s59 = scalar_select %p56, %s57, %s58
    %p62 = pneg %p56
    %p63 = scmp.eq.s32.totalorder %s21, 1
    %p64 = por %p62, %p63
    %p65 = scmp.ne.s32.totalorder %s57, %s60
    %p66 = scmp.eq.s32.totalorder %s21, 0
    %p67 = por %p65, %p66
    %p68 = scmp.ne.s32.totalorder %s57, %s60
    %p69 = scmp.eq.s32.totalorder %s26, 1
    %p70 = por %p68, %p69
    %p71 = scmp.ne.s32.totalorder %s60, %s61
    %p72 = scmp.eq.s32.totalorder %s26, 0
    %p73 = por %p71, %p72
    %p74 = scmp.ne.s32.totalorder %s60, %s61
    %p75 = scmp.eq.s32.totalorder %s27, 1
    %p76 = por %p74, %p75
    %p78 = scmp.ne.s32.totalorder %s61, %s77
    %p79 = scmp.eq.s32.totalorder %s27, 0
    %p80 = por %p78, %p79
    %s82 = sadd.s32 %s81, 1
    %p85 = scmp.eq.s32.totalorder %s21, 1
    %p86 = scmp.ne.s32.totalorder %s81, %s83
    %p87 = scmp.eq.s32.totalorder %s21, 0
    %p88 = por %p86, %p87
    %p89 = scmp.ne.s32.totalorder %s81, %s83
    %p90 = scmp.eq.s32.totalorder %s26, 1
    %p91 = por %p89, %p90
    %p92 = scmp.ne.s32.totalorder %s83, %s84
    %p93 = scmp.eq.s32.totalorder %s26, 0
    %p94 = por %p92, %p93
    %p95 = scmp.ne.s32.totalorder %s83, %s84
    %p96 = scmp.eq.s32.totalorder %s27, 1
    %p97 = por %p95, %p96
    %p99 = scmp.ne.s32.totalorder %s84, %s98
    %p100 = scmp.eq.s32.totalorder %s27, 0
    %p101 = por %p99, %p100
    %s103 = sadd.s32 %s102, 1
    %p106 = scmp.eq.s32.totalorder %s21, 1
    %p107 = scmp.ne.s32.totalorder %s102, %s104
    %p108 = scmp.eq.s32.totalorder %s21, 0
    %p109 = por %p107, %p108
    %p110 = scmp.ne.s32.totalorder %s102, %s104
    %p111 = scmp.eq.s32.totalorder %s26, 1
    %p112 = por %p110, %p111
    %p113 = scmp.ne.s32.totalorder %s104, %s105
    %p114 = scmp.eq.s32.totalorder %s26, 0
    %p115 = por %p113, %p114
    %p116 = scmp.ne.s32.totalorder %s104, %s105
    %p117 = scmp.eq.s32.totalorder %s27, 1
    %p118 = por %p116, %p117
    %p120 = scmp.ne.s32.totalorder %s105, %s119
    %p121 = scmp.eq.s32.totalorder %s27, 0
    %p122 = por %p120, %p121
    %s124 = sadd.s32 %s123, 1
    %p127 = scmp.eq.s32.totalorder %s21, 1
    %p128 = scmp.ne.s32.totalorder %s123, %s125
    %p129 = scmp.eq.s32.totalorder %s21, 0
    %p130 = por %p128, %p129
    %p131 = scmp.ne.s32.totalorder %s123, %s125
    %p132 = scmp.eq.s32.totalorder %s26, 1
    %p133 = por %p131, %p132
    %p134 = scmp.ne.s32.totalorder %s125, %s126
    %p135 = scmp.eq.s32.totalorder %s26, 0
    %p136 = por %p134, %p135
    %p137 = scmp.ne.s32.totalorder %s125, %s126
    %p138 = scmp.eq.s32.totalorder %s27, 1
    %p139 = por %p137, %p138
    %p141 = scmp.ne.s32.totalorder %s126, %s140
    %p142 = scmp.eq.s32.totalorder %s27, 0
    %p143 = por %p141, %p142
    %s145 = sadd.s32 %s144, 1
    %p148 = scmp.eq.s32.totalorder %s21, 1
    %p149 = scmp.ne.s32.totalorder %s144, %s146
    %p150 = scmp.eq.s32.totalorder %s21, 0
    %p151 = por %p149, %p150
    %p152 = scmp.ne.s32.totalorder %s144, %s146
    %p153 = scmp.eq.s32.totalorder %s26, 1
    %p154 = por %p152, %p153
    %p155 = scmp.ne.s32.totalorder %s146, %s147
    %p156 = scmp.eq.s32.totalorder %s26, 0
    %p157 = por %p155, %p156
    %p158 = scmp.ne.s32.totalorder %s146, %s147
    %p159 = scmp.eq.s32.totalorder %s27, 1
    %p160 = por %p158, %p159
    %p162 = scmp.ne.s32.totalorder %s147, %s161
    %p163 = scmp.eq.s32.totalorder %s27, 0
    %p164 = por %p162, %p163
    %s166 = sadd.s32 %s165, 1
    %p169 = scmp.eq.s32.totalorder %s21, 1
    %p170 = scmp.ne.s32.totalorder %s165, %s167
    %p171 = scmp.eq.s32.totalorder %s21, 0
    %p172 = por %p170, %p171
    %p173 = scmp.ne.s32.totalorder %s165, %s167
    %p174 = scmp.eq.s32.totalorder %s26, 1
    %p175 = por %p173, %p174
    %p176 = scmp.ne.s32.totalorder %s167, %s168
    %p177 = scmp.eq.s32.totalorder %s26, 0
    %p178 = por %p176, %p177
    %p179 = scmp.ne.s32.totalorder %s167, %s168
    %p180 = scmp.eq.s32.totalorder %s27, 1
    %p181 = por %p179, %p180
    %p183 = scmp.ne.s32.totalorder %s168, %s182
    %p184 = scmp.eq.s32.totalorder %s27, 0
    %p185 = por %p183, %p184
    %s187 = sadd.s32 %s186, 1
    %p190 = scmp.eq.s32.totalorder %s21, 1
    %p191 = scmp.ne.s32.totalorder %s186, %s188
    %p192 = scmp.eq.s32.totalorder %s21, 0
    %p193 = por %p191, %p192
    %p194 = scmp.ne.s32.totalorder %s186, %s188
    %p195 = scmp.eq.s32.totalorder %s26, 1
    %p196 = por %p194, %p195
    %p197 = scmp.ne.s32.totalorder %s188, %s189
    %p198 = scmp.eq.s32.totalorder %s26, 0
    %p199 = por %p197, %p198
    %p200 = scmp.ne.s32.totalorder %s188, %s189
    %p201 = scmp.eq.s32.totalorder %s27, 1
    %p202 = por %p200, %p201
    %p204 = scmp.ne.s32.totalorder %s189, %s203
    %p205 = scmp.eq.s32.totalorder %s27, 0
    %p206 = por %p204, %p205
    %s208 = sadd.s32 %s207, 1
    %p211 = scmp.eq.s32.totalorder %s21, 1
    %p212 = scmp.ne.s32.totalorder %s207, %s209
    %p213 = scmp.eq.s32.totalorder %s21, 0
    %p214 = por %p212, %p213
    %p215 = scmp.ne.s32.totalorder %s207, %s209
    %p216 = scmp.eq.s32.totalorder %s26, 1
    %p217 = por %p215, %p216
    %p218 = scmp.ne.s32.totalorder %s209, %s210
    %p219 = scmp.eq.s32.totalorder %s26, 0
    %p220 = por %p218, %p219
    %p221 = scmp.ne.s32.totalorder %s209, %s210
    %p222 = scmp.eq.s32.totalorder %s27, 1
    %p223 = por %p221, %p222
    %p225 = scmp.ne.s32.totalorder %s210, %s224
    %p226 = scmp.eq.s32.totalorder %s27, 0
    %p227 = por %p225, %p226
    %s229 = sadd.s32 %s228, 1
    %p232 = scmp.eq.s32.totalorder %s21, 1
    %p233 = scmp.ne.s32.totalorder %s228, %s230
    %p234 = scmp.eq.s32.totalorder %s21, 0
    %p235 = por %p233, %p234
    %p236 = scmp.ne.s32.totalorder %s228, %s230
    %p237 = scmp.eq.s32.totalorder %s26, 1
    %p238 = por %p236, %p237
    %p239 = scmp.ne.s32.totalorder %s230, %s231
    %p240 = scmp.eq.s32.totalorder %s26, 0
    %p241 = por %p239, %p240
    %p242 = scmp.ne.s32.totalorder %s230, %s231
    %p243 = scmp.eq.s32.totalorder %s27, 1
    %p244 = por %p242, %p243
    %p246 = scmp.ne.s32.totalorder %s231, %s245
    %p247 = scmp.eq.s32.totalorder %s27, 0
    %p248 = por %p246, %p247
    %s250 = sadd.s32 %s249, 1
    %p253 = scmp.eq.s32.totalorder %s21, 1
    %p254 = scmp.ne.s32.totalorder %s249, %s251
    %p255 = scmp.eq.s32.totalorder %s21, 0
    %p256 = por %p254, %p255
    %p257 = scmp.ne.s32.totalorder %s249, %s251
    %p258 = scmp.eq.s32.totalorder %s26, 1
    %p259 = por %p257, %p258
    %p260 = scmp.ne.s32.totalorder %s251, %s252
    %p261 = scmp.eq.s32.totalorder %s26, 0
    %p262 = por %p260, %p261
    %p263 = scmp.ne.s32.totalorder %s251, %s252
    %p264 = scmp.eq.s32.totalorder %s27, 1
    %p265 = por %p263, %p264
    %p267 = scmp.ne.s32.totalorder %s252, %s266
    %p268 = scmp.eq.s32.totalorder %s27, 0
    %p269 = por %p267, %p268
    %s271 = sadd.s32 %s270, 1
    %p274 = scmp.eq.s32.totalorder %s21, 1
    %p275 = scmp.ne.s32.totalorder %s270, %s272
    %p276 = scmp.eq.s32.totalorder %s21, 0
    %p277 = por %p275, %p276
    %p278 = scmp.ne.s32.totalorder %s270, %s272
    %p279 = scmp.eq.s32.totalorder %s26, 1
    %p280 = por %p278, %p279
    %p281 = scmp.ne.s32.totalorder %s272, %s273
    %p282 = scmp.eq.s32.totalorder %s26, 0
    %p283 = por %p281, %p282
    %p284 = scmp.ne.s32.totalorder %s272, %s273
    %p285 = scmp.eq.s32.totalorder %s27, 1
    %p286 = por %p284, %p285
    %p288 = scmp.ne.s32.totalorder %s273, %s287
    %p289 = scmp.eq.s32.totalorder %s27, 0
    %p290 = por %p288, %p289
    %s292 = sadd.s32 %s291, 1
    %p295 = scmp.eq.s32.totalorder %s21, 1
    %p296 = scmp.ne.s32.totalorder %s291, %s293
    %p297 = scmp.eq.s32.totalorder %s21, 0
    %p298 = por %p296, %p297
    %p299 = scmp.ne.s32.totalorder %s291, %s293
    %p300 = scmp.eq.s32.totalorder %s26, 1
    %p301 = por %p299, %p300
    %p302 = scmp.ne.s32.totalorder %s293, %s294
    %p303 = scmp.eq.s32.totalorder %s26, 0
    %p304 = por %p302, %p303
    %p305 = scmp.ne.s32.totalorder %s293, %s294
    %p306 = scmp.eq.s32.totalorder %s27, 1
    %p307 = por %p305, %p306
    %p309 = scmp.ne.s32.totalorder %s294, %s308
    %p310 = scmp.eq.s32.totalorder %s27, 0
    %p311 = por %p309, %p310
    %s313 = sadd.s32 %s312, 1
    %p316 = scmp.eq.s32.totalorder %s21, 1
    %p317 = scmp.ne.s32.totalorder %s312, %s314
    %p318 = scmp.eq.s32.totalorder %s21, 0
    %p319 = por %p317, %p318
    %p320 = scmp.ne.s32.totalorder %s312, %s314
    %p321 = scmp.eq.s32.totalorder %s26, 1
    %p322 = por %p320, %p321
    %p323 = scmp.ne.s32.totalorder %s314, %s315
    %p324 = scmp.eq.s32.totalorder %s26, 0
    %p325 = por %p323, %p324
    %p326 = scmp.ne.s32.totalorder %s314, %s315
    %p327 = scmp.eq.s32.totalorder %s27, 1
    %p328 = por %p326, %p327
    %p330 = scmp.ne.s32.totalorder %s315, %s329
    %p331 = scmp.eq.s32.totalorder %s27, 0
    %p332 = por %p330, %p331
    %s334 = sadd.s32 %s333, 1
    %p337 = scmp.eq.s32.totalorder %s21, 1
    %p338 = scmp.ne.s32.totalorder %s333, %s335
    %p339 = scmp.eq.s32.totalorder %s21, 0
    %p340 = por %p338, %p339
    %p341 = scmp.ne.s32.totalorder %s333, %s335
    %p342 = scmp.eq.s32.totalorder %s26, 1
    %p343 = por %p341, %p342
    %p344 = scmp.ne.s32.totalorder %s335, %s336
    %p345 = scmp.eq.s32.totalorder %s26, 0
    %p346 = por %p344, %p345
    %p347 = scmp.ne.s32.totalorder %s335, %s336
    %p348 = scmp.eq.s32.totalorder %s27, 1
    %p349 = por %p347, %p348
    %p351 = scmp.ne.s32.totalorder %s336, %s350
    %p352 = scmp.eq.s32.totalorder %s27, 0
    %p353 = por %p351, %p352
    %s354 = ssub.s32 %s21, %s28
    %p355 = scmp.eq.s32.totalorder %s354, 0
    %s357 = sadd.s32 %s356, 1
    %s358 = scalar_select %p355, %s356, %s357
    %p361 = pneg %p355
    %p362 = scmp.eq.s32.totalorder %s21, 1
    %p363 = por %p361, %p362
    %p364 = scmp.ne.s32.totalorder %s356, %s359
    %p365 = scmp.eq.s32.totalorder %s21, 0
    %p366 = por %p364, %p365
    %p367 = scmp.ne.s32.totalorder %s356, %s359
    %p368 = scmp.eq.s32.totalorder %s26, 1
    %p369 = por %p367, %p368
    %p370 = scmp.ne.s32.totalorder %s359, %s360
    %p371 = scmp.eq.s32.totalorder %s26, 0
    %p372 = por %p370, %p371
    %p373 = scmp.ne.s32.totalorder %s359, %s360
    %p374 = scmp.eq.s32.totalorder %s27, 1
    %p375 = por %p373, %p374
    %p377 = scmp.ne.s32.totalorder %s360, %s376
    %p378 = scmp.eq.s32.totalorder %s27, 0
    %p379 = por %p377, %p378
    %p380 = scmp.le.s32.totalorder 1, %s21
    %p381 = scmp.lt.s32.totalorder %s21, 3
    %p382 = pnand %p380, %p381
    %p383 = pneg %p382
    // Predicated region
    $region9: #{swin_attention_forward.1} parent=5 // pred_check
      _
    $region10: #{swin_attention_forward.1} parent=5 // pred_check_branch
      %385 = sbr.rel (%p382) target = $region12
    $region11: #{swin_attention_forward.1} parent=5 // pred_region
      %s386 = ssub.s32 %s21, 1
      // Predicated region
      $region13: #{swin_attention_forward.1} parent=11 // pred_check
        %p387 = pneg %p94
      $region14: #{swin_attention_forward.1} parent=11 // pred_check_branch
        %389 = sbr.rel (%p387) target = $region16
      $region15: #{swin_attention_forward.1} parent=11 // pred_region
        _
      $region16: #{swin_attention_forward.1} parent=11 // pred_fallthru
        _
      // Predicated region
      $region17: #{swin_attention_forward.1} parent=11 // pred_check
        %p390 = pneg %p115
      $region18: #{swin_attention_forward.1} parent=11 // pred_check_branch
        %392 = sbr.rel (%p390) target = $region20
      $region19: #{swin_attention_forward.1} parent=11 // pred_region
        _
      $region20: #{swin_attention_forward.1} parent=11 // pred_fallthru
        _
      // Predicated region
      $region21: #{swin_attention_forward.1} parent=11 // pred_check
        %p393 = pneg %p136
      $region22: #{swin_attention_forward.1} parent=11 // pred_check_branch
        %395 = sbr.rel (%p393) target = $region24
      $region23: #{swin_attention_forward.1} parent=11 // pred_region
        _
      $region24: #{swin_attention_forward.1} parent=11 // pred_fallthru
        _
      // Predicated region
      $region25: #{swin_attention_forward.1} parent=11 // pred_check
        %p396 = pneg %p157
      $region26: #{swin_attention_forward.1} parent=11 // pred_check_branch
        %398 = sbr.rel (%p396) target = $region28
      $region27: #{swin_attention_forward.1} parent=11 // pred_region
        _
      $region28: #{swin_attention_forward.1} parent=11 // pred_fallthru
        _
      // Predicated region
      $region29: #{swin_attention_forward.1} parent=11 // pred_check
        %p399 = pneg %p178
      $region30: #{swin_attention_forward.1} parent=11 // pred_check_branch
        %401 = sbr.rel (%p399) target = $region32
      $region31: #{swin_attention_forward.1} parent=11 // pred_region
        _
      $region32: #{swin_attention_forward.1} parent=11 // pred_fallthru
        _
      // Predicated region
      $region33: #{swin_attention_forward.1} parent=11 // pred_check
        %p402 = pneg %p199
      $region34: #{swin_attention_forward.1} parent=11 // pred_check_branch
        %404 = sbr.rel (%p402) target = $region36
      $region35: #{swin_attention_forward.1} parent=11 // pred_region
        _
      $region36: #{swin_attention_forward.1} parent=11 // pred_fallthru
        _
      // Predicated region
      $region37: #{swin_attention_forward.1} parent=11 // pred_check
        %p405 = pneg %p220
      $region38: #{swin_attention_forward.1} parent=11 // pred_check_branch
        %407 = sbr.rel (%p405) target = $region40
      $region39: #{swin_attention_forward.1} parent=11 // pred_region
        _
      $region40: #{swin_attention_forward.1} parent=11 // pred_fallthru
        _
      // Predicated region
      $region41: #{swin_attention_forward.1} parent=11 // pred_check
        %p408 = pneg %p241
      $region42: #{swin_attention_forward.1} parent=11 // pred_check_branch
        %410 = sbr.rel (%p408) target = $region44
      $region43: #{swin_attention_forward.1} parent=11 // pred_region
        _
      $region44: #{swin_attention_forward.1} parent=11 // pred_fallthru
        _
      // Predicated region
      $region45: #{swin_attention_forward.1} parent=11 // pred_check
        %p411 = pneg %p262
      $region46: #{swin_attention_forward.1} parent=11 // pred_check_branch
        %413 = sbr.rel (%p411) target = $region48
      $region47: #{swin_attention_forward.1} parent=11 // pred_region
        _
      $region48: #{swin_attention_forward.1} parent=11 // pred_fallthru
        _
      // Predicated region
      $region49: #{swin_attention_forward.1} parent=11 // pred_check
        %p414 = pneg %p283
      $region50: #{swin_attention_forward.1} parent=11 // pred_check_branch
        %416 = sbr.rel (%p414) target = $region52
      $region51: #{swin_attention_forward.1} parent=11 // pred_region
        _
      $region52: #{swin_attention_forward.1} parent=11 // pred_fallthru
        _
      // Predicated region
      $region53: #{swin_attention_forward.1} parent=11 // pred_check
        %p417 = pneg %p304
      $region54: #{swin_attention_forward.1} parent=11 // pred_check_branch
        %419 = sbr.rel (%p417) target = $region56
      $region55: #{swin_attention_forward.1} parent=11 // pred_region
        _
      $region56: #{swin_attention_forward.1} parent=11 // pred_fallthru
        _
      // Predicated region
      $region57: #{swin_attention_forward.1} parent=11 // pred_check
        %p420 = pneg %p325
      $region58: #{swin_attention_forward.1} parent=11 // pred_check_branch
        %422 = sbr.rel (%p420) target = $region60
      $region59: #{swin_attention_forward.1} parent=11 // pred_region
        _
      $region60: #{swin_attention_forward.1} parent=11 // pred_fallthru
        _
      // Predicated region
      $region61: #{swin_attention_forward.1} parent=11 // pred_check
        %p423 = pneg %p346
      $region62: #{swin_attention_forward.1} parent=11 // pred_check_branch
        %425 = sbr.rel (%p423) target = $region64
      $region63: #{swin_attention_forward.1} parent=11 // pred_region
        _
      $region64: #{swin_attention_forward.1} parent=11 // pred_fallthru
        _
    $region12: #{swin_attention_forward.1} parent=5 // pred_fallthru
      _
    %p426 = scmp.lt.s32.totalorder %s21, 2
    // Predicated region
    $region65: #{swin_attention_forward.1} parent=5 // pred_check
      %p427 = pneg %p426
    $region66: #{swin_attention_forward.1} parent=5 // pred_check_branch
      %429 = sbr.rel (%p427) target = $region68
    $region67: #{swin_attention_forward.1} parent=5 // pred_region
      // Predicated region
      $region69: #{swin_attention_forward.1} parent=67 // pred_check
        %p430 = pneg %p41
      $region70: #{swin_attention_forward.1} parent=67 // pred_check_branch
        %432 = sbr.rel (%p430) target = $region72
      $region71: #{swin_attention_forward.1} parent=67 // pred_region
        %p433 = scmp.lt.s32.totalorder %s21, 1
        %s434 = scalar_select %p433, %s21, 1
        %s435 = smul.addr %s434, 8
        %s436 = smul.addr %s435, 8
        %s437 = scalar_lea.vmem %s0, %s436
      $region72: #{swin_attention_forward.1} parent=67 // pred_fallthru
        _
      // Predicated region
      $region73: #{swin_attention_forward.1} parent=67 // pred_check
        %p438 = pneg %p67
      $region74: #{swin_attention_forward.1} parent=67 // pred_check_branch
        %440 = sbr.rel (%p438) target = $region76
      $region75: #{swin_attention_forward.1} parent=67 // pred_region
        %p441 = scmp.lt.s32.totalorder %s21, 1
        %s442 = scalar_select %p441, %s21, 1
        %s443 = smul.addr %s442, 8
        %s444 = smul.addr %s443, 8
        %s445 = scalar_lea.vmem %s1, %s444
      $region76: #{swin_attention_forward.1} parent=67 // pred_fallthru
        _
    $region68: #{swin_attention_forward.1} parent=5 // pred_fallthru
      _
    %p446 = scmp.le.s32.totalorder 1, %s21
    %p447 = scmp.lt.s32.totalorder %s21, 3
    %p448 = pnand %p446, %p447
    %p449 = pneg %p448
    // Predicated region
    $region77: #{swin_attention_forward.1} parent=5 // pred_check
      _
    $region78: #{swin_attention_forward.1} parent=5 // pred_check_branch
      %451 = sbr.rel (%p448) target = $region80
    $region79: #{swin_attention_forward.1} parent=5 // pred_region
      %s452 = ssub.s32 %s21, 1
      %p453 = scmp.lt.s32.totalorder %s26, 1
      %s454 = scalar_select %p453, %s26, 1
      %s455 = smul.addr %s454, 8
      %s456 = smul.addr %s455, 8
      %s457 = scalar_lea.vmem %s0, %s456
      %p458 = pneg %p47
      %p459 = pneg %p44
      %p460 = scmp.lt.s32.totalorder %s26, 1
      %s461 = scalar_select %p460, %s26, 1
      %s462 = smul.addr %s461, 8
      %s463 = smul.addr %s462, 8
      %s464 = scalar_lea.vmem %s1, %s463
      %p465 = pneg %p73
      %p466 = pneg %p70
      %p467 = pneg %p94
      %p468 = pneg %p91
      %p469 = pneg %p115
      %p470 = pneg %p112
      %p471 = pneg %p136
      %p472 = pneg %p133
      %p473 = pneg %p157
      %p474 = pneg %p154
      %p475 = pneg %p178
      %p476 = pneg %p175
      %p477 = pneg %p199
      %p478 = pneg %p196
      %p479 = pneg %p220
      %p480 = pneg %p217
      %p481 = pneg %p241
      %p482 = pneg %p238
      %p483 = pneg %p262
      %p484 = pneg %p259
      %p485 = pneg %p283
      %p486 = pneg %p280
      %p487 = pneg %p304
      %p488 = pneg %p301
      %p489 = pneg %p325
      %p490 = pneg %p322
      %p491 = pneg %p346
      %p492 = pneg %p343
      %p493 = pneg %p372
      %p494 = pneg %p369
      %p495 = scmp.lt.s32.totalorder %s26, 1
      %s496 = scalar_select %p495, %s26, 1
      %s497 = smul.addr %s496, 8
      %s498 = smul.addr %s497, 8
      %s499 = scalar_lea.vmem %s15, %s498
      %p500 = scmp.lt.s32.totalorder %s26, 1
      %s501 = scalar_select %p500, %s26, 1
      %s502 = smul.addr %s501, 8
      %s503 = smul.addr %s502, 8
      %s504 = scalar_lea.vmem %s0, %s503
      %p505 = scmp.lt.s32.totalorder %s26, 1
      %s506 = scalar_select %p505, %s26, 1
      %s507 = smul.addr %s506, 8
      %s508 = smul.addr %s507, 8
      %s509 = scalar_lea.vmem %s1, %s508
      %p510 = scmp.lt.s32.totalorder %s26, 1
      %s511 = scalar_select %p510, %s26, 1
      %s512 = smul.addr %s511, 8
      %s513 = smul.addr %s512, 8
      %s514 = scalar_lea.vmem %s15, %s513
      %v515 = vld [vmem:[%s504] sm:$0xff]
      %v516 = vld [vmem:[%s504 + $0x8] sm:$0xff]
      %v517 = vld [vmem:[%s504 + $0x10] sm:$0xff]
      %v518 = vld [vmem:[%s504 + $0x18] sm:$0xff]
      %v519 = vld [vmem:[%s504 + $0x20] sm:$0xff]
      %v520 = vld [vmem:[%s504 + $0x28] sm:$0xff]
      %v521 = vld [vmem:[%s504 + $0x30] sm:$0xff]
      %v522 = vld [vmem:[%s504 + $0x38] sm:$0xff]
      %v523 = vld [vmem:[%s509] sm:$0xff]
      %v524 = vld [vmem:[%s509 + $0x8] sm:$0xff]
      %v525 = vld [vmem:[%s509 + $0x10] sm:$0xff]
      %v526 = vld [vmem:[%s509 + $0x18] sm:$0xff]
      %v527 = vld [vmem:[%s509 + $0x20] sm:$0xff]
      %v528 = vld [vmem:[%s509 + $0x28] sm:$0xff]
      %v529 = vld [vmem:[%s509 + $0x30] sm:$0xff]
      %v530 = vld [vmem:[%s509 + $0x38] sm:$0xff]
      %532 = vset.pattern.permute.xlu0 0
      %533 = vperm.xlu0 %532, %v523
      %v534 = vpop.permute.xlu0 %533
      %537 = vset.pattern.permute.xlu0 0
      %538 = vperm.xlu0 %537, %v524
      %v539 = vpop.permute.xlu0 %538
      %542 = vset.pattern.permute.xlu0 0
      %543 = vperm.xlu0 %542, %v525
      %v544 = vpop.permute.xlu0 %543
      %547 = vset.pattern.permute.xlu0 0
      %548 = vperm.xlu0 %547, %v526
      %v549 = vpop.permute.xlu0 %548
      %552 = vset.pattern.permute.xlu0 0
      %553 = vperm.xlu0 %552, %v527
      %v554 = vpop.permute.xlu0 %553
      %557 = vset.pattern.permute.xlu0 0
      %558 = vperm.xlu0 %557, %v528
      %v559 = vpop.permute.xlu0 %558
      %562 = vset.pattern.permute.xlu0 0
      %563 = vperm.xlu0 %562, %v529
      %v564 = vpop.permute.xlu0 %563
      %567 = vset.pattern.permute.xlu0 0
      %568 = vperm.xlu0 %567, %v530
      %v569 = vpop.permute.xlu0 %568
      %v571 = vmul.f32 %v515, %v534
      %v572 = vmul.f32 %v516, %v539
      %v573 = vmul.f32 %v517, %v544
      %v574 = vmul.f32 %v518, %v549
      %v575 = vmul.f32 %v519, %v554
      %v576 = vmul.f32 %v520, %v559
      %v577 = vmul.f32 %v521, %v564
      %v578 = vmul.f32 %v522, %v569
      %vm579 = vcmask 130048
      %v580 = vsel %vm579, %v571, 0.0
      %581 = vadd.xlane.f32.xlu0 %v580
      %v582 = vpop.xlane.xlu0 %581
      %v583 = vsel %vm579, %v572, 0.0
      %584 = vadd.xlane.f32.xlu0 %v583
      %v585 = vpop.xlane.xlu0 %584
      %v586 = vsel %vm579, %v573, 0.0
      %587 = vadd.xlane.f32.xlu0 %v586
      %v588 = vpop.xlane.xlu0 %587
      %v589 = vsel %vm579, %v574, 0.0
      %590 = vadd.xlane.f32.xlu0 %v589
      %v591 = vpop.xlane.xlu0 %590
      %v592 = vsel %vm579, %v575, 0.0
      %593 = vadd.xlane.f32.xlu0 %v592
      %v594 = vpop.xlane.xlu0 %593
      %v595 = vsel %vm579, %v576, 0.0
      %596 = vadd.xlane.f32.xlu0 %v595
      %v597 = vpop.xlane.xlu0 %596
      %v598 = vsel %vm579, %v577, 0.0
      %599 = vadd.xlane.f32.xlu0 %v598
      %v600 = vpop.xlane.xlu0 %599
      %v601 = vsel %vm579, %v578, 0.0
      %602 = vadd.xlane.f32.xlu0 %v601
      %v603 = vpop.xlane.xlu0 %602
      %v604 = vrcp.pop 16.0
      %v605 = vmul.f32 %v582, %v604
      %v606 = vmul.f32 %v585, %v604
      %v607 = vmul.f32 %v588, %v604
      %v608 = vmul.f32 %v591, %v604
      %v609 = vmul.f32 %v594, %v604
      %v610 = vmul.f32 %v597, %v604
      %v611 = vmul.f32 %v600, %v604
      %v612 = vmul.f32 %v603, %v604
      %v613 = vsub.f32 %v571, %v605
      %v614 = vsub.f32 %v572, %v606
      %v615 = vsub.f32 %v573, %v607
      %v616 = vsub.f32 %v574, %v608
      %v617 = vsub.f32 %v575, %v609
      %v618 = vsub.f32 %v576, %v610
      %v619 = vsub.f32 %v577, %v611
      %v620 = vsub.f32 %v578, %v612
      %v621 = vmul.f32 %v613, %v613
      %v622 = vmul.f32 %v614, %v614
      %v623 = vmul.f32 %v615, %v615
      %v624 = vmul.f32 %v616, %v616
      %v625 = vmul.f32 %v617, %v617
      %v626 = vmul.f32 %v618, %v618
      %v627 = vmul.f32 %v619, %v619
      %v628 = vmul.f32 %v620, %v620
      %v629 = vsel %vm579, %v621, 0.0
      %630 = vadd.xlane.f32.xlu0 %v629
      %v631 = vpop.xlane.xlu0 %630
      %v632 = vsel %vm579, %v622, 0.0
      %633 = vadd.xlane.f32.xlu0 %v632
      %v634 = vpop.xlane.xlu0 %633
      %v635 = vsel %vm579, %v623, 0.0
      %636 = vadd.xlane.f32.xlu0 %v635
      %v637 = vpop.xlane.xlu0 %636
      %v638 = vsel %vm579, %v624, 0.0
      %639 = vadd.xlane.f32.xlu0 %v638
      %v640 = vpop.xlane.xlu0 %639
      %v641 = vsel %vm579, %v625, 0.0
      %642 = vadd.xlane.f32.xlu0 %v641
      %v643 = vpop.xlane.xlu0 %642
      %v644 = vsel %vm579, %v626, 0.0
      %645 = vadd.xlane.f32.xlu0 %v644
      %v646 = vpop.xlane.xlu0 %645
      %v647 = vsel %vm579, %v627, 0.0
      %648 = vadd.xlane.f32.xlu0 %v647
      %v649 = vpop.xlane.xlu0 %648
      %v650 = vsel %vm579, %v628, 0.0
      %651 = vadd.xlane.f32.xlu0 %v650
      %v652 = vpop.xlane.xlu0 %651
      %v653 = vmul.f32 %v631, %v604
      %v654 = vmul.f32 %v634, %v604
      %v655 = vmul.f32 %v637, %v604
      %v656 = vmul.f32 %v640, %v604
      %v657 = vmul.f32 %v643, %v604
      %v658 = vmul.f32 %v646, %v604
      %v659 = vmul.f32 %v649, %v604
      %v660 = vmul.f32 %v652, %v604
      %v661 = vadd.f32 %v653, 1e-05
      %v662 = vadd.f32 %v654, 1e-05
      %v663 = vadd.f32 %v655, 1e-05
      %v664 = vadd.f32 %v656, 1e-05
      %v665 = vadd.f32 %v657, 1e-05
      %v666 = vadd.f32 %v658, 1e-05
      %v667 = vadd.f32 %v659, 1e-05
      %v668 = vadd.f32 %v660, 1e-05
      %v669 = vrsqrt.pop %v661
      %v670 = vrsqrt.pop %v662
      %v671 = vrsqrt.pop %v663
      %v672 = vrsqrt.pop %v664
      %v673 = vrsqrt.pop %v665
      %v674 = vrsqrt.pop %v666
      %v675 = vrsqrt.pop %v667
      %v676 = vrsqrt.pop %v668
      %v677 = vmul.f32 %v613, %v669
      %v678 = vmul.f32 %v614, %v670
      %v679 = vmul.f32 %v615, %v671
      %v680 = vmul.f32 %v616, %v672
      %v681 = vmul.f32 %v617, %v673
      %v682 = vmul.f32 %v618, %v674
      %v683 = vmul.f32 %v619, %v675
      %v684 = vmul.f32 %v620, %v676
      %v685 = vld [vmem:[%s4] sm:$0x1]
      %v687 = vlaneseq
      %v688 = vshrl.u32 %v687, 7
      %v689 = vsub.s32 0, %v688
      %v690 = vrot.slane %v685, %v689
      %v692 = vmul.f32 %v677, %v690
      %v693 = vmul.f32 %v678, %v690
      %v694 = vmul.f32 %v679, %v690
      %v695 = vmul.f32 %v680, %v690
      %v696 = vmul.f32 %v681, %v690
      %v697 = vmul.f32 %v682, %v690
      %v698 = vmul.f32 %v683, %v690
      %v699 = vmul.f32 %v684, %v690
      %v700 = vld [vmem:[%s5] sm:$0x1]
      %v702 = vlaneseq
      %v703 = vshrl.u32 %v702, 7
      %v704 = vsub.s32 0, %v703
      %v705 = vrot.slane %v700, %v704
      %v707 = vadd.f32 %v692, %v705
      %v708 = vadd.f32 %v693, %v705
      %v709 = vadd.f32 %v694, %v705
      %v710 = vadd.f32 %v695, %v705
      %v711 = vadd.f32 %v696, %v705
      %v712 = vadd.f32 %v697, %v705
      %v713 = vadd.f32 %v698, %v705
      %v714 = vadd.f32 %v699, %v705
      %v715 = vld [vmem:[%s8] sm:$0xff]
      %v716 = vld [vmem:[%s8 + $0x8] sm:$0xff]
      %v717 = vld [vmem:[%s9] sm:$0x1]
      %v719 = vlaneseq
      %v720 = vshrl.u32 %v719, 7
      %v721 = vsub.s32 0, %v720
      %v722 = vrot.slane %v717, %v721
      %v725 = vsel %vm579, %v707, 0
      %v728 = vsel %vm579, %v708, 0
      %v731 = vsel %vm579, %v709, 0
      %v734 = vsel %vm579, %v710, 0
      %v737 = vsel %vm579, %v711, 0
      %v740 = vsel %vm579, %v712, 0
      %v743 = vsel %vm579, %v713, 0
      %v746 = vsel %vm579, %v714, 0
      %748 = vmatprep.subr.mxu0 0.0
      %749 = vmatpush1.msra.mxu0 0.0
      %750 = vmatprep.subr.mxu0 0.0
      %751 = vmatpush1.msra.mxu0 0.0
      %752 = vmatprep.subr.mxu0 0.0
      %753 = vmatpush1.msra.mxu0 0.0
      %754 = vmatprep.subr.mxu0 0.0
      %755 = vmatpush1.msra.mxu0 0.0
      %756 = vmatprep.subr.mxu0 0.0
      %757 = vmatpush1.msra.mxu0 0.0
      %758 = vmatprep.subr.mxu0 0.0
      %759 = vmatpush1.msra.mxu0 0.0
      %760 = vmatprep.subr.mxu0 0.0
      %761 = vmatpush1.msra.mxu0 0.0
      %762 = vmatprep.subr.mxu0 0.0
      %763 = vmatpush1.msra.mxu0 0.0
      %764 = vmatprep.subr.mxu0 0.0
      %765 = vmatpush1.msra.mxu0 0.0
      %766 = vmatprep.subr.mxu0 0.0
      %767 = vmatpush1.msra.mxu0 0.0
      %768 = vmatprep.subr.mxu0 0.0
      %769 = vmatpush1.msra.mxu0 0.0
      %770 = vmatprep.subr.mxu0 0.0
      %771 = vmatpush1.msra.mxu0 0.0
      %772 = vmatprep.subr.mxu0 0.0
      %773 = vmatpush1.msra.mxu0 0.0
      %774 = vmatprep.subr.mxu0 0.0
      %775 = vmatpush1.msra.mxu0 0.0
      %776 = vmatprep.subr.mxu0 0.0
      %777 = vmatpush1.msra.mxu0 %v716
      %778 = vmatprep.subr.mxu0 0.0
      %779 = vmatpush1.msra.mxu0 %v715
      %780 = vmatprep.subr.mxu0 0.0
      %781 = vmatpush2.msra.mxu0 0.0
      %782 = vmatprep.subr.mxu0 0.0
      %783 = vmatpush2.msra.mxu0 0.0
      %784 = vmatprep.subr.mxu0 0.0
      %785 = vmatpush2.msra.mxu0 0.0
      %786 = vmatprep.subr.mxu0 0.0
      %787 = vmatpush2.msra.mxu0 0.0
      %788 = vmatprep.subr.mxu0 0.0
      %789 = vmatpush2.msra.mxu0 0.0
      %790 = vmatprep.subr.mxu0 0.0
      %791 = vmatpush2.msra.mxu0 0.0
      %792 = vmatprep.subr.mxu0 0.0
      %793 = vmatpush2.msra.mxu0 0.0
      %794 = vmatprep.subr.mxu0 0.0
      %795 = vmatpush2.msra.mxu0 0.0
      %796 = vmatprep.subr.mxu0 0.0
      %797 = vmatpush2.msra.mxu0 0.0
      %798 = vmatprep.subr.mxu0 0.0
      %799 = vmatpush2.msra.mxu0 0.0
      %800 = vmatprep.subr.mxu0 0.0
      %801 = vmatpush2.msra.mxu0 0.0
      %802 = vmatprep.subr.mxu0 0.0
      %803 = vmatpush2.msra.mxu0 0.0
      %804 = vmatprep.subr.mxu0 0.0
      %805 = vmatpush2.msra.mxu0 0.0
      %806 = vmatprep.subr.mxu0 0.0
      %807 = vmatpush2.msra.mxu0 0.0
      %808 = vmatprep.subr.mxu0 0.0
      %809 = vmatpush2.msra.mxu0 0.0
      %810 = vmatprep.subr.mxu0 0.0
      %811 = vmatpush2.msra.mxu0 0.0
      %812 = vmatprep.mubr.f32.mxu0 0.0
      %813 = vmatmul.mubr.f32.gmra.mxu0 %v725
      %v814 = vpop.f32.mrf.mxu0
      %v815 = vadd.f32 %v722, %v814
      %v816 = vpop.f32.mrf.mxu0
      %817 = vmatprep.mubr.f32.mxu0 0.0
      %818 = vmatmul.mubr.f32.gmra.mxu0 %v728
      %v819 = vpop.f32.mrf.mxu0
      %v820 = vadd.f32 %v722, %v819
      %v821 = vpop.f32.mrf.mxu0
      %822 = vmatprep.mubr.f32.mxu0 0.0
      %823 = vmatmul.mubr.f32.gmra.mxu0 %v731
      %v824 = vpop.f32.mrf.mxu0
      %v825 = vadd.f32 %v722, %v824
      %v826 = vpop.f32.mrf.mxu0
      %827 = vmatprep.mubr.f32.mxu0 0.0
      %828 = vmatmul.mubr.f32.gmra.mxu0 %v734
      %v829 = vpop.f32.mrf.mxu0
      %v830 = vadd.f32 %v722, %v829
      %v831 = vpop.f32.mrf.mxu0
      %832 = vmatprep.mubr.f32.mxu0 0.0
      %833 = vmatmul.mubr.f32.gmra.mxu0 %v737
      %v834 = vpop.f32.mrf.mxu0
      %v835 = vadd.f32 %v722, %v834
      %v836 = vpop.f32.mrf.mxu0
      %837 = vmatprep.mubr.f32.mxu0 0.0
      %838 = vmatmul.mubr.f32.gmra.mxu0 %v740
      %v839 = vpop.f32.mrf.mxu0
      %v840 = vadd.f32 %v722, %v839
      %v841 = vpop.f32.mrf.mxu0
      %842 = vmatprep.mubr.f32.mxu0 0.0
      %843 = vmatmul.mubr.f32.gmra.mxu0 %v743
      %v844 = vpop.f32.mrf.mxu0
      %v845 = vadd.f32 %v722, %v844
      %v846 = vpop.f32.mrf.mxu0
      %847 = vmatprep.mubr.f32.mxu0 0.0
      %848 = vmatmul.mubr.f32.gmra.mxu0 %v746
      %v849 = vpop.f32.mrf.mxu0
      %v850 = vadd.f32 %v722, %v849
      %v851 = vpop.f32.mrf.mxu0
      %852 = vdwg.mxu0
      %v853 = vld [vmem:[%s3] sm:$0x1]
      %v854 = vlaneseq
      %v855 = vshrl.u32 %v854, 7
      %v856 = vsub.s32 0, %v855
      %v857 = vrot.slane %v853, %v856
      %v858 = vmul.f32 %v815, %v857
      %v859 = vmul.f32 %v820, %v857
      %v860 = vmul.f32 %v825, %v857
      %v861 = vmul.f32 %v830, %v857
      %v862 = vmul.f32 %v835, %v857
      %v863 = vmul.f32 %v840, %v857
      %v864 = vmul.f32 %v845, %v857
      %v865 = vmul.f32 %v850, %v857
      %v866 = vld [vmem:[%s3 + $0x1] sm:$0x1]
      %v867 = vlaneseq
      %v868 = vshrl.u32 %v867, 7
      %v869 = vsub.s32 0, %v868
      %v870 = vrot.slane %v866, %v869
      %v871 = vmul.f32 %v815, %v870
      %v872 = vmul.f32 %v820, %v870
      %v873 = vmul.f32 %v825, %v870
      %v874 = vmul.f32 %v830, %v870
      %v875 = vmul.f32 %v835, %v870
      %v876 = vmul.f32 %v840, %v870
      %v877 = vmul.f32 %v845, %v870
      %v878 = vmul.f32 %v850, %v870
      %v879 = vld [vmem:[%s3 + $0x2] sm:$0x1]
      %v880 = vlaneseq
      %v881 = vshrl.u32 %v880, 7
      %v882 = vsub.s32 0, %v881
      %v883 = vrot.slane %v879, %v882
      %v884 = vmul.f32 %v815, %v883
      %v885 = vmul.f32 %v820, %v883
      %v886 = vmul.f32 %v825, %v883
      %v887 = vmul.f32 %v830, %v883
      %v888 = vmul.f32 %v835, %v883
      %v889 = vmul.f32 %v840, %v883
      %v890 = vmul.f32 %v845, %v883
      %v891 = vmul.f32 %v850, %v883
      %v892 = vld [vmem:[%s3 + $0x3] sm:$0x1]
      %v893 = vlaneseq
      %v894 = vshrl.u32 %v893, 7
      %v895 = vsub.s32 0, %v894
      %v896 = vrot.slane %v892, %v895
      %v897 = vmul.f32 %v815, %v896
      %v898 = vmul.f32 %v820, %v896
      %v899 = vmul.f32 %v825, %v896
      %v900 = vmul.f32 %v830, %v896
      %v901 = vmul.f32 %v835, %v896
      %v902 = vmul.f32 %v840, %v896
      %v903 = vmul.f32 %v845, %v896
      %v904 = vmul.f32 %v850, %v896
      %v905 = vld [vmem:[%s2] sm:$0xff]
      %v906 = vld [vmem:[%s2 + $0x8] sm:$0xff]
      %v907 = vld [vmem:[%s2 + $0x10] sm:$0xff]
      %v908 = vld [vmem:[%s2 + $0x18] sm:$0xff]
      %v909 = vld [vmem:[%s2 + $0x20] sm:$0xff]
      %v910 = vld [vmem:[%s2 + $0x28] sm:$0xff]
      %v911 = vld [vmem:[%s2 + $0x30] sm:$0xff]
      %v912 = vld [vmem:[%s2 + $0x38] sm:$0xff]
      %v913 = vld [vmem:[%s2 + $0x40] sm:$0xff]
      %v914 = vld [vmem:[%s2 + $0x48] sm:$0xff]
      %v915 = vld [vmem:[%s2 + $0x50] sm:$0xff]
      %v916 = vld [vmem:[%s2 + $0x58] sm:$0xff]
      %v917 = vld [vmem:[%s2 + $0x60] sm:$0xff]
      %v918 = vld [vmem:[%s2 + $0x68] sm:$0xff]
      %v919 = vld [vmem:[%s2 + $0x70] sm:$0xff]
      %v920 = vld [vmem:[%s2 + $0x78] sm:$0xff]
      %v921 = vld [vmem:[%s2 + $0x80] sm:$0xff]
      %v922 = vld [vmem:[%s2 + $0x88] sm:$0xff]
      %v923 = vld [vmem:[%s2 + $0x90] sm:$0xff]
      %v924 = vld [vmem:[%s2 + $0x98] sm:$0xff]
      %v925 = vld [vmem:[%s2 + $0xa0] sm:$0xff]
      %v926 = vld [vmem:[%s2 + $0xa8] sm:$0xff]
      %v927 = vld [vmem:[%s2 + $0xb0] sm:$0xff]
      %v928 = vld [vmem:[%s2 + $0xb8] sm:$0xff]
      %v929 = vld [vmem:[%s2 + $0xc0] sm:$0xff]
      %v930 = vld [vmem:[%s2 + $0xc8] sm:$0xff]
      %v931 = vld [vmem:[%s2 + $0xd0] sm:$0xff]
      %v932 = vld [vmem:[%s2 + $0xd8] sm:$0xff]
      %v933 = vld [vmem:[%s2 + $0xe0] sm:$0xff]
      %v934 = vld [vmem:[%s2 + $0xe8] sm:$0xff]
      %v935 = vld [vmem:[%s2 + $0xf0] sm:$0xff]
      %v936 = vld [vmem:[%s2 + $0xf8] sm:$0xff]
      %945 = vrot.lane.b32.xlu0 %v815, 112
      %v946 = vpop.permute.xlu0 %945
      %947 = vrot.lane.b32.xlu0 %v820, 112
      %v948 = vpop.permute.xlu0 %947
      %949 = vrot.lane.b32.xlu0 %v825, 112
      %v950 = vpop.permute.xlu0 %949
      %951 = vrot.lane.b32.xlu0 %v830, 112
      %v952 = vpop.permute.xlu0 %951
      %953 = vrot.lane.b32.xlu0 %v835, 112
      %v954 = vpop.permute.xlu0 %953
      %955 = vrot.lane.b32.xlu0 %v840, 112
      %v956 = vpop.permute.xlu0 %955
      %957 = vrot.lane.b32.xlu0 %v845, 112
      %v958 = vpop.permute.xlu0 %957
      %959 = vrot.lane.b32.xlu0 %v850, 112
      %v960 = vpop.permute.xlu0 %959
      %v962 = vsel %vm579, %v858, 0
      %v965 = vsel %vm579, %v859, 0
      %v968 = vsel %vm579, %v860, 0
      %v971 = vsel %vm579, %v861, 0
      %v974 = vsel %vm579, %v862, 0
      %v977 = vsel %vm579, %v863, 0
      %v980 = vsel %vm579, %v864, 0
      %v983 = vsel %vm579, %v865, 0
      %v986 = vsel %vm579, %v871, 0
      %v989 = vsel %vm579, %v872, 0
      %v992 = vsel %vm579, %v873, 0
      %v995 = vsel %vm579, %v874, 0
      %v998 = vsel %vm579, %v875, 0
      %v1001 = vsel %vm579, %v876, 0
      %v1004 = vsel %vm579, %v877, 0
      %v1007 = vsel %vm579, %v878, 0
      %v1010 = vsel %vm579, %v884, 0
      %v1013 = vsel %vm579, %v885, 0
      %v1016 = vsel %vm579, %v886, 0
      %v1019 = vsel %vm579, %v887, 0
      %v1022 = vsel %vm579, %v888, 0
      %v1025 = vsel %vm579, %v889, 0
      %v1028 = vsel %vm579, %v890, 0
      %v1031 = vsel %vm579, %v891, 0
      %v1034 = vsel %vm579, %v897, 0
      %v1037 = vsel %vm579, %v898, 0
      %v1040 = vsel %vm579, %v899, 0
      %v1043 = vsel %vm579, %v900, 0
      %v1046 = vsel %vm579, %v901, 0
      %v1049 = vsel %vm579, %v902, 0
      %v1052 = vsel %vm579, %v903, 0
      %v1055 = vsel %vm579, %v904, 0
      %v1057 = vsel %vm579, %v946, 0
      %v1059 = vsel %vm579, %v948, 0
      %v1061 = vsel %vm579, %v950, 0
      %v1063 = vsel %vm579, %v952, 0
      %v1065 = vsel %vm579, %v954, 0
      %v1067 = vsel %vm579, %v956, 0
      %v1069 = vsel %vm579, %v958, 0
      %v1071 = vsel %vm579, %v960, 0
      %1073 = vmatprep.subr.mxu0 0.0
      %1074 = vmatpush1.xpose.msra.mxu0 0.0
      %1075 = vmatprep.subr.mxu0 0.0
      %1076 = vmatpush1.xpose.msra.mxu0 0.0
      %1077 = vmatprep.subr.mxu0 0.0
      %1078 = vmatpush1.xpose.msra.mxu0 0.0
      %1079 = vmatprep.subr.mxu0 0.0
      %1080 = vmatpush1.xpose.msra.mxu0 0.0
      %1081 = vmatprep.subr.mxu0 0.0
      %1082 = vmatpush1.xpose.msra.mxu0 0.0
      %1083 = vmatprep.subr.mxu0 0.0
      %1084 = vmatpush1.xpose.msra.mxu0 0.0
      %1085 = vmatprep.subr.mxu0 0.0
      %1086 = vmatpush1.xpose.msra.mxu0 0.0
      %1087 = vmatprep.subr.mxu0 0.0
      %1088 = vmatpush1.xpose.msra.mxu0 0.0
      %1089 = vmatprep.subr.mxu0 0.0
      %1090 = vmatpush1.xpose.msra.mxu0 %v1071
      %1091 = vmatprep.subr.mxu0 0.0
      %1092 = vmatpush1.xpose.msra.mxu0 %v1069
      %1093 = vmatprep.subr.mxu0 0.0
      %1094 = vmatpush1.xpose.msra.mxu0 %v1067
      %1095 = vmatprep.subr.mxu0 0.0
      %1096 = vmatpush1.xpose.msra.mxu0 %v1065
      %1097 = vmatprep.subr.mxu0 0.0
      %1098 = vmatpush1.xpose.msra.mxu0 %v1063
      %1099 = vmatprep.subr.mxu0 0.0
      %1100 = vmatpush1.xpose.msra.mxu0 %v1061
      %1101 = vmatprep.subr.mxu0 0.0
      %1102 = vmatpush1.xpose.msra.mxu0 %v1059
      %1103 = vmatprep.subr.mxu0 0.0
      %1104 = vmatpush1.xpose.msra.mxu0 %v1057
      %1105 = vmatprep.subr.mxu0 0.0
      %1106 = vmatpush2.xpose.msra.mxu0 0.0
      %1107 = vmatprep.subr.mxu0 0.0
      %1108 = vmatpush2.xpose.msra.mxu0 0.0
      %1109 = vmatprep.subr.mxu0 0.0
      %1110 = vmatpush2.xpose.msra.mxu0 0.0
      %1111 = vmatprep.subr.mxu0 0.0
      %1112 = vmatpush2.xpose.msra.mxu0 0.0
      %1113 = vmatprep.subr.mxu0 0.0
      %1114 = vmatpush2.xpose.msra.mxu0 0.0
      %1115 = vmatprep.subr.mxu0 0.0
      %1116 = vmatpush2.xpose.msra.mxu0 0.0
      %1117 = vmatprep.subr.mxu0 0.0
      %1118 = vmatpush2.xpose.msra.mxu0 0.0
      %1119 = vmatprep.subr.mxu0 0.0
      %1120 = vmatpush2.xpose.msra.mxu0 0.0
      %1121 = vmatprep.subr.mxu0 0.0
      %1122 = vmatpush2.xpose.msra.mxu0 0.0
      %1123 = vmatprep.subr.mxu0 0.0
      %1124 = vmatpush2.xpose.msra.mxu0 0.0
      %1125 = vmatprep.subr.mxu0 0.0
      %1126 = vmatpush2.xpose.msra.mxu0 0.0
      %1127 = vmatprep.subr.mxu0 0.0
      %1128 = vmatpush2.xpose.msra.mxu0 0.0
      %1129 = vmatprep.subr.mxu0 0.0
      %1130 = vmatpush2.xpose.msra.mxu0 0.0
      %1131 = vmatprep.subr.mxu0 0.0
      %1132 = vmatpush2.xpose.msra.mxu0 0.0
      %1133 = vmatprep.subr.mxu0 0.0
      %1134 = vmatpush2.xpose.msra.mxu0 0.0
      %1135 = vmatprep.subr.mxu0 0.0
      %1136 = vmatpush2.xpose.msra.mxu0 0.0
      %1137 = vmatprep.mubr.f32.mxu0 0.0
      %1138 = vmatmul.mubr.f32.gmra.mxu0 %v962
      %v1139 = vpop.f32.mrf.mxu0
      %v1140 = vadd.f32 %v905, %v1139
      %v1141 = vpop.f32.mrf.mxu0
      %1142 = vmatprep.mubr.f32.mxu0 0.0
      %1143 = vmatmul.mubr.f32.gmra.mxu0 %v965
      %v1144 = vpop.f32.mrf.mxu0
      %v1145 = vadd.f32 %v906, %v1144
      %v1146 = vpop.f32.mrf.mxu0
      %1147 = vmatprep.mubr.f32.mxu0 0.0
      %1148 = vmatmul.mubr.f32.gmra.mxu0 %v968
      %v1149 = vpop.f32.mrf.mxu0
      %v1150 = vadd.f32 %v907, %v1149
      %v1151 = vpop.f32.mrf.mxu0
      %1152 = vmatprep.mubr.f32.mxu0 0.0
      %1153 = vmatmul.mubr.f32.gmra.mxu0 %v971
      %v1154 = vpop.f32.mrf.mxu0
      %v1155 = vadd.f32 %v908, %v1154
      %v1156 = vpop.f32.mrf.mxu0
      %1157 = vmatprep.mubr.f32.mxu0 0.0
      %1158 = vmatmul.mubr.f32.gmra.mxu0 %v974
      %v1159 = vpop.f32.mrf.mxu0
      %v1160 = vadd.f32 %v909, %v1159
      %v1161 = vpop.f32.mrf.mxu0
      %1162 = vmatprep.mubr.f32.mxu0 0.0
      %1163 = vmatmul.mubr.f32.gmra.mxu0 %v977
      %v1164 = vpop.f32.mrf.mxu0
      %v1165 = vadd.f32 %v910, %v1164
      %v1166 = vpop.f32.mrf.mxu0
      %1167 = vmatprep.mubr.f32.mxu0 0.0
      %1168 = vmatmul.mubr.f32.gmra.mxu0 %v980
      %v1169 = vpop.f32.mrf.mxu0
      %v1170 = vadd.f32 %v911, %v1169
      %v1171 = vpop.f32.mrf.mxu0
      %1172 = vmatprep.mubr.f32.mxu0 0.0
      %1173 = vmatmul.mubr.f32.gmra.mxu0 %v983
      %v1174 = vpop.f32.mrf.mxu0
      %v1175 = vadd.f32 %v912, %v1174
      %v1176 = vpop.f32.mrf.mxu0
      %1177 = vmatprep.mubr.f32.mxu0 0.0
      %1178 = vmatmul.mubr.f32.gmra.mxu0 %v986
      %v1179 = vpop.f32.mrf.mxu0
      %v1180 = vadd.f32 %v913, %v1179
      %v1181 = vpop.f32.mrf.mxu0
      %1182 = vmatprep.mubr.f32.mxu0 0.0
      %1183 = vmatmul.mubr.f32.gmra.mxu0 %v989
      %v1184 = vpop.f32.mrf.mxu0
      %v1185 = vadd.f32 %v914, %v1184
      %v1186 = vpop.f32.mrf.mxu0
      %1187 = vmatprep.mubr.f32.mxu0 0.0
      %1188 = vmatmul.mubr.f32.gmra.mxu0 %v992
      %v1189 = vpop.f32.mrf.mxu0
      %v1190 = vadd.f32 %v915, %v1189
      %v1191 = vpop.f32.mrf.mxu0
      %1192 = vmatprep.mubr.f32.mxu0 0.0
      %1193 = vmatmul.mubr.f32.gmra.mxu0 %v995
      %v1194 = vpop.f32.mrf.mxu0
      %v1195 = vadd.f32 %v916, %v1194
      %v1196 = vpop.f32.mrf.mxu0
      %1197 = vmatprep.mubr.f32.mxu0 0.0
      %1198 = vmatmul.mubr.f32.gmra.mxu0 %v998
      %v1199 = vpop.f32.mrf.mxu0
      %v1200 = vadd.f32 %v917, %v1199
      %v1201 = vpop.f32.mrf.mxu0
      %1202 = vmatprep.mubr.f32.mxu0 0.0
      %1203 = vmatmul.mubr.f32.gmra.mxu0 %v1001
      %v1204 = vpop.f32.mrf.mxu0
      %v1205 = vadd.f32 %v918, %v1204
      %v1206 = vpop.f32.mrf.mxu0
      %1207 = vmatprep.mubr.f32.mxu0 0.0
      %1208 = vmatmul.mubr.f32.gmra.mxu0 %v1004
      %v1209 = vpop.f32.mrf.mxu0
      %v1210 = vadd.f32 %v919, %v1209
      %v1211 = vpop.f32.mrf.mxu0
      %1212 = vmatprep.mubr.f32.mxu0 0.0
      %1213 = vmatmul.mubr.f32.gmra.mxu0 %v1007
      %v1214 = vpop.f32.mrf.mxu0
      %v1215 = vadd.f32 %v920, %v1214
      %v1216 = vpop.f32.mrf.mxu0
      %1217 = vmatprep.mubr.f32.mxu0 0.0
      %1218 = vmatmul.mubr.f32.gmra.mxu0 %v1010
      %v1219 = vpop.f32.mrf.mxu0
      %v1220 = vadd.f32 %v921, %v1219
      %v1221 = vpop.f32.mrf.mxu0
      %1222 = vmatprep.mubr.f32.mxu0 0.0
      %1223 = vmatmul.mubr.f32.gmra.mxu0 %v1013
      %v1224 = vpop.f32.mrf.mxu0
      %v1225 = vadd.f32 %v922, %v1224
      %v1226 = vpop.f32.mrf.mxu0
      %1227 = vmatprep.mubr.f32.mxu0 0.0
      %1228 = vmatmul.mubr.f32.gmra.mxu0 %v1016
      %v1229 = vpop.f32.mrf.mxu0
      %v1230 = vadd.f32 %v923, %v1229
      %v1231 = vpop.f32.mrf.mxu0
      %1232 = vmatprep.mubr.f32.mxu0 0.0
      %1233 = vmatmul.mubr.f32.gmra.mxu0 %v1019
      %v1234 = vpop.f32.mrf.mxu0
      %v1235 = vadd.f32 %v924, %v1234
      %v1236 = vpop.f32.mrf.mxu0
      %1237 = vmatprep.mubr.f32.mxu0 0.0
      %1238 = vmatmul.mubr.f32.gmra.mxu0 %v1022
      %v1239 = vpop.f32.mrf.mxu0
      %v1240 = vadd.f32 %v925, %v1239
      %v1241 = vpop.f32.mrf.mxu0
      %1242 = vmatprep.mubr.f32.mxu0 0.0
      %1243 = vmatmul.mubr.f32.gmra.mxu0 %v1025
      %v1244 = vpop.f32.mrf.mxu0
      %v1245 = vadd.f32 %v926, %v1244
      %v1246 = vpop.f32.mrf.mxu0
      %1247 = vmatprep.mubr.f32.mxu0 0.0
      %1248 = vmatmul.mubr.f32.gmra.mxu0 %v1028
      %v1249 = vpop.f32.mrf.mxu0
      %v1250 = vadd.f32 %v927, %v1249
      %v1251 = vpop.f32.mrf.mxu0
      %1252 = vmatprep.mubr.f32.mxu0 0.0
      %1253 = vmatmul.mubr.f32.gmra.mxu0 %v1031
      %v1254 = vpop.f32.mrf.mxu0
      %v1255 = vadd.f32 %v928, %v1254
      %v1256 = vpop.f32.mrf.mxu0
      %1257 = vmatprep.mubr.f32.mxu0 0.0
      %1258 = vmatmul.mubr.f32.gmra.mxu0 %v1034
      %v1259 = vpop.f32.mrf.mxu0
      %v1260 = vadd.f32 %v929, %v1259
      %v1261 = vpop.f32.mrf.mxu0
      %1262 = vmatprep.mubr.f32.mxu0 0.0
      %1263 = vmatmul.mubr.f32.gmra.mxu0 %v1037
      %v1264 = vpop.f32.mrf.mxu0
      %v1265 = vadd.f32 %v930, %v1264
      %v1266 = vpop.f32.mrf.mxu0
      %1267 = vmatprep.mubr.f32.mxu0 0.0
      %1268 = vmatmul.mubr.f32.gmra.mxu0 %v1040
      %v1269 = vpop.f32.mrf.mxu0
      %v1270 = vadd.f32 %v931, %v1269
      %v1271 = vpop.f32.mrf.mxu0
      %1272 = vmatprep.mubr.f32.mxu0 0.0
      %1273 = vmatmul.mubr.f32.gmra.mxu0 %v1043
      %v1274 = vpop.f32.mrf.mxu0
      %v1275 = vadd.f32 %v932, %v1274
      %v1276 = vpop.f32.mrf.mxu0
      %1277 = vmatprep.mubr.f32.mxu0 0.0
      %1278 = vmatmul.mubr.f32.gmra.mxu0 %v1046
      %v1279 = vpop.f32.mrf.mxu0
      %v1280 = vadd.f32 %v933, %v1279
      %v1281 = vpop.f32.mrf.mxu0
      %1282 = vmatprep.mubr.f32.mxu0 0.0
      %1283 = vmatmul.mubr.f32.gmra.mxu0 %v1049
      %v1284 = vpop.f32.mrf.mxu0
      %v1285 = vadd.f32 %v934, %v1284
      %v1286 = vpop.f32.mrf.mxu0
      %1287 = vmatprep.mubr.f32.mxu0 0.0
      %1288 = vmatmul.mubr.f32.gmra.mxu0 %v1052
      %v1289 = vpop.f32.mrf.mxu0
      %v1290 = vadd.f32 %v935, %v1289
      %v1291 = vpop.f32.mrf.mxu0
      %1292 = vmatprep.mubr.f32.mxu0 0.0
      %1293 = vmatmul.mubr.f32.gmra.mxu0 %v1055
      %v1294 = vpop.f32.mrf.mxu0
      %v1295 = vadd.f32 %v936, %v1294
      %v1296 = vpop.f32.mrf.mxu0
      %1297 = vdwg.mxu0
      %vm1298 = vcmask 523264
      %v1299 = vsel %vm1298, %v1140, -inf
      %1300 = vmax.xlane.f32.xlu0 %v1299
      %v1301 = vpop.xlane.xlu0 %1300
      %v1302 = vsel %vm1298, %v1145, -inf
      %1303 = vmax.xlane.f32.xlu0 %v1302
      %v1304 = vpop.xlane.xlu0 %1303
      %v1305 = vsel %vm1298, %v1150, -inf
      %1306 = vmax.xlane.f32.xlu0 %v1305
      %v1307 = vpop.xlane.xlu0 %1306
      %v1308 = vsel %vm1298, %v1155, -inf
      %1309 = vmax.xlane.f32.xlu0 %v1308
      %v1310 = vpop.xlane.xlu0 %1309
      %v1311 = vsel %vm1298, %v1160, -inf
      %1312 = vmax.xlane.f32.xlu0 %v1311
      %v1313 = vpop.xlane.xlu0 %1312
      %v1314 = vsel %vm1298, %v1165, -inf
      %1315 = vmax.xlane.f32.xlu0 %v1314
      %v1316 = vpop.xlane.xlu0 %1315
      %v1317 = vsel %vm1298, %v1170, -inf
      %1318 = vmax.xlane.f32.xlu0 %v1317
      %v1319 = vpop.xlane.xlu0 %1318
      %v1320 = vsel %vm1298, %v1175, -inf
      %1321 = vmax.xlane.f32.xlu0 %v1320
      %v1322 = vpop.xlane.xlu0 %1321
      %v1323 = vsel %vm1298, %v1180, -inf
      %1324 = vmax.xlane.f32.xlu0 %v1323
      %v1325 = vpop.xlane.xlu0 %1324
      %v1326 = vsel %vm1298, %v1185, -inf
      %1327 = vmax.xlane.f32.xlu0 %v1326
      %v1328 = vpop.xlane.xlu0 %1327
      %v1329 = vsel %vm1298, %v1190, -inf
      %1330 = vmax.xlane.f32.xlu0 %v1329
      %v1331 = vpop.xlane.xlu0 %1330
      %v1332 = vsel %vm1298, %v1195, -inf
      %1333 = vmax.xlane.f32.xlu0 %v1332
      %v1334 = vpop.xlane.xlu0 %1333
      %v1335 = vsel %vm1298, %v1200, -inf
      %1336 = vmax.xlane.f32.xlu0 %v1335
      %v1337 = vpop.xlane.xlu0 %1336
      %v1338 = vsel %vm1298, %v1205, -inf
      %1339 = vmax.xlane.f32.xlu0 %v1338
      %v1340 = vpop.xlane.xlu0 %1339
      %v1341 = vsel %vm1298, %v1210, -inf
      %1342 = vmax.xlane.f32.xlu0 %v1341
      %v1343 = vpop.xlane.xlu0 %1342
      %v1344 = vsel %vm1298, %v1215, -inf
      %1345 = vmax.xlane.f32.xlu0 %v1344
      %v1346 = vpop.xlane.xlu0 %1345
      %v1347 = vsel %vm1298, %v1220, -inf
      %1348 = vmax.xlane.f32.xlu0 %v1347
      %v1349 = vpop.xlane.xlu0 %1348
      %v1350 = vsel %vm1298, %v1225, -inf
      %1351 = vmax.xlane.f32.xlu0 %v1350
      %v1352 = vpop.xlane.xlu0 %1351
      %v1353 = vsel %vm1298, %v1230, -inf
      %1354 = vmax.xlane.f32.xlu0 %v1353
      %v1355 = vpop.xlane.xlu0 %1354
      %v1356 = vsel %vm1298, %v1235, -inf
      %1357 = vmax.xlane.f32.xlu0 %v1356
      %v1358 = vpop.xlane.xlu0 %1357
      %v1359 = vsel %vm1298, %v1240, -inf
      %1360 = vmax.xlane.f32.xlu0 %v1359
      %v1361 = vpop.xlane.xlu0 %1360
      %v1362 = vsel %vm1298, %v1245, -inf
      %1363 = vmax.xlane.f32.xlu0 %v1362
      %v1364 = vpop.xlane.xlu0 %1363
      %v1365 = vsel %vm1298, %v1250, -inf
      %1366 = vmax.xlane.f32.xlu0 %v1365
      %v1367 = vpop.xlane.xlu0 %1366
      %v1368 = vsel %vm1298, %v1255, -inf
      %1369 = vmax.xlane.f32.xlu0 %v1368
      %v1370 = vpop.xlane.xlu0 %1369
      %v1371 = vsel %vm1298, %v1260, -inf
      %1372 = vmax.xlane.f32.xlu0 %v1371
      %v1373 = vpop.xlane.xlu0 %1372
      %v1374 = vsel %vm1298, %v1265, -inf
      %1375 = vmax.xlane.f32.xlu0 %v1374
      %v1376 = vpop.xlane.xlu0 %1375
      %v1377 = vsel %vm1298, %v1270, -inf
      %1378 = vmax.xlane.f32.xlu0 %v1377
      %v1379 = vpop.xlane.xlu0 %1378
      %v1380 = vsel %vm1298, %v1275, -inf
      %1381 = vmax.xlane.f32.xlu0 %v1380
      %v1382 = vpop.xlane.xlu0 %1381
      %v1383 = vsel %vm1298, %v1280, -inf
      %1384 = vmax.xlane.f32.xlu0 %v1383
      %v1385 = vpop.xlane.xlu0 %1384
      %v1386 = vsel %vm1298, %v1285, -inf
      %1387 = vmax.xlane.f32.xlu0 %v1386
      %v1388 = vpop.xlane.xlu0 %1387
      %v1389 = vsel %vm1298, %v1290, -inf
      %1390 = vmax.xlane.f32.xlu0 %v1389
      %v1391 = vpop.xlane.xlu0 %1390
      %v1392 = vsel %vm1298, %v1295, -inf
      %1393 = vmax.xlane.f32.xlu0 %v1392
      %v1394 = vpop.xlane.xlu0 %1393
      %v1395 = vsub.f32 %v1140, %v1301
      %v1396 = vsub.f32 %v1145, %v1304
      %v1397 = vsub.f32 %v1150, %v1307
      %v1398 = vsub.f32 %v1155, %v1310
      %v1399 = vsub.f32 %v1160, %v1313
      %v1400 = vsub.f32 %v1165, %v1316
      %v1401 = vsub.f32 %v1170, %v1319
      %v1402 = vsub.f32 %v1175, %v1322
      %v1403 = vsub.f32 %v1180, %v1325
      %v1404 = vsub.f32 %v1185, %v1328
      %v1405 = vsub.f32 %v1190, %v1331
      %v1406 = vsub.f32 %v1195, %v1334
      %v1407 = vsub.f32 %v1200, %v1337
      %v1408 = vsub.f32 %v1205, %v1340
      %v1409 = vsub.f32 %v1210, %v1343
      %v1410 = vsub.f32 %v1215, %v1346
      %v1411 = vsub.f32 %v1220, %v1349
      %v1412 = vsub.f32 %v1225, %v1352
      %v1413 = vsub.f32 %v1230, %v1355
      %v1414 = vsub.f32 %v1235, %v1358
      %v1415 = vsub.f32 %v1240, %v1361
      %v1416 = vsub.f32 %v1245, %v1364
      %v1417 = vsub.f32 %v1250, %v1367
      %v1418 = vsub.f32 %v1255, %v1370
      %v1419 = vsub.f32 %v1260, %v1373
      %v1420 = vsub.f32 %v1265, %v1376
      %v1421 = vsub.f32 %v1270, %v1379
      %v1422 = vsub.f32 %v1275, %v1382
      %v1423 = vsub.f32 %v1280, %v1385
      %v1424 = vsub.f32 %v1285, %v1388
      %v1425 = vsub.f32 %v1290, %v1391
      %v1426 = vsub.f32 %v1295, %v1394
      %v1427 = vmul.f32 %v1395, 1.442695
      %v1428 = vpow.pop %v1427
      %v1429 = vmul.f32 %v1396, 1.442695
      %v1430 = vpow.pop %v1429
      %v1431 = vmul.f32 %v1397, 1.442695
      %v1432 = vpow.pop %v1431
      %v1433 = vmul.f32 %v1398, 1.442695
      %v1434 = vpow.pop %v1433
      %v1435 = vmul.f32 %v1399, 1.442695
      %v1436 = vpow.pop %v1435
      %v1437 = vmul.f32 %v1400, 1.442695
      %v1438 = vpow.pop %v1437
      %v1439 = vmul.f32 %v1401, 1.442695
      %v1440 = vpow.pop %v1439
      %v1441 = vmul.f32 %v1402, 1.442695
      %v1442 = vpow.pop %v1441
      %v1443 = vmul.f32 %v1403, 1.442695
      %v1444 = vpow.pop %v1443
      %v1445 = vmul.f32 %v1404, 1.442695
      %v1446 = vpow.pop %v1445
      %v1447 = vmul.f32 %v1405, 1.442695
      %v1448 = vpow.pop %v1447
      %v1449 = vmul.f32 %v1406, 1.442695
      %v1450 = vpow.pop %v1449
      %v1451 = vmul.f32 %v1407, 1.442695
      %v1452 = vpow.pop %v1451
      %v1453 = vmul.f32 %v1408, 1.442695
      %v1454 = vpow.pop %v1453
      %v1455 = vmul.f32 %v1409, 1.442695
      %v1456 = vpow.pop %v1455
      %v1457 = vmul.f32 %v1410, 1.442695
      %v1458 = vpow.pop %v1457
      %v1459 = vmul.f32 %v1411, 1.442695
      %v1460 = vpow.pop %v1459
      %v1461 = vmul.f32 %v1412, 1.442695
      %v1462 = vpow.pop %v1461
      %v1463 = vmul.f32 %v1413, 1.442695
      %v1464 = vpow.pop %v1463
      %v1465 = vmul.f32 %v1414, 1.442695
      %v1466 = vpow.pop %v1465
      %v1467 = vmul.f32 %v1415, 1.442695
      %v1468 = vpow.pop %v1467
      %v1469 = vmul.f32 %v1416, 1.442695
      %v1470 = vpow.pop %v1469
      %v1471 = vmul.f32 %v1417, 1.442695
      %v1472 = vpow.pop %v1471
      %v1473 = vmul.f32 %v1418, 1.442695
      %v1474 = vpow.pop %v1473
      %v1475 = vmul.f32 %v1419, 1.442695
      %v1476 = vpow.pop %v1475
      %v1477 = vmul.f32 %v1420, 1.442695
      %v1478 = vpow.pop %v1477
      %v1479 = vmul.f32 %v1421, 1.442695
      %v1480 = vpow.pop %v1479
      %v1481 = vmul.f32 %v1422, 1.442695
      %v1482 = vpow.pop %v1481
      %v1483 = vmul.f32 %v1423, 1.442695
      %v1484 = vpow.pop %v1483
      %v1485 = vmul.f32 %v1424, 1.442695
      %v1486 = vpow.pop %v1485
      %v1487 = vmul.f32 %v1425, 1.442695
      %v1488 = vpow.pop %v1487
      %v1489 = vmul.f32 %v1426, 1.442695
      %v1490 = vpow.pop %v1489
      %v1491 = vsel %vm1298, %v1428, 0.0
      %1492 = vadd.xlane.f32.xlu0 %v1491
      %v1493 = vpop.xlane.xlu0 %1492
      %v1494 = vsel %vm1298, %v1430, 0.0
      %1495 = vadd.xlane.f32.xlu0 %v1494
      %v1496 = vpop.xlane.xlu0 %1495
      %v1497 = vsel %vm1298, %v1432, 0.0
      %1498 = vadd.xlane.f32.xlu0 %v1497
      %v1499 = vpop.xlane.xlu0 %1498
      %v1500 = vsel %vm1298, %v1434, 0.0
      %1501 = vadd.xlane.f32.xlu0 %v1500
      %v1502 = vpop.xlane.xlu0 %1501
      %v1503 = vsel %vm1298, %v1436, 0.0
      %1504 = vadd.xlane.f32.xlu0 %v1503
      %v1505 = vpop.xlane.xlu0 %1504
      %v1506 = vsel %vm1298, %v1438, 0.0
      %1507 = vadd.xlane.f32.xlu0 %v1506
      %v1508 = vpop.xlane.xlu0 %1507
      %v1509 = vsel %vm1298, %v1440, 0.0
      %1510 = vadd.xlane.f32.xlu0 %v1509
      %v1511 = vpop.xlane.xlu0 %1510
      %v1512 = vsel %vm1298, %v1442, 0.0
      %1513 = vadd.xlane.f32.xlu0 %v1512
      %v1514 = vpop.xlane.xlu0 %1513
      %v1515 = vsel %vm1298, %v1444, 0.0
      %1516 = vadd.xlane.f32.xlu0 %v1515
      %v1517 = vpop.xlane.xlu0 %1516
      %v1518 = vsel %vm1298, %v1446, 0.0
      %1519 = vadd.xlane.f32.xlu0 %v1518
      %v1520 = vpop.xlane.xlu0 %1519
      %v1521 = vsel %vm1298, %v1448, 0.0
      %1522 = vadd.xlane.f32.xlu0 %v1521
      %v1523 = vpop.xlane.xlu0 %1522
      %v1524 = vsel %vm1298, %v1450, 0.0
      %1525 = vadd.xlane.f32.xlu0 %v1524
      %v1526 = vpop.xlane.xlu0 %1525
      %v1527 = vsel %vm1298, %v1452, 0.0
      %1528 = vadd.xlane.f32.xlu0 %v1527
      %v1529 = vpop.xlane.xlu0 %1528
      %v1530 = vsel %vm1298, %v1454, 0.0
      %1531 = vadd.xlane.f32.xlu0 %v1530
      %v1532 = vpop.xlane.xlu0 %1531
      %v1533 = vsel %vm1298, %v1456, 0.0
      %1534 = vadd.xlane.f32.xlu0 %v1533
      %v1535 = vpop.xlane.xlu0 %1534
      %v1536 = vsel %vm1298, %v1458, 0.0
      %1537 = vadd.xlane.f32.xlu0 %v1536
      %v1538 = vpop.xlane.xlu0 %1537
      %v1539 = vsel %vm1298, %v1460, 0.0
      %1540 = vadd.xlane.f32.xlu0 %v1539
      %v1541 = vpop.xlane.xlu0 %1540
      %v1542 = vsel %vm1298, %v1462, 0.0
      %1543 = vadd.xlane.f32.xlu0 %v1542
      %v1544 = vpop.xlane.xlu0 %1543
      %v1545 = vsel %vm1298, %v1464, 0.0
      %1546 = vadd.xlane.f32.xlu0 %v1545
      %v1547 = vpop.xlane.xlu0 %1546
      %v1548 = vsel %vm1298, %v1466, 0.0
      %1549 = vadd.xlane.f32.xlu0 %v1548
      %v1550 = vpop.xlane.xlu0 %1549
      %v1551 = vsel %vm1298, %v1468, 0.0
      %1552 = vadd.xlane.f32.xlu0 %v1551
      %v1553 = vpop.xlane.xlu0 %1552
      %v1554 = vsel %vm1298, %v1470, 0.0
      %1555 = vadd.xlane.f32.xlu0 %v1554
      %v1556 = vpop.xlane.xlu0 %1555
      %v1557 = vsel %vm1298, %v1472, 0.0
      %1558 = vadd.xlane.f32.xlu0 %v1557
      %v1559 = vpop.xlane.xlu0 %1558
      %v1560 = vsel %vm1298, %v1474, 0.0
      %1561 = vadd.xlane.f32.xlu0 %v1560
      %v1562 = vpop.xlane.xlu0 %1561
      %v1563 = vsel %vm1298, %v1476, 0.0
      %1564 = vadd.xlane.f32.xlu0 %v1563
      %v1565 = vpop.xlane.xlu0 %1564
      %v1566 = vsel %vm1298, %v1478, 0.0
      %1567 = vadd.xlane.f32.xlu0 %v1566
      %v1568 = vpop.xlane.xlu0 %1567
      %v1569 = vsel %vm1298, %v1480, 0.0
      %1570 = vadd.xlane.f32.xlu0 %v1569
      %v1571 = vpop.xlane.xlu0 %1570
      %v1572 = vsel %vm1298, %v1482, 0.0
      %1573 = vadd.xlane.f32.xlu0 %v1572
      %v1574 = vpop.xlane.xlu0 %1573
      %v1575 = vsel %vm1298, %v1484, 0.0
      %1576 = vadd.xlane.f32.xlu0 %v1575
      %v1577 = vpop.xlane.xlu0 %1576
      %v1578 = vsel %vm1298, %v1486, 0.0
      %1579 = vadd.xlane.f32.xlu0 %v1578
      %v1580 = vpop.xlane.xlu0 %1579
      %v1581 = vsel %vm1298, %v1488, 0.0
      %1582 = vadd.xlane.f32.xlu0 %v1581
      %v1583 = vpop.xlane.xlu0 %1582
      %v1584 = vsel %vm1298, %v1490, 0.0
      %1585 = vadd.xlane.f32.xlu0 %v1584
      %v1586 = vpop.xlane.xlu0 %1585
      %v1587 = vrcp.pop %v1493
      %v1588 = vrcp.pop %v1496
      %v1589 = vrcp.pop %v1499
      %v1590 = vrcp.pop %v1502
      %v1591 = vrcp.pop %v1505
      %v1592 = vrcp.pop %v1508
      %v1593 = vrcp.pop %v1511
      %v1594 = vrcp.pop %v1514
      %v1595 = vrcp.pop %v1517
      %v1596 = vrcp.pop %v1520
      %v1597 = vrcp.pop %v1523
      %v1598 = vrcp.pop %v1526
      %v1599 = vrcp.pop %v1529
      %v1600 = vrcp.pop %v1532
      %v1601 = vrcp.pop %v1535
      %v1602 = vrcp.pop %v1538
      %v1603 = vrcp.pop %v1541
      %v1604 = vrcp.pop %v1544
      %v1605 = vrcp.pop %v1547
      %v1606 = vrcp.pop %v1550
      %v1607 = vrcp.pop %v1553
      %v1608 = vrcp.pop %v1556
      %v1609 = vrcp.pop %v1559
      %v1610 = vrcp.pop %v1562
      %v1611 = vrcp.pop %v1565
      %v1612 = vrcp.pop %v1568
      %v1613 = vrcp.pop %v1571
      %v1614 = vrcp.pop %v1574
      %v1615 = vrcp.pop %v1577
      %v1616 = vrcp.pop %v1580
      %v1617 = vrcp.pop %v1583
      %v1618 = vrcp.pop %v1586
      %v1619 = vmul.f32 %v1428, %v1587
      %v1620 = vmul.f32 %v1430, %v1588
      %v1621 = vmul.f32 %v1432, %v1589
      %v1622 = vmul.f32 %v1434, %v1590
      %v1623 = vmul.f32 %v1436, %v1591
      %v1624 = vmul.f32 %v1438, %v1592
      %v1625 = vmul.f32 %v1440, %v1593
      %v1626 = vmul.f32 %v1442, %v1594
      %v1627 = vmul.f32 %v1444, %v1595
      %v1628 = vmul.f32 %v1446, %v1596
      %v1629 = vmul.f32 %v1448, %v1597
      %v1630 = vmul.f32 %v1450, %v1598
      %v1631 = vmul.f32 %v1452, %v1599
      %v1632 = vmul.f32 %v1454, %v1600
      %v1633 = vmul.f32 %v1456, %v1601
      %v1634 = vmul.f32 %v1458, %v1602
      %v1635 = vmul.f32 %v1460, %v1603
      %v1636 = vmul.f32 %v1462, %v1604
      %v1637 = vmul.f32 %v1464, %v1605
      %v1638 = vmul.f32 %v1466, %v1606
      %v1639 = vmul.f32 %v1468, %v1607
      %v1640 = vmul.f32 %v1470, %v1608
      %v1641 = vmul.f32 %v1472, %v1609
      %v1642 = vmul.f32 %v1474, %v1610
      %v1643 = vmul.f32 %v1476, %v1611
      %v1644 = vmul.f32 %v1478, %v1612
      %v1645 = vmul.f32 %v1480, %v1613
      %v1646 = vmul.f32 %v1482, %v1614
      %v1647 = vmul.f32 %v1484, %v1615
      %v1648 = vmul.f32 %v1486, %v1616
      %v1649 = vmul.f32 %v1488, %v1617
      %v1650 = vmul.f32 %v1490, %v1618
      %1651 = vrot.lane.b32.xlu0 %v815, 96
      %v1652 = vpop.permute.xlu0 %1651
      %1653 = vrot.lane.b32.xlu0 %v820, 96
      %v1654 = vpop.permute.xlu0 %1653
      %1655 = vrot.lane.b32.xlu0 %v825, 96
      %v1656 = vpop.permute.xlu0 %1655
      %1657 = vrot.lane.b32.xlu0 %v830, 96
      %v1658 = vpop.permute.xlu0 %1657
      %1659 = vrot.lane.b32.xlu0 %v835, 96
      %v1660 = vpop.permute.xlu0 %1659
      %1661 = vrot.lane.b32.xlu0 %v840, 96
      %v1662 = vpop.permute.xlu0 %1661
      %1663 = vrot.lane.b32.xlu0 %v845, 96
      %v1664 = vpop.permute.xlu0 %1663
      %1665 = vrot.lane.b32.xlu0 %v850, 96
      %v1666 = vpop.permute.xlu0 %1665
      %v1676 = vsel %vm1298, %v1619, 0
      %v1679 = vsel %vm1298, %v1620, 0
      %v1682 = vsel %vm1298, %v1621, 0
      %v1685 = vsel %vm1298, %v1622, 0
      %v1688 = vsel %vm1298, %v1623, 0
      %v1691 = vsel %vm1298, %v1624, 0
      %v1694 = vsel %vm1298, %v1625, 0
      %v1697 = vsel %vm1298, %v1626, 0
      %v1700 = vsel %vm1298, %v1627, 0
      %v1703 = vsel %vm1298, %v1628, 0
      %v1706 = vsel %vm1298, %v1629, 0
      %v1709 = vsel %vm1298, %v1630, 0
      %v1712 = vsel %vm1298, %v1631, 0
      %v1715 = vsel %vm1298, %v1632, 0
      %v1718 = vsel %vm1298, %v1633, 0
      %v1721 = vsel %vm1298, %v1634, 0
      %v1724 = vsel %vm1298, %v1635, 0
      %v1727 = vsel %vm1298, %v1636, 0
      %v1730 = vsel %vm1298, %v1637, 0
      %v1733 = vsel %vm1298, %v1638, 0
      %v1736 = vsel %vm1298, %v1639, 0
      %v1739 = vsel %vm1298, %v1640, 0
      %v1742 = vsel %vm1298, %v1641, 0
      %v1745 = vsel %vm1298, %v1642, 0
      %v1748 = vsel %vm1298, %v1643, 0
      %v1751 = vsel %vm1298, %v1644, 0
      %v1754 = vsel %vm1298, %v1645, 0
      %v1757 = vsel %vm1298, %v1646, 0
      %v1760 = vsel %vm1298, %v1647, 0
      %v1763 = vsel %vm1298, %v1648, 0
      %v1766 = vsel %vm1298, %v1649, 0
      %v1769 = vsel %vm1298, %v1650, 0
      %1771 = vmatprep.subr.mxu0 0.0
      %1772 = vmatpush1.msra.mxu0 0.0
      %1773 = vmatprep.subr.mxu0 0.0
      %1774 = vmatpush1.msra.mxu0 0.0
      %1775 = vmatprep.subr.mxu0 0.0
      %1776 = vmatpush1.msra.mxu0 0.0
      %1777 = vmatprep.subr.mxu0 0.0
      %1778 = vmatpush1.msra.mxu0 0.0
      %1779 = vmatprep.subr.mxu0 0.0
      %1780 = vmatpush1.msra.mxu0 0.0
      %1781 = vmatprep.subr.mxu0 0.0
      %1782 = vmatpush1.msra.mxu0 0.0
      %1783 = vmatprep.subr.mxu0 0.0
      %1784 = vmatpush1.msra.mxu0 0.0
      %1785 = vmatprep.subr.mxu0 0.0
      %1786 = vmatpush1.msra.mxu0 0.0
      %1787 = vmatprep.subr.mxu0 0.0
      %1788 = vmatpush1.msra.mxu0 %v1666
      %1789 = vmatprep.subr.mxu0 0.0
      %1790 = vmatpush1.msra.mxu0 %v1664
      %1791 = vmatprep.subr.mxu0 0.0
      %1792 = vmatpush1.msra.mxu0 %v1662
      %1793 = vmatprep.subr.mxu0 0.0
      %1794 = vmatpush1.msra.mxu0 %v1660
      %1795 = vmatprep.subr.mxu0 0.0
      %1796 = vmatpush1.msra.mxu0 %v1658
      %1797 = vmatprep.subr.mxu0 0.0
      %1798 = vmatpush1.msra.mxu0 %v1656
      %1799 = vmatprep.subr.mxu0 0.0
      %1800 = vmatpush1.msra.mxu0 %v1654
      %1801 = vmatprep.subr.mxu0 0.0
      %1802 = vmatpush1.msra.mxu0 %v1652
      %1803 = vmatprep.subr.mxu0 0.0
      %1804 = vmatpush2.msra.mxu0 0.0
      %1805 = vmatprep.subr.mxu0 0.0
      %1806 = vmatpush2.msra.mxu0 0.0
      %1807 = vmatprep.subr.mxu0 0.0
      %1808 = vmatpush2.msra.mxu0 0.0
      %1809 = vmatprep.subr.mxu0 0.0
      %1810 = vmatpush2.msra.mxu0 0.0
      %1811 = vmatprep.subr.mxu0 0.0
      %1812 = vmatpush2.msra.mxu0 0.0
      %1813 = vmatprep.subr.mxu0 0.0
      %1814 = vmatpush2.msra.mxu0 0.0
      %1815 = vmatprep.subr.mxu0 0.0
      %1816 = vmatpush2.msra.mxu0 0.0
      %1817 = vmatprep.subr.mxu0 0.0
      %1818 = vmatpush2.msra.mxu0 0.0
      %1819 = vmatprep.subr.mxu0 0.0
      %1820 = vmatpush2.msra.mxu0 0.0
      %1821 = vmatprep.subr.mxu0 0.0
      %1822 = vmatpush2.msra.mxu0 0.0
      %1823 = vmatprep.subr.mxu0 0.0
      %1824 = vmatpush2.msra.mxu0 0.0
      %1825 = vmatprep.subr.mxu0 0.0
      %1826 = vmatpush2.msra.mxu0 0.0
      %1827 = vmatprep.subr.mxu0 0.0
      %1828 = vmatpush2.msra.mxu0 0.0
      %1829 = vmatprep.subr.mxu0 0.0
      %1830 = vmatpush2.msra.mxu0 0.0
      %1831 = vmatprep.subr.mxu0 0.0
      %1832 = vmatpush2.msra.mxu0 0.0
      %1833 = vmatprep.subr.mxu0 0.0
      %1834 = vmatpush2.msra.mxu0 0.0
      %1835 = vmatprep.mubr.f32.mxu0 0.0
      %1836 = vmatmul.mubr.f32.gmra.mxu0 %v1676
      %v1837 = vpop.f32.mrf.mxu0
      %v1838 = vadd.f32 0.0, %v1837
      %v1839 = vpop.f32.mrf.mxu0
      %1840 = vmatprep.mubr.f32.mxu0 0.0
      %1841 = vmatmul.mubr.f32.gmra.mxu0 %v1679
      %v1842 = vpop.f32.mrf.mxu0
      %v1843 = vadd.f32 0.0, %v1842
      %v1844 = vpop.f32.mrf.mxu0
      %1845 = vmatprep.mubr.f32.mxu0 0.0
      %1846 = vmatmul.mubr.f32.gmra.mxu0 %v1682
      %v1847 = vpop.f32.mrf.mxu0
      %v1848 = vadd.f32 0.0, %v1847
      %v1849 = vpop.f32.mrf.mxu0
      %1850 = vmatprep.mubr.f32.mxu0 0.0
      %1851 = vmatmul.mubr.f32.gmra.mxu0 %v1685
      %v1852 = vpop.f32.mrf.mxu0
      %v1853 = vadd.f32 0.0, %v1852
      %v1854 = vpop.f32.mrf.mxu0
      %1855 = vmatprep.mubr.f32.mxu0 0.0
      %1856 = vmatmul.mubr.f32.gmra.mxu0 %v1688
      %v1857 = vpop.f32.mrf.mxu0
      %v1858 = vadd.f32 0.0, %v1857
      %v1859 = vpop.f32.mrf.mxu0
      %1860 = vmatprep.mubr.f32.mxu0 0.0
      %1861 = vmatmul.mubr.f32.gmra.mxu0 %v1691
      %v1862 = vpop.f32.mrf.mxu0
      %v1863 = vadd.f32 0.0, %v1862
      %v1864 = vpop.f32.mrf.mxu0
      %1865 = vmatprep.mubr.f32.mxu0 0.0
      %1866 = vmatmul.mubr.f32.gmra.mxu0 %v1694
      %v1867 = vpop.f32.mrf.mxu0
      %v1868 = vadd.f32 0.0, %v1867
      %v1869 = vpop.f32.mrf.mxu0
      %1870 = vmatprep.mubr.f32.mxu0 0.0
      %1871 = vmatmul.mubr.f32.gmra.mxu0 %v1697
      %v1872 = vpop.f32.mrf.mxu0
      %v1873 = vadd.f32 0.0, %v1872
      %v1874 = vpop.f32.mrf.mxu0
      %1875 = vmatprep.mubr.f32.mxu0 0.0
      %1876 = vmatmul.mubr.f32.gmra.mxu0 %v1700
      %v1877 = vpop.f32.mrf.mxu0
      %v1878 = vadd.f32 0.0, %v1877
      %v1879 = vpop.f32.mrf.mxu0
      %1880 = vmatprep.mubr.f32.mxu0 0.0
      %1881 = vmatmul.mubr.f32.gmra.mxu0 %v1703
      %v1882 = vpop.f32.mrf.mxu0
      %v1883 = vadd.f32 0.0, %v1882
      %v1884 = vpop.f32.mrf.mxu0
      %1885 = vmatprep.mubr.f32.mxu0 0.0
      %1886 = vmatmul.mubr.f32.gmra.mxu0 %v1706
      %v1887 = vpop.f32.mrf.mxu0
      %v1888 = vadd.f32 0.0, %v1887
      %v1889 = vpop.f32.mrf.mxu0
      %1890 = vmatprep.mubr.f32.mxu0 0.0
      %1891 = vmatmul.mubr.f32.gmra.mxu0 %v1709
      %v1892 = vpop.f32.mrf.mxu0
      %v1893 = vadd.f32 0.0, %v1892
      %v1894 = vpop.f32.mrf.mxu0
      %1895 = vmatprep.mubr.f32.mxu0 0.0
      %1896 = vmatmul.mubr.f32.gmra.mxu0 %v1712
      %v1897 = vpop.f32.mrf.mxu0
      %v1898 = vadd.f32 0.0, %v1897
      %v1899 = vpop.f32.mrf.mxu0
      %1900 = vmatprep.mubr.f32.mxu0 0.0
      %1901 = vmatmul.mubr.f32.gmra.mxu0 %v1715
      %v1902 = vpop.f32.mrf.mxu0
      %v1903 = vadd.f32 0.0, %v1902
      %v1904 = vpop.f32.mrf.mxu0
      %1905 = vmatprep.mubr.f32.mxu0 0.0
      %1906 = vmatmul.mubr.f32.gmra.mxu0 %v1718
      %v1907 = vpop.f32.mrf.mxu0
      %v1908 = vadd.f32 0.0, %v1907
      %v1909 = vpop.f32.mrf.mxu0
      %1910 = vmatprep.mubr.f32.mxu0 0.0
      %1911 = vmatmul.mubr.f32.gmra.mxu0 %v1721
      %v1912 = vpop.f32.mrf.mxu0
      %v1913 = vadd.f32 0.0, %v1912
      %v1914 = vpop.f32.mrf.mxu0
      %1915 = vmatprep.mubr.f32.mxu0 0.0
      %1916 = vmatmul.mubr.f32.gmra.mxu0 %v1724
      %v1917 = vpop.f32.mrf.mxu0
      %v1918 = vadd.f32 0.0, %v1917
      %v1919 = vpop.f32.mrf.mxu0
      %1920 = vmatprep.mubr.f32.mxu0 0.0
      %1921 = vmatmul.mubr.f32.gmra.mxu0 %v1727
      %v1922 = vpop.f32.mrf.mxu0
      %v1923 = vadd.f32 0.0, %v1922
      %v1924 = vpop.f32.mrf.mxu0
      %1925 = vmatprep.mubr.f32.mxu0 0.0
      %1926 = vmatmul.mubr.f32.gmra.mxu0 %v1730
      %v1927 = vpop.f32.mrf.mxu0
      %v1928 = vadd.f32 0.0, %v1927
      %v1929 = vpop.f32.mrf.mxu0
      %1930 = vmatprep.mubr.f32.mxu0 0.0
      %1931 = vmatmul.mubr.f32.gmra.mxu0 %v1733
      %v1932 = vpop.f32.mrf.mxu0
      %v1933 = vadd.f32 0.0, %v1932
      %v1934 = vpop.f32.mrf.mxu0
      %1935 = vmatprep.mubr.f32.mxu0 0.0
      %1936 = vmatmul.mubr.f32.gmra.mxu0 %v1736
      %v1937 = vpop.f32.mrf.mxu0
      %v1938 = vadd.f32 0.0, %v1937
      %v1939 = vpop.f32.mrf.mxu0
      %1940 = vmatprep.mubr.f32.mxu0 0.0
      %1941 = vmatmul.mubr.f32.gmra.mxu0 %v1739
      %v1942 = vpop.f32.mrf.mxu0
      %v1943 = vadd.f32 0.0, %v1942
      %v1944 = vpop.f32.mrf.mxu0
      %1945 = vmatprep.mubr.f32.mxu0 0.0
      %1946 = vmatmul.mubr.f32.gmra.mxu0 %v1742
      %v1947 = vpop.f32.mrf.mxu0
      %v1948 = vadd.f32 0.0, %v1947
      %v1949 = vpop.f32.mrf.mxu0
      %1950 = vmatprep.mubr.f32.mxu0 0.0
      %1951 = vmatmul.mubr.f32.gmra.mxu0 %v1745
      %v1952 = vpop.f32.mrf.mxu0
      %v1953 = vadd.f32 0.0, %v1952
      %v1954 = vpop.f32.mrf.mxu0
      %1955 = vmatprep.mubr.f32.mxu0 0.0
      %1956 = vmatmul.mubr.f32.gmra.mxu0 %v1748
      %v1957 = vpop.f32.mrf.mxu0
      %v1958 = vadd.f32 0.0, %v1957
      %v1959 = vpop.f32.mrf.mxu0
      %1960 = vmatprep.mubr.f32.mxu0 0.0
      %1961 = vmatmul.mubr.f32.gmra.mxu0 %v1751
      %v1962 = vpop.f32.mrf.mxu0
      %v1963 = vadd.f32 0.0, %v1962
      %v1964 = vpop.f32.mrf.mxu0
      %1965 = vmatprep.mubr.f32.mxu0 0.0
      %1966 = vmatmul.mubr.f32.gmra.mxu0 %v1754
      %v1967 = vpop.f32.mrf.mxu0
      %v1968 = vadd.f32 0.0, %v1967
      %v1969 = vpop.f32.mrf.mxu0
      %1970 = vmatprep.mubr.f32.mxu0 0.0
      %1971 = vmatmul.mubr.f32.gmra.mxu0 %v1757
      %v1972 = vpop.f32.mrf.mxu0
      %v1973 = vadd.f32 0.0, %v1972
      %v1974 = vpop.f32.mrf.mxu0
      %1975 = vmatprep.mubr.f32.mxu0 0.0
      %1976 = vmatmul.mubr.f32.gmra.mxu0 %v1760
      %v1977 = vpop.f32.mrf.mxu0
      %v1978 = vadd.f32 0.0, %v1977
      %v1979 = vpop.f32.mrf.mxu0
      %1980 = vmatprep.mubr.f32.mxu0 0.0
      %1981 = vmatmul.mubr.f32.gmra.mxu0 %v1763
      %v1982 = vpop.f32.mrf.mxu0
      %v1983 = vadd.f32 0.0, %v1982
      %v1984 = vpop.f32.mrf.mxu0
      %1985 = vmatprep.mubr.f32.mxu0 0.0
      %1986 = vmatmul.mubr.f32.gmra.mxu0 %v1766
      %v1987 = vpop.f32.mrf.mxu0
      %v1988 = vadd.f32 0.0, %v1987
      %v1989 = vpop.f32.mrf.mxu0
      %1990 = vmatprep.mubr.f32.mxu0 0.0
      %1991 = vmatmul.mubr.f32.gmra.mxu0 %v1769
      %v1992 = vpop.f32.mrf.mxu0
      %v1993 = vadd.f32 0.0, %v1992
      %v1994 = vpop.f32.mrf.mxu0
      %1995 = vdwg.mxu0
      %v1996 = vmul.f32 %v1838, %v857
      %v1997 = vmul.f32 %v1843, %v857
      %v1998 = vmul.f32 %v1848, %v857
      %v1999 = vmul.f32 %v1853, %v857
      %v2000 = vmul.f32 %v1858, %v857
      %v2001 = vmul.f32 %v1863, %v857
      %v2002 = vmul.f32 %v1868, %v857
      %v2003 = vmul.f32 %v1873, %v857
      %v2004 = vmul.f32 %v1878, %v870
      %v2005 = vmul.f32 %v1883, %v870
      %v2006 = vmul.f32 %v1888, %v870
      %v2007 = vmul.f32 %v1893, %v870
      %v2008 = vmul.f32 %v1898, %v870
      %v2009 = vmul.f32 %v1903, %v870
      %v2010 = vmul.f32 %v1908, %v870
      %v2011 = vmul.f32 %v1913, %v870
      %v2012 = vadd.f32 %v1996, %v2004
      %v2013 = vadd.f32 %v1997, %v2005
      %v2014 = vadd.f32 %v1998, %v2006
      %v2015 = vadd.f32 %v1999, %v2007
      %v2016 = vadd.f32 %v2000, %v2008
      %v2017 = vadd.f32 %v2001, %v2009
      %v2018 = vadd.f32 %v2002, %v2010
      %v2019 = vadd.f32 %v2003, %v2011
      %v2020 = vmul.f32 %v1918, %v883
      %v2021 = vmul.f32 %v1923, %v883
      %v2022 = vmul.f32 %v1928, %v883
      %v2023 = vmul.f32 %v1933, %v883
      %v2024 = vmul.f32 %v1938, %v883
      %v2025 = vmul.f32 %v1943, %v883
      %v2026 = vmul.f32 %v1948, %v883
      %v2027 = vmul.f32 %v1953, %v883
      %v2028 = vadd.f32 %v2012, %v2020
      %v2029 = vadd.f32 %v2013, %v2021
      %v2030 = vadd.f32 %v2014, %v2022
      %v2031 = vadd.f32 %v2015, %v2023
      %v2032 = vadd.f32 %v2016, %v2024
      %v2033 = vadd.f32 %v2017, %v2025
      %v2034 = vadd.f32 %v2018, %v2026
      %v2035 = vadd.f32 %v2019, %v2027
      %v2036 = vmul.f32 %v1958, %v896
      %v2037 = vmul.f32 %v1963, %v896
      %v2038 = vmul.f32 %v1968, %v896
      %v2039 = vmul.f32 %v1973, %v896
      %v2040 = vmul.f32 %v1978, %v896
      %v2041 = vmul.f32 %v1983, %v896
      %v2042 = vmul.f32 %v1988, %v896
      %v2043 = vmul.f32 %v1993, %v896
      %v2044 = vadd.f32 %v2028, %v2036
      %v2045 = vadd.f32 %v2029, %v2037
      %v2046 = vadd.f32 %v2030, %v2038
      %v2047 = vadd.f32 %v2031, %v2039
      %v2048 = vadd.f32 %v2032, %v2040
      %v2049 = vadd.f32 %v2033, %v2041
      %v2050 = vadd.f32 %v2034, %v2042
      %v2051 = vadd.f32 %v2035, %v2043
      %v2052 = vld [vmem:[%s10] sm:$0xff]
      %v2053 = vld [vmem:[%s10 + $0x8] sm:$0xff]
      %v2054 = vld [vmem:[%s11] sm:$0x1]
      %v2056 = vlaneseq
      %v2057 = vshrl.u32 %v2056, 7
      %v2058 = vsub.s32 0, %v2057
      %v2059 = vrot.slane %v2054, %v2058
      %v2062 = vsel %vm579, %v2044, 0
      %v2065 = vsel %vm579, %v2045, 0
      %v2068 = vsel %vm579, %v2046, 0
      %v2071 = vsel %vm579, %v2047, 0
      %v2074 = vsel %vm579, %v2048, 0
      %v2077 = vsel %vm579, %v2049, 0
      %v2080 = vsel %vm579, %v2050, 0
      %v2083 = vsel %vm579, %v2051, 0
      %2085 = vmatprep.subr.mxu0 0.0
      %2086 = vmatpush1.msra.mxu0 0.0
      %2087 = vmatprep.subr.mxu0 0.0
      %2088 = vmatpush1.msra.mxu0 0.0
      %2089 = vmatprep.subr.mxu0 0.0
      %2090 = vmatpush1.msra.mxu0 0.0
      %2091 = vmatprep.subr.mxu0 0.0
      %2092 = vmatpush1.msra.mxu0 0.0
      %2093 = vmatprep.subr.mxu0 0.0
      %2094 = vmatpush1.msra.mxu0 0.0
      %2095 = vmatprep.subr.mxu0 0.0
      %2096 = vmatpush1.msra.mxu0 0.0
      %2097 = vmatprep.subr.mxu0 0.0
      %2098 = vmatpush1.msra.mxu0 0.0
      %2099 = vmatprep.subr.mxu0 0.0
      %2100 = vmatpush1.msra.mxu0 0.0
      %2101 = vmatprep.subr.mxu0 0.0
      %2102 = vmatpush1.msra.mxu0 0.0
      %2103 = vmatprep.subr.mxu0 0.0
      %2104 = vmatpush1.msra.mxu0 0.0
      %2105 = vmatprep.subr.mxu0 0.0
      %2106 = vmatpush1.msra.mxu0 0.0
      %2107 = vmatprep.subr.mxu0 0.0
      %2108 = vmatpush1.msra.mxu0 0.0
      %2109 = vmatprep.subr.mxu0 0.0
      %2110 = vmatpush1.msra.mxu0 0.0
      %2111 = vmatprep.subr.mxu0 0.0
      %2112 = vmatpush1.msra.mxu0 0.0
      %2113 = vmatprep.subr.mxu0 0.0
      %2114 = vmatpush1.msra.mxu0 %v2053
      %2115 = vmatprep.subr.mxu0 0.0
      %2116 = vmatpush1.msra.mxu0 %v2052
      %2117 = vmatprep.subr.mxu0 0.0
      %2118 = vmatpush2.msra.mxu0 0.0
      %2119 = vmatprep.subr.mxu0 0.0
      %2120 = vmatpush2.msra.mxu0 0.0
      %2121 = vmatprep.subr.mxu0 0.0
      %2122 = vmatpush2.msra.mxu0 0.0
      %2123 = vmatprep.subr.mxu0 0.0
      %2124 = vmatpush2.msra.mxu0 0.0
      %2125 = vmatprep.subr.mxu0 0.0
      %2126 = vmatpush2.msra.mxu0 0.0
      %2127 = vmatprep.subr.mxu0 0.0
      %2128 = vmatpush2.msra.mxu0 0.0
      %2129 = vmatprep.subr.mxu0 0.0
      %2130 = vmatpush2.msra.mxu0 0.0
      %2131 = vmatprep.subr.mxu0 0.0
      %2132 = vmatpush2.msra.mxu0 0.0
      %2133 = vmatprep.subr.mxu0 0.0
      %2134 = vmatpush2.msra.mxu0 0.0
      %2135 = vmatprep.subr.mxu0 0.0
      %2136 = vmatpush2.msra.mxu0 0.0
      %2137 = vmatprep.subr.mxu0 0.0
      %2138 = vmatpush2.msra.mxu0 0.0
      %2139 = vmatprep.subr.mxu0 0.0
      %2140 = vmatpush2.msra.mxu0 0.0
      %2141 = vmatprep.subr.mxu0 0.0
      %2142 = vmatpush2.msra.mxu0 0.0
      %2143 = vmatprep.subr.mxu0 0.0
      %2144 = vmatpush2.msra.mxu0 0.0
      %2145 = vmatprep.subr.mxu0 0.0
      %2146 = vmatpush2.msra.mxu0 0.0
      %2147 = vmatprep.subr.mxu0 0.0
      %2148 = vmatpush2.msra.mxu0 0.0
      %2149 = vmatprep.mubr.f32.mxu0 0.0
      %2150 = vmatmul.mubr.f32.gmra.mxu0 %v2062
      %v2151 = vpop.f32.mrf.mxu0
      %v2152 = vadd.f32 %v2059, %v2151
      %v2153 = vpop.f32.mrf.mxu0
      %2154 = vmatprep.mubr.f32.mxu0 0.0
      %2155 = vmatmul.mubr.f32.gmra.mxu0 %v2065
      %v2156 = vpop.f32.mrf.mxu0
      %v2157 = vadd.f32 %v2059, %v2156
      %v2158 = vpop.f32.mrf.mxu0
      %2159 = vmatprep.mubr.f32.mxu0 0.0
      %2160 = vmatmul.mubr.f32.gmra.mxu0 %v2068
      %v2161 = vpop.f32.mrf.mxu0
      %v2162 = vadd.f32 %v2059, %v2161
      %v2163 = vpop.f32.mrf.mxu0
      %2164 = vmatprep.mubr.f32.mxu0 0.0
      %2165 = vmatmul.mubr.f32.gmra.mxu0 %v2071
      %v2166 = vpop.f32.mrf.mxu0
      %v2167 = vadd.f32 %v2059, %v2166
      %v2168 = vpop.f32.mrf.mxu0
      %2169 = vmatprep.mubr.f32.mxu0 0.0
      %2170 = vmatmul.mubr.f32.gmra.mxu0 %v2074
      %v2171 = vpop.f32.mrf.mxu0
      %v2172 = vadd.f32 %v2059, %v2171
      %v2173 = vpop.f32.mrf.mxu0
      %2174 = vmatprep.mubr.f32.mxu0 0.0
      %2175 = vmatmul.mubr.f32.gmra.mxu0 %v2077
      %v2176 = vpop.f32.mrf.mxu0
      %v2177 = vadd.f32 %v2059, %v2176
      %v2178 = vpop.f32.mrf.mxu0
      %2179 = vmatprep.mubr.f32.mxu0 0.0
      %2180 = vmatmul.mubr.f32.gmra.mxu0 %v2080
      %v2181 = vpop.f32.mrf.mxu0
      %v2182 = vadd.f32 %v2059, %v2181
      %v2183 = vpop.f32.mrf.mxu0
      %2184 = vmatprep.mubr.f32.mxu0 0.0
      %2185 = vmatmul.mubr.f32.gmra.mxu0 %v2083
      %v2186 = vpop.f32.mrf.mxu0
      %v2187 = vadd.f32 %v2059, %v2186
      %v2188 = vpop.f32.mrf.mxu0
      %2189 = vdwg.mxu0
      %v2190 = vadd.f32 %v571, %v2152
      %v2191 = vadd.f32 %v572, %v2157
      %v2192 = vadd.f32 %v573, %v2162
      %v2193 = vadd.f32 %v574, %v2167
      %v2194 = vadd.f32 %v575, %v2172
      %v2195 = vadd.f32 %v576, %v2177
      %v2196 = vadd.f32 %v577, %v2182
      %v2197 = vadd.f32 %v578, %v2187
      %v2198 = vsel %vm579, %v2190, 0.0
      %2199 = vadd.xlane.f32.xlu0 %v2198
      %v2200 = vpop.xlane.xlu0 %2199
      %v2201 = vsel %vm579, %v2191, 0.0
      %2202 = vadd.xlane.f32.xlu0 %v2201
      %v2203 = vpop.xlane.xlu0 %2202
      %v2204 = vsel %vm579, %v2192, 0.0
      %2205 = vadd.xlane.f32.xlu0 %v2204
      %v2206 = vpop.xlane.xlu0 %2205
      %v2207 = vsel %vm579, %v2193, 0.0
      %2208 = vadd.xlane.f32.xlu0 %v2207
      %v2209 = vpop.xlane.xlu0 %2208
      %v2210 = vsel %vm579, %v2194, 0.0
      %2211 = vadd.xlane.f32.xlu0 %v2210
      %v2212 = vpop.xlane.xlu0 %2211
      %v2213 = vsel %vm579, %v2195, 0.0
      %2214 = vadd.xlane.f32.xlu0 %v2213
      %v2215 = vpop.xlane.xlu0 %2214
      %v2216 = vsel %vm579, %v2196, 0.0
      %2217 = vadd.xlane.f32.xlu0 %v2216
      %v2218 = vpop.xlane.xlu0 %2217
      %v2219 = vsel %vm579, %v2197, 0.0
      %2220 = vadd.xlane.f32.xlu0 %v2219
      %v2221 = vpop.xlane.xlu0 %2220
      %v2222 = vmul.f32 %v2200, %v604
      %v2223 = vmul.f32 %v2203, %v604
      %v2224 = vmul.f32 %v2206, %v604
      %v2225 = vmul.f32 %v2209, %v604
      %v2226 = vmul.f32 %v2212, %v604
      %v2227 = vmul.f32 %v2215, %v604
      %v2228 = vmul.f32 %v2218, %v604
      %v2229 = vmul.f32 %v2221, %v604
      %v2230 = vsub.f32 %v2190, %v2222
      %v2231 = vsub.f32 %v2191, %v2223
      %v2232 = vsub.f32 %v2192, %v2224
      %v2233 = vsub.f32 %v2193, %v2225
      %v2234 = vsub.f32 %v2194, %v2226
      %v2235 = vsub.f32 %v2195, %v2227
      %v2236 = vsub.f32 %v2196, %v2228
      %v2237 = vsub.f32 %v2197, %v2229
      %v2238 = vmul.f32 %v2230, %v2230
      %v2239 = vmul.f32 %v2231, %v2231
      %v2240 = vmul.f32 %v2232, %v2232
      %v2241 = vmul.f32 %v2233, %v2233
      %v2242 = vmul.f32 %v2234, %v2234
      %v2243 = vmul.f32 %v2235, %v2235
      %v2244 = vmul.f32 %v2236, %v2236
      %v2245 = vmul.f32 %v2237, %v2237
      %v2246 = vsel %vm579, %v2238, 0.0
      %2247 = vadd.xlane.f32.xlu0 %v2246
      %v2248 = vpop.xlane.xlu0 %2247
      %v2249 = vsel %vm579, %v2239, 0.0
      %2250 = vadd.xlane.f32.xlu0 %v2249
      %v2251 = vpop.xlane.xlu0 %2250
      %v2252 = vsel %vm579, %v2240, 0.0
      %2253 = vadd.xlane.f32.xlu0 %v2252
      %v2254 = vpop.xlane.xlu0 %2253
      %v2255 = vsel %vm579, %v2241, 0.0
      %2256 = vadd.xlane.f32.xlu0 %v2255
      %v2257 = vpop.xlane.xlu0 %2256
      %v2258 = vsel %vm579, %v2242, 0.0
      %2259 = vadd.xlane.f32.xlu0 %v2258
      %v2260 = vpop.xlane.xlu0 %2259
      %v2261 = vsel %vm579, %v2243, 0.0
      %2262 = vadd.xlane.f32.xlu0 %v2261
      %v2263 = vpop.xlane.xlu0 %2262
      %v2264 = vsel %vm579, %v2244, 0.0
      %2265 = vadd.xlane.f32.xlu0 %v2264
      %v2266 = vpop.xlane.xlu0 %2265
      %v2267 = vsel %vm579, %v2245, 0.0
      %2268 = vadd.xlane.f32.xlu0 %v2267
      %v2269 = vpop.xlane.xlu0 %2268
      %v2270 = vmul.f32 %v2248, %v604
      %v2271 = vmul.f32 %v2251, %v604
      %v2272 = vmul.f32 %v2254, %v604
      %v2273 = vmul.f32 %v2257, %v604
      %v2274 = vmul.f32 %v2260, %v604
      %v2275 = vmul.f32 %v2263, %v604
      %v2276 = vmul.f32 %v2266, %v604
      %v2277 = vmul.f32 %v2269, %v604
      %v2278 = vadd.f32 %v2270, 1e-05
      %v2279 = vadd.f32 %v2271, 1e-05
      %v2280 = vadd.f32 %v2272, 1e-05
      %v2281 = vadd.f32 %v2273, 1e-05
      %v2282 = vadd.f32 %v2274, 1e-05
      %v2283 = vadd.f32 %v2275, 1e-05
      %v2284 = vadd.f32 %v2276, 1e-05
      %v2285 = vadd.f32 %v2277, 1e-05
      %v2286 = vrsqrt.pop %v2278
      %v2287 = vrsqrt.pop %v2279
      %v2288 = vrsqrt.pop %v2280
      %v2289 = vrsqrt.pop %v2281
      %v2290 = vrsqrt.pop %v2282
      %v2291 = vrsqrt.pop %v2283
      %v2292 = vrsqrt.pop %v2284
      %v2293 = vrsqrt.pop %v2285
      %v2294 = vmul.f32 %v2230, %v2286
      %v2295 = vmul.f32 %v2231, %v2287
      %v2296 = vmul.f32 %v2232, %v2288
      %v2297 = vmul.f32 %v2233, %v2289
      %v2298 = vmul.f32 %v2234, %v2290
      %v2299 = vmul.f32 %v2235, %v2291
      %v2300 = vmul.f32 %v2236, %v2292
      %v2301 = vmul.f32 %v2237, %v2293
      %v2302 = vld [vmem:[%s6] sm:$0x1]
      %v2304 = vlaneseq
      %v2305 = vshrl.u32 %v2304, 7
      %v2306 = vsub.s32 0, %v2305
      %v2307 = vrot.slane %v2302, %v2306
      %v2309 = vmul.f32 %v2294, %v2307
      %v2310 = vmul.f32 %v2295, %v2307
      %v2311 = vmul.f32 %v2296, %v2307
      %v2312 = vmul.f32 %v2297, %v2307
      %v2313 = vmul.f32 %v2298, %v2307
      %v2314 = vmul.f32 %v2299, %v2307
      %v2315 = vmul.f32 %v2300, %v2307
      %v2316 = vmul.f32 %v2301, %v2307
      %v2317 = vld [vmem:[%s7] sm:$0x1]
      %v2319 = vlaneseq
      %v2320 = vshrl.u32 %v2319, 7
      %v2321 = vsub.s32 0, %v2320
      %v2322 = vrot.slane %v2317, %v2321
      %v2324 = vadd.f32 %v2309, %v2322
      %v2325 = vadd.f32 %v2310, %v2322
      %v2326 = vadd.f32 %v2311, %v2322
      %v2327 = vadd.f32 %v2312, %v2322
      %v2328 = vadd.f32 %v2313, %v2322
      %v2329 = vadd.f32 %v2314, %v2322
      %v2330 = vadd.f32 %v2315, %v2322
      %v2331 = vadd.f32 %v2316, %v2322
      %v2332 = vld [vmem:[%s12] sm:$0xff]
      %v2333 = vld [vmem:[%s12 + $0x8] sm:$0xff]
      %v2334 = vld [vmem:[%s12 + $0x10] sm:$0xff]
      %v2335 = vld [vmem:[%s12 + $0x18] sm:$0xff]
      %v2336 = vld [vmem:[%s12 + $0x20] sm:$0xff]
      %v2337 = vld [vmem:[%s12 + $0x28] sm:$0xff]
      %v2338 = vld [vmem:[%s12 + $0x30] sm:$0xff]
      %v2339 = vld [vmem:[%s12 + $0x38] sm:$0xff]
      %v2340 = vld [vmem:[%s12 + $0x40] sm:$0xff]
      %v2341 = vld [vmem:[%s12 + $0x48] sm:$0xff]
      %v2342 = vld [vmem:[%s12 + $0x50] sm:$0xff]
      %v2343 = vld [vmem:[%s12 + $0x58] sm:$0xff]
      %v2344 = vld [vmem:[%s12 + $0x60] sm:$0xff]
      %v2345 = vld [vmem:[%s12 + $0x68] sm:$0xff]
      %v2346 = vld [vmem:[%s12 + $0x70] sm:$0xff]
      %v2347 = vld [vmem:[%s12 + $0x78] sm:$0xff]
      %v2348 = vld [vmem:[%s12 + $0x80] sm:$0xff]
      %v2349 = vld [vmem:[%s12 + $0x88] sm:$0xff]
      %v2350 = vld [vmem:[%s12 + $0x90] sm:$0xff]
      %v2351 = vld [vmem:[%s12 + $0x98] sm:$0xff]
      %v2352 = vld [vmem:[%s12 + $0xa0] sm:$0xff]
      %v2353 = vld [vmem:[%s12 + $0xa8] sm:$0xff]
      %v2354 = vld [vmem:[%s12 + $0xb0] sm:$0xff]
      %v2355 = vld [vmem:[%s12 + $0xb8] sm:$0xff]
      %v2356 = vld [vmem:[%s12 + $0xc0] sm:$0xff]
      %v2357 = vld [vmem:[%s12 + $0xc8] sm:$0xff]
      %v2358 = vld [vmem:[%s12 + $0xd0] sm:$0xff]
      %v2359 = vld [vmem:[%s12 + $0xd8] sm:$0xff]
      %v2360 = vld [vmem:[%s12 + $0xe0] sm:$0xff]
      %v2361 = vld [vmem:[%s12 + $0xe8] sm:$0xff]
      %v2362 = vld [vmem:[%s12 + $0xf0] sm:$0xff]
      %v2363 = vld [vmem:[%s12 + $0xf8] sm:$0xff]
      %v2364 = vld [vmem:[%s12 + $0x100] sm:$0xff]
      %v2365 = vld [vmem:[%s12 + $0x108] sm:$0xff]
      %v2366 = vld [vmem:[%s12 + $0x110] sm:$0xff]
      %v2367 = vld [vmem:[%s12 + $0x118] sm:$0xff]
      %v2368 = vld [vmem:[%s12 + $0x120] sm:$0xff]
      %v2369 = vld [vmem:[%s12 + $0x128] sm:$0xff]
      %v2370 = vld [vmem:[%s12 + $0x130] sm:$0xff]
      %v2371 = vld [vmem:[%s12 + $0x138] sm:$0xff]
      %v2372 = vld [vmem:[%s12 + $0x140] sm:$0xff]
      %v2373 = vld [vmem:[%s12 + $0x148] sm:$0xff]
      %v2374 = vld [vmem:[%s12 + $0x150] sm:$0xff]
      %v2375 = vld [vmem:[%s12 + $0x158] sm:$0xff]
      %v2376 = vld [vmem:[%s12 + $0x160] sm:$0xff]
      %v2377 = vld [vmem:[%s12 + $0x168] sm:$0xff]
      %v2378 = vld [vmem:[%s12 + $0x170] sm:$0xff]
      %v2379 = vld [vmem:[%s12 + $0x178] sm:$0xff]
      %v2380 = vld [vmem:[%s12 + $0x180] sm:$0xff]
      %v2381 = vld [vmem:[%s12 + $0x188] sm:$0xff]
      %v2382 = vld [vmem:[%s12 + $0x190] sm:$0xff]
      %v2383 = vld [vmem:[%s12 + $0x198] sm:$0xff]
      %v2384 = vld [vmem:[%s12 + $0x1a0] sm:$0xff]
      %v2385 = vld [vmem:[%s12 + $0x1a8] sm:$0xff]
      %v2386 = vld [vmem:[%s12 + $0x1b0] sm:$0xff]
      %v2387 = vld [vmem:[%s12 + $0x1b8] sm:$0xff]
      %v2388 = vld [vmem:[%s12 + $0x1c0] sm:$0xff]
      %v2389 = vld [vmem:[%s12 + $0x1c8] sm:$0xff]
      %v2390 = vld [vmem:[%s12 + $0x1d0] sm:$0xff]
      %v2391 = vld [vmem:[%s12 + $0x1d8] sm:$0xff]
      %v2392 = vld [vmem:[%s12 + $0x1e0] sm:$0xff]
      %v2393 = vld [vmem:[%s12 + $0x1e8] sm:$0xff]
      %v2394 = vld [vmem:[%s12 + $0x1f0] sm:$0xff]
      %v2395 = vld [vmem:[%s12 + $0x1f8] sm:$0xff]
      %v2396 = vld [vmem:[%s12 + $0x200] sm:$0xff]
      %v2397 = vld [vmem:[%s12 + $0x208] sm:$0xff]
      %v2398 = vld [vmem:[%s12 + $0x210] sm:$0xff]
      %v2399 = vld [vmem:[%s12 + $0x218] sm:$0xff]
      %v2400 = vld [vmem:[%s12 + $0x220] sm:$0xff]
      %v2401 = vld [vmem:[%s12 + $0x228] sm:$0xff]
      %v2402 = vld [vmem:[%s12 + $0x230] sm:$0xff]
      %v2403 = vld [vmem:[%s12 + $0x238] sm:$0xff]
      %v2405 = vsel %vm1298, %v2332, 0
      %v2408 = vsel %vm1298, %v2333, 0
      %v2411 = vsel %vm1298, %v2334, 0
      %v2414 = vsel %vm1298, %v2335, 0
      %v2417 = vsel %vm1298, %v2336, 0
      %v2420 = vsel %vm1298, %v2337, 0
      %v2423 = vsel %vm1298, %v2338, 0
      %v2426 = vsel %vm1298, %v2339, 0
      %v2429 = vsel %vm1298, %v2340, 0
      %v2432 = vsel %vm1298, %v2341, 0
      %v2435 = vsel %vm1298, %v2342, 0
      %v2438 = vsel %vm1298, %v2343, 0
      %v2441 = vsel %vm1298, %v2344, 0
      %v2444 = vsel %vm1298, %v2345, 0
      %v2447 = vsel %vm1298, %v2346, 0
      %v2450 = vsel %vm1298, %v2347, 0
      %v2453 = vsel %vm1298, %v2348, 0
      %v2456 = vsel %vm1298, %v2349, 0
      %v2459 = vsel %vm1298, %v2350, 0
      %v2462 = vsel %vm1298, %v2351, 0
      %v2465 = vsel %vm1298, %v2352, 0
      %v2468 = vsel %vm1298, %v2353, 0
      %v2471 = vsel %vm1298, %v2354, 0
      %v2474 = vsel %vm1298, %v2355, 0
      %v2477 = vsel %vm1298, %v2356, 0
      %v2480 = vsel %vm1298, %v2357, 0
      %v2483 = vsel %vm1298, %v2358, 0
      %v2486 = vsel %vm1298, %v2359, 0
      %v2489 = vsel %vm1298, %v2360, 0
      %v2492 = vsel %vm1298, %v2361, 0
      %v2495 = vsel %vm1298, %v2362, 0
      %v2498 = vsel %vm1298, %v2363, 0
      %v2501 = vsel %vm1298, %v2364, 0
      %v2504 = vsel %vm1298, %v2365, 0
      %v2507 = vsel %vm1298, %v2366, 0
      %v2510 = vsel %vm1298, %v2367, 0
      %v2513 = vsel %vm1298, %v2368, 0
      %v2516 = vsel %vm1298, %v2369, 0
      %v2519 = vsel %vm1298, %v2370, 0
      %v2522 = vsel %vm1298, %v2371, 0
      %v2525 = vsel %vm1298, %v2372, 0
      %v2528 = vsel %vm1298, %v2373, 0
      %v2531 = vsel %vm1298, %v2374, 0
      %v2534 = vsel %vm1298, %v2375, 0
      %v2537 = vsel %vm1298, %v2376, 0
      %v2540 = vsel %vm1298, %v2377, 0
      %v2543 = vsel %vm1298, %v2378, 0
      %v2546 = vsel %vm1298, %v2379, 0
      %v2549 = vsel %vm1298, %v2380, 0
      %v2552 = vsel %vm1298, %v2381, 0
      %v2555 = vsel %vm1298, %v2382, 0
      %v2558 = vsel %vm1298, %v2383, 0
      %v2561 = vsel %vm1298, %v2384, 0
      %v2564 = vsel %vm1298, %v2385, 0
      %v2567 = vsel %vm1298, %v2386, 0
      %v2570 = vsel %vm1298, %v2387, 0
      %v2573 = vsel %vm1298, %v2388, 0
      %v2576 = vsel %vm1298, %v2389, 0
      %v2579 = vsel %vm1298, %v2390, 0
      %v2582 = vsel %vm1298, %v2391, 0
      %v2585 = vsel %vm1298, %v2392, 0
      %v2588 = vsel %vm1298, %v2393, 0
      %v2591 = vsel %vm1298, %v2394, 0
      %v2594 = vsel %vm1298, %v2395, 0
      %v2597 = vsel %vm1298, %v2396, 0
      %v2600 = vsel %vm1298, %v2397, 0
      %v2603 = vsel %vm1298, %v2398, 0
      %v2606 = vsel %vm1298, %v2399, 0
      %v2609 = vsel %vm1298, %v2400, 0
      %v2612 = vsel %vm1298, %v2401, 0
      %v2615 = vsel %vm1298, %v2402, 0
      %v2618 = vsel %vm1298, %v2403, 0
      %2620 = vmatprep.subr.mxu0 0.0
      %2621 = vmatpush1.msra.mxu0 0.0
      %2622 = vmatprep.subr.mxu0 0.0
      %2623 = vmatpush1.msra.mxu0 0.0
      %2624 = vmatprep.subr.mxu0 0.0
      %2625 = vmatpush1.msra.mxu0 0.0
      %2626 = vmatprep.subr.mxu0 0.0
      %2627 = vmatpush1.msra.mxu0 0.0
      %2628 = vmatprep.subr.mxu0 0.0
      %2629 = vmatpush1.msra.mxu0 0.0
      %2630 = vmatprep.subr.mxu0 0.0
      %2631 = vmatpush1.msra.mxu0 0.0
      %2632 = vmatprep.subr.mxu0 0.0
      %2633 = vmatpush1.msra.mxu0 0.0
      %2634 = vmatprep.subr.mxu0 0.0
      %2635 = vmatpush1.msra.mxu0 0.0
      %2636 = vmatprep.subr.mxu0 0.0
      %2637 = vmatpush1.msra.mxu0 %v2331
      %2638 = vmatprep.subr.mxu0 0.0
      %2639 = vmatpush1.msra.mxu0 %v2330
      %2640 = vmatprep.subr.mxu0 0.0
      %2641 = vmatpush1.msra.mxu0 %v2329
      %2642 = vmatprep.subr.mxu0 0.0
      %2643 = vmatpush1.msra.mxu0 %v2328
      %2644 = vmatprep.subr.mxu0 0.0
      %2645 = vmatpush1.msra.mxu0 %v2327
      %2646 = vmatprep.subr.mxu0 0.0
      %2647 = vmatpush1.msra.mxu0 %v2326
      %2648 = vmatprep.subr.mxu0 0.0
      %2649 = vmatpush1.msra.mxu0 %v2325
      %2650 = vmatprep.subr.mxu0 0.0
      %2651 = vmatpush1.msra.mxu0 %v2324
      %2652 = vmatprep.subr.mxu0 0.0
      %2653 = vmatpush2.msra.mxu0 0.0
      %2654 = vmatprep.subr.mxu0 0.0
      %2655 = vmatpush2.msra.mxu0 0.0
      %2656 = vmatprep.subr.mxu0 0.0
      %2657 = vmatpush2.msra.mxu0 0.0
      %2658 = vmatprep.subr.mxu0 0.0
      %2659 = vmatpush2.msra.mxu0 0.0
      %2660 = vmatprep.subr.mxu0 0.0
      %2661 = vmatpush2.msra.mxu0 0.0
      %2662 = vmatprep.subr.mxu0 0.0
      %2663 = vmatpush2.msra.mxu0 0.0
      %2664 = vmatprep.subr.mxu0 0.0
      %2665 = vmatpush2.msra.mxu0 0.0
      %2666 = vmatprep.subr.mxu0 0.0
      %2667 = vmatpush2.msra.mxu0 0.0
      %2668 = vmatprep.subr.mxu0 0.0
      %2669 = vmatpush2.msra.mxu0 0.0
      %2670 = vmatprep.subr.mxu0 0.0
      %2671 = vmatpush2.msra.mxu0 0.0
      %2672 = vmatprep.subr.mxu0 0.0
      %2673 = vmatpush2.msra.mxu0 0.0
      %2674 = vmatprep.subr.mxu0 0.0
      %2675 = vmatpush2.msra.mxu0 0.0
      %2676 = vmatprep.subr.mxu0 0.0
      %2677 = vmatpush2.msra.mxu0 0.0
      %2678 = vmatprep.subr.mxu0 0.0
      %2679 = vmatpush2.msra.mxu0 0.0
      %2680 = vmatprep.subr.mxu0 0.0
      %2681 = vmatpush2.msra.mxu0 0.0
      %2682 = vmatprep.subr.mxu0 0.0
      %2683 = vmatpush2.msra.mxu0 0.0
      %2684 = vmatprep.mubr.f32.mxu0 0.0
      %2685 = vmatmul.mubr.f32.gmra.mxu0 %v2405
      %v2686 = vpop.f32.mrf.mxu0
      %v2687 = vadd.f32 0.0, %v2686
      %v2688 = vpop.f32.mrf.mxu0
      %2689 = vmatprep.mubr.f32.mxu0 0.0
      %2690 = vmatmul.mubr.f32.gmra.mxu0 %v2408
      %v2691 = vpop.f32.mrf.mxu0
      %v2692 = vadd.f32 0.0, %v2691
      %v2693 = vpop.f32.mrf.mxu0
      %2694 = vmatprep.mubr.f32.mxu0 0.0
      %2695 = vmatmul.mubr.f32.gmra.mxu0 %v2411
      %v2696 = vpop.f32.mrf.mxu0
      %v2697 = vadd.f32 0.0, %v2696
      %v2698 = vpop.f32.mrf.mxu0
      %2699 = vmatprep.mubr.f32.mxu0 0.0
      %2700 = vmatmul.mubr.f32.gmra.mxu0 %v2414
      %v2701 = vpop.f32.mrf.mxu0
      %v2702 = vadd.f32 0.0, %v2701
      %v2703 = vpop.f32.mrf.mxu0
      %2704 = vmatprep.mubr.f32.mxu0 0.0
      %2705 = vmatmul.mubr.f32.gmra.mxu0 %v2417
      %v2706 = vpop.f32.mrf.mxu0
      %v2707 = vadd.f32 0.0, %v2706
      %v2708 = vpop.f32.mrf.mxu0
      %2709 = vmatprep.mubr.f32.mxu0 0.0
      %2710 = vmatmul.mubr.f32.gmra.mxu0 %v2420
      %v2711 = vpop.f32.mrf.mxu0
      %v2712 = vadd.f32 0.0, %v2711
      %v2713 = vpop.f32.mrf.mxu0
      %2714 = vmatprep.mubr.f32.mxu0 0.0
      %2715 = vmatmul.mubr.f32.gmra.mxu0 %v2423
      %v2716 = vpop.f32.mrf.mxu0
      %v2717 = vadd.f32 0.0, %v2716
      %v2718 = vpop.f32.mrf.mxu0
      %2719 = vmatprep.mubr.f32.mxu0 0.0
      %2720 = vmatmul.mubr.f32.gmra.mxu0 %v2426
      %v2721 = vpop.f32.mrf.mxu0
      %v2722 = vadd.f32 0.0, %v2721
      %v2723 = vpop.f32.mrf.mxu0
      %2724 = vmatprep.mubr.f32.mxu0 0.0
      %2725 = vmatmul.mubr.f32.gmra.mxu0 %v2429
      %v2726 = vpop.f32.mrf.mxu0
      %v2727 = vadd.f32 0.0, %v2726
      %v2728 = vpop.f32.mrf.mxu0
      %2729 = vmatprep.mubr.f32.mxu0 0.0
      %2730 = vmatmul.mubr.f32.gmra.mxu0 %v2432
      %v2731 = vpop.f32.mrf.mxu0
      %v2732 = vadd.f32 0.0, %v2731
      %v2733 = vpop.f32.mrf.mxu0
      %2734 = vmatprep.mubr.f32.mxu0 0.0
      %2735 = vmatmul.mubr.f32.gmra.mxu0 %v2435
      %v2736 = vpop.f32.mrf.mxu0
      %v2737 = vadd.f32 0.0, %v2736
      %v2738 = vpop.f32.mrf.mxu0
      %2739 = vmatprep.mubr.f32.mxu0 0.0
      %2740 = vmatmul.mubr.f32.gmra.mxu0 %v2438
      %v2741 = vpop.f32.mrf.mxu0
      %v2742 = vadd.f32 0.0, %v2741
      %v2743 = vpop.f32.mrf.mxu0
      %2744 = vmatprep.mubr.f32.mxu0 0.0
      %2745 = vmatmul.mubr.f32.gmra.mxu0 %v2441
      %v2746 = vpop.f32.mrf.mxu0
      %v2747 = vadd.f32 0.0, %v2746
      %v2748 = vpop.f32.mrf.mxu0
      %2749 = vmatprep.mubr.f32.mxu0 0.0
      %2750 = vmatmul.mubr.f32.gmra.mxu0 %v2444
      %v2751 = vpop.f32.mrf.mxu0
      %v2752 = vadd.f32 0.0, %v2751
      %v2753 = vpop.f32.mrf.mxu0
      %2754 = vmatprep.mubr.f32.mxu0 0.0
      %2755 = vmatmul.mubr.f32.gmra.mxu0 %v2447
      %v2756 = vpop.f32.mrf.mxu0
      %v2757 = vadd.f32 0.0, %v2756
      %v2758 = vpop.f32.mrf.mxu0
      %2759 = vmatprep.mubr.f32.mxu0 0.0
      %2760 = vmatmul.mubr.f32.gmra.mxu0 %v2450
      %v2761 = vpop.f32.mrf.mxu0
      %v2762 = vadd.f32 0.0, %v2761
      %v2763 = vpop.f32.mrf.mxu0
      %2764 = vmatprep.mubr.f32.mxu0 0.0
      %2765 = vmatmul.mubr.f32.gmra.mxu0 %v2453
      %v2766 = vpop.f32.mrf.mxu0
      %v2767 = vadd.f32 0.0, %v2766
      %v2768 = vpop.f32.mrf.mxu0
      %2769 = vmatprep.mubr.f32.mxu0 0.0
      %2770 = vmatmul.mubr.f32.gmra.mxu0 %v2456
      %v2771 = vpop.f32.mrf.mxu0
      %v2772 = vadd.f32 0.0, %v2771
      %v2773 = vpop.f32.mrf.mxu0
      %2774 = vmatprep.mubr.f32.mxu0 0.0
      %2775 = vmatmul.mubr.f32.gmra.mxu0 %v2459
      %v2776 = vpop.f32.mrf.mxu0
      %v2777 = vadd.f32 0.0, %v2776
      %v2778 = vpop.f32.mrf.mxu0
      %2779 = vmatprep.mubr.f32.mxu0 0.0
      %2780 = vmatmul.mubr.f32.gmra.mxu0 %v2462
      %v2781 = vpop.f32.mrf.mxu0
      %v2782 = vadd.f32 0.0, %v2781
      %v2783 = vpop.f32.mrf.mxu0
      %2784 = vmatprep.mubr.f32.mxu0 0.0
      %2785 = vmatmul.mubr.f32.gmra.mxu0 %v2465
      %v2786 = vpop.f32.mrf.mxu0
      %v2787 = vadd.f32 0.0, %v2786
      %v2788 = vpop.f32.mrf.mxu0
      %2789 = vmatprep.mubr.f32.mxu0 0.0
      %2790 = vmatmul.mubr.f32.gmra.mxu0 %v2468
      %v2791 = vpop.f32.mrf.mxu0
      %v2792 = vadd.f32 0.0, %v2791
      %v2793 = vpop.f32.mrf.mxu0
      %2794 = vmatprep.mubr.f32.mxu0 0.0
      %2795 = vmatmul.mubr.f32.gmra.mxu0 %v2471
      %v2796 = vpop.f32.mrf.mxu0
      %v2797 = vadd.f32 0.0, %v2796
      %v2798 = vpop.f32.mrf.mxu0
      %2799 = vmatprep.mubr.f32.mxu0 0.0
      %2800 = vmatmul.mubr.f32.gmra.mxu0 %v2474
      %v2801 = vpop.f32.mrf.mxu0
      %v2802 = vadd.f32 0.0, %v2801
      %v2803 = vpop.f32.mrf.mxu0
      %2804 = vmatprep.mubr.f32.mxu0 0.0
      %2805 = vmatmul.mubr.f32.gmra.mxu0 %v2477
      %v2806 = vpop.f32.mrf.mxu0
      %v2807 = vadd.f32 0.0, %v2806
      %v2808 = vpop.f32.mrf.mxu0
      %2809 = vmatprep.mubr.f32.mxu0 0.0
      %2810 = vmatmul.mubr.f32.gmra.mxu0 %v2480
      %v2811 = vpop.f32.mrf.mxu0
      %v2812 = vadd.f32 0.0, %v2811
      %v2813 = vpop.f32.mrf.mxu0
      %2814 = vmatprep.mubr.f32.mxu0 0.0
      %2815 = vmatmul.mubr.f32.gmra.mxu0 %v2483
      %v2816 = vpop.f32.mrf.mxu0
      %v2817 = vadd.f32 0.0, %v2816
      %v2818 = vpop.f32.mrf.mxu0
      %2819 = vmatprep.mubr.f32.mxu0 0.0
      %2820 = vmatmul.mubr.f32.gmra.mxu0 %v2486
      %v2821 = vpop.f32.mrf.mxu0
      %v2822 = vadd.f32 0.0, %v2821
      %v2823 = vpop.f32.mrf.mxu0
      %2824 = vmatprep.mubr.f32.mxu0 0.0
      %2825 = vmatmul.mubr.f32.gmra.mxu0 %v2489
      %v2826 = vpop.f32.mrf.mxu0
      %v2827 = vadd.f32 0.0, %v2826
      %v2828 = vpop.f32.mrf.mxu0
      %2829 = vmatprep.mubr.f32.mxu0 0.0
      %2830 = vmatmul.mubr.f32.gmra.mxu0 %v2492
      %v2831 = vpop.f32.mrf.mxu0
      %v2832 = vadd.f32 0.0, %v2831
      %v2833 = vpop.f32.mrf.mxu0
      %2834 = vmatprep.mubr.f32.mxu0 0.0
      %2835 = vmatmul.mubr.f32.gmra.mxu0 %v2495
      %v2836 = vpop.f32.mrf.mxu0
      %v2837 = vadd.f32 0.0, %v2836
      %v2838 = vpop.f32.mrf.mxu0
      %2839 = vmatprep.mubr.f32.mxu0 0.0
      %2840 = vmatmul.mubr.f32.gmra.mxu0 %v2498
      %v2841 = vpop.f32.mrf.mxu0
      %v2842 = vadd.f32 0.0, %v2841
      %v2843 = vpop.f32.mrf.mxu0
      %2844 = vmatprep.mubr.f32.mxu0 0.0
      %2845 = vmatmul.mubr.f32.gmra.mxu0 %v2501
      %v2846 = vpop.f32.mrf.mxu0
      %v2847 = vadd.f32 0.0, %v2846
      %v2848 = vpop.f32.mrf.mxu0
      %2849 = vmatprep.mubr.f32.mxu0 0.0
      %2850 = vmatmul.mubr.f32.gmra.mxu0 %v2504
      %v2851 = vpop.f32.mrf.mxu0
      %v2852 = vadd.f32 0.0, %v2851
      %v2853 = vpop.f32.mrf.mxu0
      %2854 = vmatprep.mubr.f32.mxu0 0.0
      %2855 = vmatmul.mubr.f32.gmra.mxu0 %v2507
      %v2856 = vpop.f32.mrf.mxu0
      %v2857 = vadd.f32 0.0, %v2856
      %v2858 = vpop.f32.mrf.mxu0
      %2859 = vmatprep.mubr.f32.mxu0 0.0
      %2860 = vmatmul.mubr.f32.gmra.mxu0 %v2510
      %v2861 = vpop.f32.mrf.mxu0
      %v2862 = vadd.f32 0.0, %v2861
      %v2863 = vpop.f32.mrf.mxu0
      %2864 = vmatprep.mubr.f32.mxu0 0.0
      %2865 = vmatmul.mubr.f32.gmra.mxu0 %v2513
      %v2866 = vpop.f32.mrf.mxu0
      %v2867 = vadd.f32 0.0, %v2866
      %v2868 = vpop.f32.mrf.mxu0
      %2869 = vmatprep.mubr.f32.mxu0 0.0
      %2870 = vmatmul.mubr.f32.gmra.mxu0 %v2516
      %v2871 = vpop.f32.mrf.mxu0
      %v2872 = vadd.f32 0.0, %v2871
      %v2873 = vpop.f32.mrf.mxu0
      %2874 = vmatprep.mubr.f32.mxu0 0.0
      %2875 = vmatmul.mubr.f32.gmra.mxu0 %v2519
      %v2876 = vpop.f32.mrf.mxu0
      %v2877 = vadd.f32 0.0, %v2876
      %v2878 = vpop.f32.mrf.mxu0
      %2879 = vmatprep.mubr.f32.mxu0 0.0
      %2880 = vmatmul.mubr.f32.gmra.mxu0 %v2522
      %v2881 = vpop.f32.mrf.mxu0
      %v2882 = vadd.f32 0.0, %v2881
      %v2883 = vpop.f32.mrf.mxu0
      %2884 = vmatprep.mubr.f32.mxu0 0.0
      %2885 = vmatmul.mubr.f32.gmra.mxu0 %v2525
      %v2886 = vpop.f32.mrf.mxu0
      %v2887 = vadd.f32 0.0, %v2886
      %v2888 = vpop.f32.mrf.mxu0
      %2889 = vmatprep.mubr.f32.mxu0 0.0
      %2890 = vmatmul.mubr.f32.gmra.mxu0 %v2528
      %v2891 = vpop.f32.mrf.mxu0
      %v2892 = vadd.f32 0.0, %v2891
      %v2893 = vpop.f32.mrf.mxu0
      %2894 = vmatprep.mubr.f32.mxu0 0.0
      %2895 = vmatmul.mubr.f32.gmra.mxu0 %v2531
      %v2896 = vpop.f32.mrf.mxu0
      %v2897 = vadd.f32 0.0, %v2896
      %v2898 = vpop.f32.mrf.mxu0
      %2899 = vmatprep.mubr.f32.mxu0 0.0
      %2900 = vmatmul.mubr.f32.gmra.mxu0 %v2534
      %v2901 = vpop.f32.mrf.mxu0
      %v2902 = vadd.f32 0.0, %v2901
      %v2903 = vpop.f32.mrf.mxu0
      %2904 = vmatprep.mubr.f32.mxu0 0.0
      %2905 = vmatmul.mubr.f32.gmra.mxu0 %v2537
      %v2906 = vpop.f32.mrf.mxu0
      %v2907 = vadd.f32 0.0, %v2906
      %v2908 = vpop.f32.mrf.mxu0
      %2909 = vmatprep.mubr.f32.mxu0 0.0
      %2910 = vmatmul.mubr.f32.gmra.mxu0 %v2540
      %v2911 = vpop.f32.mrf.mxu0
      %v2912 = vadd.f32 0.0, %v2911
      %v2913 = vpop.f32.mrf.mxu0
      %2914 = vmatprep.mubr.f32.mxu0 0.0
      %2915 = vmatmul.mubr.f32.gmra.mxu0 %v2543
      %v2916 = vpop.f32.mrf.mxu0
      %v2917 = vadd.f32 0.0, %v2916
      %v2918 = vpop.f32.mrf.mxu0
      %2919 = vmatprep.mubr.f32.mxu0 0.0
      %2920 = vmatmul.mubr.f32.gmra.mxu0 %v2546
      %v2921 = vpop.f32.mrf.mxu0
      %v2922 = vadd.f32 0.0, %v2921
      %v2923 = vpop.f32.mrf.mxu0
      %2924 = vmatprep.mubr.f32.mxu0 0.0
      %2925 = vmatmul.mubr.f32.gmra.mxu0 %v2549
      %v2926 = vpop.f32.mrf.mxu0
      %v2927 = vadd.f32 0.0, %v2926
      %v2928 = vpop.f32.mrf.mxu0
      %2929 = vmatprep.mubr.f32.mxu0 0.0
      %2930 = vmatmul.mubr.f32.gmra.mxu0 %v2552
      %v2931 = vpop.f32.mrf.mxu0
      %v2932 = vadd.f32 0.0, %v2931
      %v2933 = vpop.f32.mrf.mxu0
      %2934 = vmatprep.mubr.f32.mxu0 0.0
      %2935 = vmatmul.mubr.f32.gmra.mxu0 %v2555
      %v2936 = vpop.f32.mrf.mxu0
      %v2937 = vadd.f32 0.0, %v2936
      %v2938 = vpop.f32.mrf.mxu0
      %2939 = vmatprep.mubr.f32.mxu0 0.0
      %2940 = vmatmul.mubr.f32.gmra.mxu0 %v2558
      %v2941 = vpop.f32.mrf.mxu0
      %v2942 = vadd.f32 0.0, %v2941
      %v2943 = vpop.f32.mrf.mxu0
      %2944 = vmatprep.mubr.f32.mxu0 0.0
      %2945 = vmatmul.mubr.f32.gmra.mxu0 %v2561
      %v2946 = vpop.f32.mrf.mxu0
      %v2947 = vadd.f32 0.0, %v2946
      %v2948 = vpop.f32.mrf.mxu0
      %2949 = vmatprep.mubr.f32.mxu0 0.0
      %2950 = vmatmul.mubr.f32.gmra.mxu0 %v2564
      %v2951 = vpop.f32.mrf.mxu0
      %v2952 = vadd.f32 0.0, %v2951
      %v2953 = vpop.f32.mrf.mxu0
      %2954 = vmatprep.mubr.f32.mxu0 0.0
      %2955 = vmatmul.mubr.f32.gmra.mxu0 %v2567
      %v2956 = vpop.f32.mrf.mxu0
      %v2957 = vadd.f32 0.0, %v2956
      %v2958 = vpop.f32.mrf.mxu0
      %2959 = vmatprep.mubr.f32.mxu0 0.0
      %2960 = vmatmul.mubr.f32.gmra.mxu0 %v2570
      %v2961 = vpop.f32.mrf.mxu0
      %v2962 = vadd.f32 0.0, %v2961
      %v2963 = vpop.f32.mrf.mxu0
      %2964 = vmatprep.mubr.f32.mxu0 0.0
      %2965 = vmatmul.mubr.f32.gmra.mxu0 %v2573
      %v2966 = vpop.f32.mrf.mxu0
      %v2967 = vadd.f32 0.0, %v2966
      %v2968 = vpop.f32.mrf.mxu0
      %2969 = vmatprep.mubr.f32.mxu0 0.0
      %2970 = vmatmul.mubr.f32.gmra.mxu0 %v2576
      %v2971 = vpop.f32.mrf.mxu0
      %v2972 = vadd.f32 0.0, %v2971
      %v2973 = vpop.f32.mrf.mxu0
      %2974 = vmatprep.mubr.f32.mxu0 0.0
      %2975 = vmatmul.mubr.f32.gmra.mxu0 %v2579
      %v2976 = vpop.f32.mrf.mxu0
      %v2977 = vadd.f32 0.0, %v2976
      %v2978 = vpop.f32.mrf.mxu0
      %2979 = vmatprep.mubr.f32.mxu0 0.0
      %2980 = vmatmul.mubr.f32.gmra.mxu0 %v2582
      %v2981 = vpop.f32.mrf.mxu0
      %v2982 = vadd.f32 0.0, %v2981
      %v2983 = vpop.f32.mrf.mxu0
      %2984 = vmatprep.mubr.f32.mxu0 0.0
      %2985 = vmatmul.mubr.f32.gmra.mxu0 %v2585
      %v2986 = vpop.f32.mrf.mxu0
      %v2987 = vadd.f32 0.0, %v2986
      %v2988 = vpop.f32.mrf.mxu0
      %2989 = vmatprep.mubr.f32.mxu0 0.0
      %2990 = vmatmul.mubr.f32.gmra.mxu0 %v2588
      %v2991 = vpop.f32.mrf.mxu0
      %v2992 = vadd.f32 0.0, %v2991
      %v2993 = vpop.f32.mrf.mxu0
      %2994 = vmatprep.mubr.f32.mxu0 0.0
      %2995 = vmatmul.mubr.f32.gmra.mxu0 %v2591
      %v2996 = vpop.f32.mrf.mxu0
      %v2997 = vadd.f32 0.0, %v2996
      %v2998 = vpop.f32.mrf.mxu0
      %2999 = vmatprep.mubr.f32.mxu0 0.0
      %3000 = vmatmul.mubr.f32.gmra.mxu0 %v2594
      %v3001 = vpop.f32.mrf.mxu0
      %v3002 = vadd.f32 0.0, %v3001
      %v3003 = vpop.f32.mrf.mxu0
      %3004 = vmatprep.mubr.f32.mxu0 0.0
      %3005 = vmatmul.mubr.f32.gmra.mxu0 %v2597
      %v3006 = vpop.f32.mrf.mxu0
      %v3007 = vadd.f32 0.0, %v3006
      %v3008 = vpop.f32.mrf.mxu0
      %3009 = vmatprep.mubr.f32.mxu0 0.0
      %3010 = vmatmul.mubr.f32.gmra.mxu0 %v2600
      %v3011 = vpop.f32.mrf.mxu0
      %v3012 = vadd.f32 0.0, %v3011
      %v3013 = vpop.f32.mrf.mxu0
      %3014 = vmatprep.mubr.f32.mxu0 0.0
      %3015 = vmatmul.mubr.f32.gmra.mxu0 %v2603
      %v3016 = vpop.f32.mrf.mxu0
      %v3017 = vadd.f32 0.0, %v3016
      %v3018 = vpop.f32.mrf.mxu0
      %3019 = vmatprep.mubr.f32.mxu0 0.0
      %3020 = vmatmul.mubr.f32.gmra.mxu0 %v2606
      %v3021 = vpop.f32.mrf.mxu0
      %v3022 = vadd.f32 0.0, %v3021
      %v3023 = vpop.f32.mrf.mxu0
      %3024 = vmatprep.mubr.f32.mxu0 0.0
      %3025 = vmatmul.mubr.f32.gmra.mxu0 %v2609
      %v3026 = vpop.f32.mrf.mxu0
      %v3027 = vadd.f32 0.0, %v3026
      %v3028 = vpop.f32.mrf.mxu0
      %3029 = vmatprep.mubr.f32.mxu0 0.0
      %3030 = vmatmul.mubr.f32.gmra.mxu0 %v2612
      %v3031 = vpop.f32.mrf.mxu0
      %v3032 = vadd.f32 0.0, %v3031
      %v3033 = vpop.f32.mrf.mxu0
      %3034 = vmatprep.mubr.f32.mxu0 0.0
      %3035 = vmatmul.mubr.f32.gmra.mxu0 %v2615
      %v3036 = vpop.f32.mrf.mxu0
      %v3037 = vadd.f32 0.0, %v3036
      %v3038 = vpop.f32.mrf.mxu0
      %3039 = vmatprep.mubr.f32.mxu0 0.0
      %3040 = vmatmul.mubr.f32.gmra.mxu0 %v2618
      %v3041 = vpop.f32.mrf.mxu0
      %v3042 = vadd.f32 0.0, %v3041
      %v3043 = vpop.f32.mrf.mxu0
      %3044 = vdwg.mxu0
      %v3045 = vld [vmem:[%s13] sm:$0xff]
      %v3046 = vld [vmem:[%s13 + $0x8] sm:$0xff]
      %v3047 = vld [vmem:[%s13 + $0x10] sm:$0xff]
      %v3048 = vld [vmem:[%s13 + $0x18] sm:$0xff]
      %v3049 = vld [vmem:[%s13 + $0x20] sm:$0xff]
      %v3050 = vld [vmem:[%s13 + $0x28] sm:$0xff]
      %v3051 = vld [vmem:[%s13 + $0x30] sm:$0xff]
      %v3052 = vld [vmem:[%s13 + $0x38] sm:$0xff]
      %v3053 = vld [vmem:[%s13 + $0x40] sm:$0xff]
      %v3054 = vld [vmem:[%s13 + $0x48] sm:$0xff]
      %v3055 = vld [vmem:[%s13 + $0x50] sm:$0xff]
      %v3056 = vld [vmem:[%s13 + $0x58] sm:$0xff]
      %v3057 = vld [vmem:[%s13 + $0x60] sm:$0xff]
      %v3058 = vld [vmem:[%s13 + $0x68] sm:$0xff]
      %v3059 = vld [vmem:[%s13 + $0x70] sm:$0xff]
      %v3060 = vld [vmem:[%s13 + $0x78] sm:$0xff]
      %v3061 = vld [vmem:[%s13 + $0x80] sm:$0xff]
      %v3062 = vld [vmem:[%s13 + $0x88] sm:$0xff]
      %v3063 = vld [vmem:[%s14] sm:$0x1]
      %v3065 = vlaneseq
      %v3066 = vshrl.u32 %v3065, 7
      %v3067 = vsub.s32 0, %v3066
      %v3068 = vrot.slane %v3063, %v3067
      %v3070 = vadd.f32 %v2190, %v3068
      %v3071 = vadd.f32 %v2191, %v3068
      %v3072 = vadd.f32 %v2192, %v3068
      %v3073 = vadd.f32 %v2193, %v3068
      %v3074 = vadd.f32 %v2194, %v3068
      %v3075 = vadd.f32 %v2195, %v3068
      %v3076 = vadd.f32 %v2196, %v3068
      %v3077 = vadd.f32 %v2197, %v3068
      %v3079 = vsel %vm579, %v2687, 0
      %v3082 = vsel %vm579, %v2692, 0
      %v3085 = vsel %vm579, %v2697, 0
      %v3088 = vsel %vm579, %v2702, 0
      %v3091 = vsel %vm579, %v2707, 0
      %v3094 = vsel %vm579, %v2712, 0
      %v3097 = vsel %vm579, %v2717, 0
      %v3100 = vsel %vm579, %v2722, 0
      %3102 = vmatprep.subr.mxu0 0.0
      %3103 = vmatpush1.msra.mxu0 0.0
      %3104 = vmatprep.subr.mxu0 0.0
      %3105 = vmatpush1.msra.mxu0 0.0
      %3106 = vmatprep.subr.mxu0 0.0
      %3107 = vmatpush1.msra.mxu0 0.0
      %3108 = vmatprep.subr.mxu0 0.0
      %3109 = vmatpush1.msra.mxu0 0.0
      %3110 = vmatprep.subr.mxu0 0.0
      %3111 = vmatpush1.msra.mxu0 0.0
      %3112 = vmatprep.subr.mxu0 0.0
      %3113 = vmatpush1.msra.mxu0 0.0
      %3114 = vmatprep.subr.mxu0 0.0
      %3115 = vmatpush1.msra.mxu0 0.0
      %3116 = vmatprep.subr.mxu0 0.0
      %3117 = vmatpush1.msra.mxu0 0.0
      %3118 = vmatprep.subr.mxu0 0.0
      %3119 = vmatpush1.msra.mxu0 0.0
      %3120 = vmatprep.subr.mxu0 0.0
      %3121 = vmatpush1.msra.mxu0 0.0
      %3122 = vmatprep.subr.mxu0 0.0
      %3123 = vmatpush1.msra.mxu0 0.0
      %3124 = vmatprep.subr.mxu0 0.0
      %3125 = vmatpush1.msra.mxu0 0.0
      %3126 = vmatprep.subr.mxu0 0.0
      %3127 = vmatpush1.msra.mxu0 0.0
      %3128 = vmatprep.subr.mxu0 0.0
      %3129 = vmatpush1.msra.mxu0 0.0
      %3130 = vmatprep.subr.mxu0 0.0
      %3131 = vmatpush1.msra.mxu0 %v3046
      %3132 = vmatprep.subr.mxu0 0.0
      %3133 = vmatpush1.msra.mxu0 %v3045
      %3134 = vmatprep.subr.mxu0 0.0
      %3135 = vmatpush2.msra.mxu0 0.0
      %3136 = vmatprep.subr.mxu0 0.0
      %3137 = vmatpush2.msra.mxu0 0.0
      %3138 = vmatprep.subr.mxu0 0.0
      %3139 = vmatpush2.msra.mxu0 0.0
      %3140 = vmatprep.subr.mxu0 0.0
      %3141 = vmatpush2.msra.mxu0 0.0
      %3142 = vmatprep.subr.mxu0 0.0
      %3143 = vmatpush2.msra.mxu0 0.0
      %3144 = vmatprep.subr.mxu0 0.0
      %3145 = vmatpush2.msra.mxu0 0.0
      %3146 = vmatprep.subr.mxu0 0.0
      %3147 = vmatpush2.msra.mxu0 0.0
      %3148 = vmatprep.subr.mxu0 0.0
      %3149 = vmatpush2.msra.mxu0 0.0
      %3150 = vmatprep.subr.mxu0 0.0
      %3151 = vmatpush2.msra.mxu0 0.0
      %3152 = vmatprep.subr.mxu0 0.0
      %3153 = vmatpush2.msra.mxu0 0.0
      %3154 = vmatprep.subr.mxu0 0.0
      %3155 = vmatpush2.msra.mxu0 0.0
      %3156 = vmatprep.subr.mxu0 0.0
      %3157 = vmatpush2.msra.mxu0 0.0
      %3158 = vmatprep.subr.mxu0 0.0
      %3159 = vmatpush2.msra.mxu0 0.0
      %3160 = vmatprep.subr.mxu0 0.0
      %3161 = vmatpush2.msra.mxu0 0.0
      %3162 = vmatprep.subr.mxu0 0.0
      %3163 = vmatpush2.msra.mxu0 0.0
      %3164 = vmatprep.subr.mxu0 0.0
      %3165 = vmatpush2.msra.mxu0 0.0
      %3166 = vmatprep.mubr.f32.mxu0 0.0
      %3167 = vmatmul.mubr.f32.gmra.mxu0 %v3079
      %v3168 = vpop.f32.mrf.mxu0
      %v3169 = vadd.f32 0.0, %v3168
      %v3170 = vpop.f32.mrf.mxu0
      %3171 = vmatprep.mubr.f32.mxu0 0.0
      %3172 = vmatmul.mubr.f32.gmra.mxu0 %v3082
      %v3173 = vpop.f32.mrf.mxu0
      %v3174 = vadd.f32 0.0, %v3173
      %v3175 = vpop.f32.mrf.mxu0
      %3176 = vmatprep.mubr.f32.mxu0 0.0
      %3177 = vmatmul.mubr.f32.gmra.mxu0 %v3085
      %v3178 = vpop.f32.mrf.mxu0
      %v3179 = vadd.f32 0.0, %v3178
      %v3180 = vpop.f32.mrf.mxu0
      %3181 = vmatprep.mubr.f32.mxu0 0.0
      %3182 = vmatmul.mubr.f32.gmra.mxu0 %v3088
      %v3183 = vpop.f32.mrf.mxu0
      %v3184 = vadd.f32 0.0, %v3183
      %v3185 = vpop.f32.mrf.mxu0
      %3186 = vmatprep.mubr.f32.mxu0 0.0
      %3187 = vmatmul.mubr.f32.gmra.mxu0 %v3091
      %v3188 = vpop.f32.mrf.mxu0
      %v3189 = vadd.f32 0.0, %v3188
      %v3190 = vpop.f32.mrf.mxu0
      %3191 = vmatprep.mubr.f32.mxu0 0.0
      %3192 = vmatmul.mubr.f32.gmra.mxu0 %v3094
      %v3193 = vpop.f32.mrf.mxu0
      %v3194 = vadd.f32 0.0, %v3193
      %v3195 = vpop.f32.mrf.mxu0
      %3196 = vmatprep.mubr.f32.mxu0 0.0
      %3197 = vmatmul.mubr.f32.gmra.mxu0 %v3097
      %v3198 = vpop.f32.mrf.mxu0
      %v3199 = vadd.f32 0.0, %v3198
      %v3200 = vpop.f32.mrf.mxu0
      %3201 = vmatprep.mubr.f32.mxu0 0.0
      %3202 = vmatmul.mubr.f32.gmra.mxu0 %v3100
      %v3203 = vpop.f32.mrf.mxu0
      %v3204 = vadd.f32 0.0, %v3203
      %v3205 = vpop.f32.mrf.mxu0
      %3206 = vdwg.mxu0
      %v3207 = vadd.f32 %v3070, %v3169
      %v3208 = vadd.f32 %v3071, %v3174
      %v3209 = vadd.f32 %v3072, %v3179
      %v3210 = vadd.f32 %v3073, %v3184
      %v3211 = vadd.f32 %v3074, %v3189
      %v3212 = vadd.f32 %v3075, %v3194
      %v3213 = vadd.f32 %v3076, %v3199
      %v3214 = vadd.f32 %v3077, %v3204
      %v3216 = vsel %vm579, %v2727, 0
      %v3219 = vsel %vm579, %v2732, 0
      %v3222 = vsel %vm579, %v2737, 0
      %v3225 = vsel %vm579, %v2742, 0
      %v3228 = vsel %vm579, %v2747, 0
      %v3231 = vsel %vm579, %v2752, 0
      %v3234 = vsel %vm579, %v2757, 0
      %v3237 = vsel %vm579, %v2762, 0
      %3239 = vmatprep.subr.mxu0 0.0
      %3240 = vmatpush1.msra.mxu0 0.0
      %3241 = vmatprep.subr.mxu0 0.0
      %3242 = vmatpush1.msra.mxu0 0.0
      %3243 = vmatprep.subr.mxu0 0.0
      %3244 = vmatpush1.msra.mxu0 0.0
      %3245 = vmatprep.subr.mxu0 0.0
      %3246 = vmatpush1.msra.mxu0 0.0
      %3247 = vmatprep.subr.mxu0 0.0
      %3248 = vmatpush1.msra.mxu0 0.0
      %3249 = vmatprep.subr.mxu0 0.0
      %3250 = vmatpush1.msra.mxu0 0.0
      %3251 = vmatprep.subr.mxu0 0.0
      %3252 = vmatpush1.msra.mxu0 0.0
      %3253 = vmatprep.subr.mxu0 0.0
      %3254 = vmatpush1.msra.mxu0 0.0
      %3255 = vmatprep.subr.mxu0 0.0
      %3256 = vmatpush1.msra.mxu0 0.0
      %3257 = vmatprep.subr.mxu0 0.0
      %3258 = vmatpush1.msra.mxu0 0.0
      %3259 = vmatprep.subr.mxu0 0.0
      %3260 = vmatpush1.msra.mxu0 0.0
      %3261 = vmatprep.subr.mxu0 0.0
      %3262 = vmatpush1.msra.mxu0 0.0
      %3263 = vmatprep.subr.mxu0 0.0
      %3264 = vmatpush1.msra.mxu0 0.0
      %3265 = vmatprep.subr.mxu0 0.0
      %3266 = vmatpush1.msra.mxu0 0.0
      %3267 = vmatprep.subr.mxu0 0.0
      %3268 = vmatpush1.msra.mxu0 %v3048
      %3269 = vmatprep.subr.mxu0 0.0
      %3270 = vmatpush1.msra.mxu0 %v3047
      %3271 = vmatprep.subr.mxu0 0.0
      %3272 = vmatpush2.msra.mxu0 0.0
      %3273 = vmatprep.subr.mxu0 0.0
      %3274 = vmatpush2.msra.mxu0 0.0
      %3275 = vmatprep.subr.mxu0 0.0
      %3276 = vmatpush2.msra.mxu0 0.0
      %3277 = vmatprep.subr.mxu0 0.0
      %3278 = vmatpush2.msra.mxu0 0.0
      %3279 = vmatprep.subr.mxu0 0.0
      %3280 = vmatpush2.msra.mxu0 0.0
      %3281 = vmatprep.subr.mxu0 0.0
      %3282 = vmatpush2.msra.mxu0 0.0
      %3283 = vmatprep.subr.mxu0 0.0
      %3284 = vmatpush2.msra.mxu0 0.0
      %3285 = vmatprep.subr.mxu0 0.0
      %3286 = vmatpush2.msra.mxu0 0.0
      %3287 = vmatprep.subr.mxu0 0.0
      %3288 = vmatpush2.msra.mxu0 0.0
      %3289 = vmatprep.subr.mxu0 0.0
      %3290 = vmatpush2.msra.mxu0 0.0
      %3291 = vmatprep.subr.mxu0 0.0
      %3292 = vmatpush2.msra.mxu0 0.0
      %3293 = vmatprep.subr.mxu0 0.0
      %3294 = vmatpush2.msra.mxu0 0.0
      %3295 = vmatprep.subr.mxu0 0.0
      %3296 = vmatpush2.msra.mxu0 0.0
      %3297 = vmatprep.subr.mxu0 0.0
      %3298 = vmatpush2.msra.mxu0 0.0
      %3299 = vmatprep.subr.mxu0 0.0
      %3300 = vmatpush2.msra.mxu0 0.0
      %3301 = vmatprep.subr.mxu0 0.0
      %3302 = vmatpush2.msra.mxu0 0.0
      %3303 = vmatprep.mubr.f32.mxu0 0.0
      %3304 = vmatmul.mubr.f32.gmra.mxu0 %v3216
      %v3305 = vpop.f32.mrf.mxu0
      %v3306 = vadd.f32 0.0, %v3305
      %v3307 = vpop.f32.mrf.mxu0
      %3308 = vmatprep.mubr.f32.mxu0 0.0
      %3309 = vmatmul.mubr.f32.gmra.mxu0 %v3219
      %v3310 = vpop.f32.mrf.mxu0
      %v3311 = vadd.f32 0.0, %v3310
      %v3312 = vpop.f32.mrf.mxu0
      %3313 = vmatprep.mubr.f32.mxu0 0.0
      %3314 = vmatmul.mubr.f32.gmra.mxu0 %v3222
      %v3315 = vpop.f32.mrf.mxu0
      %v3316 = vadd.f32 0.0, %v3315
      %v3317 = vpop.f32.mrf.mxu0
      %3318 = vmatprep.mubr.f32.mxu0 0.0
      %3319 = vmatmul.mubr.f32.gmra.mxu0 %v3225
      %v3320 = vpop.f32.mrf.mxu0
      %v3321 = vadd.f32 0.0, %v3320
      %v3322 = vpop.f32.mrf.mxu0
      %3323 = vmatprep.mubr.f32.mxu0 0.0
      %3324 = vmatmul.mubr.f32.gmra.mxu0 %v3228
      %v3325 = vpop.f32.mrf.mxu0
      %v3326 = vadd.f32 0.0, %v3325
      %v3327 = vpop.f32.mrf.mxu0
      %3328 = vmatprep.mubr.f32.mxu0 0.0
      %3329 = vmatmul.mubr.f32.gmra.mxu0 %v3231
      %v3330 = vpop.f32.mrf.mxu0
      %v3331 = vadd.f32 0.0, %v3330
      %v3332 = vpop.f32.mrf.mxu0
      %3333 = vmatprep.mubr.f32.mxu0 0.0
      %3334 = vmatmul.mubr.f32.gmra.mxu0 %v3234
      %v3335 = vpop.f32.mrf.mxu0
      %v3336 = vadd.f32 0.0, %v3335
      %v3337 = vpop.f32.mrf.mxu0
      %3338 = vmatprep.mubr.f32.mxu0 0.0
      %3339 = vmatmul.mubr.f32.gmra.mxu0 %v3237
      %v3340 = vpop.f32.mrf.mxu0
      %v3341 = vadd.f32 0.0, %v3340
      %v3342 = vpop.f32.mrf.mxu0
      %3343 = vdwg.mxu0
      %v3344 = vadd.f32 %v3207, %v3306
      %v3345 = vadd.f32 %v3208, %v3311
      %v3346 = vadd.f32 %v3209, %v3316
      %v3347 = vadd.f32 %v3210, %v3321
      %v3348 = vadd.f32 %v3211, %v3326
      %v3349 = vadd.f32 %v3212, %v3331
      %v3350 = vadd.f32 %v3213, %v3336
      %v3351 = vadd.f32 %v3214, %v3341
      %v3353 = vsel %vm579, %v2767, 0
      %v3356 = vsel %vm579, %v2772, 0
      %v3359 = vsel %vm579, %v2777, 0
      %v3362 = vsel %vm579, %v2782, 0
      %v3365 = vsel %vm579, %v2787, 0
      %v3368 = vsel %vm579, %v2792, 0
      %v3371 = vsel %vm579, %v2797, 0
      %v3374 = vsel %vm579, %v2802, 0
      %3376 = vmatprep.subr.mxu0 0.0
      %3377 = vmatpush1.msra.mxu0 0.0
      %3378 = vmatprep.subr.mxu0 0.0
      %3379 = vmatpush1.msra.mxu0 0.0
      %3380 = vmatprep.subr.mxu0 0.0
      %3381 = vmatpush1.msra.mxu0 0.0
      %3382 = vmatprep.subr.mxu0 0.0
      %3383 = vmatpush1.msra.mxu0 0.0
      %3384 = vmatprep.subr.mxu0 0.0
      %3385 = vmatpush1.msra.mxu0 0.0
      %3386 = vmatprep.subr.mxu0 0.0
      %3387 = vmatpush1.msra.mxu0 0.0
      %3388 = vmatprep.subr.mxu0 0.0
      %3389 = vmatpush1.msra.mxu0 0.0
      %3390 = vmatprep.subr.mxu0 0.0
      %3391 = vmatpush1.msra.mxu0 0.0
      %3392 = vmatprep.subr.mxu0 0.0
      %3393 = vmatpush1.msra.mxu0 0.0
      %3394 = vmatprep.subr.mxu0 0.0
      %3395 = vmatpush1.msra.mxu0 0.0
      %3396 = vmatprep.subr.mxu0 0.0
      %3397 = vmatpush1.msra.mxu0 0.0
      %3398 = vmatprep.subr.mxu0 0.0
      %3399 = vmatpush1.msra.mxu0 0.0
      %3400 = vmatprep.subr.mxu0 0.0
      %3401 = vmatpush1.msra.mxu0 0.0
      %3402 = vmatprep.subr.mxu0 0.0
      %3403 = vmatpush1.msra.mxu0 0.0
      %3404 = vmatprep.subr.mxu0 0.0
      %3405 = vmatpush1.msra.mxu0 %v3050
      %3406 = vmatprep.subr.mxu0 0.0
      %3407 = vmatpush1.msra.mxu0 %v3049
      %3408 = vmatprep.subr.mxu0 0.0
      %3409 = vmatpush2.msra.mxu0 0.0
      %3410 = vmatprep.subr.mxu0 0.0
      %3411 = vmatpush2.msra.mxu0 0.0
      %3412 = vmatprep.subr.mxu0 0.0
      %3413 = vmatpush2.msra.mxu0 0.0
      %3414 = vmatprep.subr.mxu0 0.0
      %3415 = vmatpush2.msra.mxu0 0.0
      %3416 = vmatprep.subr.mxu0 0.0
      %3417 = vmatpush2.msra.mxu0 0.0
      %3418 = vmatprep.subr.mxu0 0.0
      %3419 = vmatpush2.msra.mxu0 0.0
      %3420 = vmatprep.subr.mxu0 0.0
      %3421 = vmatpush2.msra.mxu0 0.0
      %3422 = vmatprep.subr.mxu0 0.0
      %3423 = vmatpush2.msra.mxu0 0.0
      %3424 = vmatprep.subr.mxu0 0.0
      %3425 = vmatpush2.msra.mxu0 0.0
      %3426 = vmatprep.subr.mxu0 0.0
      %3427 = vmatpush2.msra.mxu0 0.0
      %3428 = vmatprep.subr.mxu0 0.0
      %3429 = vmatpush2.msra.mxu0 0.0
      %3430 = vmatprep.subr.mxu0 0.0
      %3431 = vmatpush2.msra.mxu0 0.0
      %3432 = vmatprep.subr.mxu0 0.0
      %3433 = vmatpush2.msra.mxu0 0.0
      %3434 = vmatprep.subr.mxu0 0.0
      %3435 = vmatpush2.msra.mxu0 0.0
      %3436 = vmatprep.subr.mxu0 0.0
      %3437 = vmatpush2.msra.mxu0 0.0
      %3438 = vmatprep.subr.mxu0 0.0
      %3439 = vmatpush2.msra.mxu0 0.0
      %3440 = vmatprep.mubr.f32.mxu0 0.0
      %3441 = vmatmul.mubr.f32.gmra.mxu0 %v3353
      %v3442 = vpop.f32.mrf.mxu0
      %v3443 = vadd.f32 0.0, %v3442
      %v3444 = vpop.f32.mrf.mxu0
      %3445 = vmatprep.mubr.f32.mxu0 0.0
      %3446 = vmatmul.mubr.f32.gmra.mxu0 %v3356
      %v3447 = vpop.f32.mrf.mxu0
      %v3448 = vadd.f32 0.0, %v3447
      %v3449 = vpop.f32.mrf.mxu0
      %3450 = vmatprep.mubr.f32.mxu0 0.0
      %3451 = vmatmul.mubr.f32.gmra.mxu0 %v3359
      %v3452 = vpop.f32.mrf.mxu0
      %v3453 = vadd.f32 0.0, %v3452
      %v3454 = vpop.f32.mrf.mxu0
      %3455 = vmatprep.mubr.f32.mxu0 0.0
      %3456 = vmatmul.mubr.f32.gmra.mxu0 %v3362
      %v3457 = vpop.f32.mrf.mxu0
      %v3458 = vadd.f32 0.0, %v3457
      %v3459 = vpop.f32.mrf.mxu0
      %3460 = vmatprep.mubr.f32.mxu0 0.0
      %3461 = vmatmul.mubr.f32.gmra.mxu0 %v3365
      %v3462 = vpop.f32.mrf.mxu0
      %v3463 = vadd.f32 0.0, %v3462
      %v3464 = vpop.f32.mrf.mxu0
      %3465 = vmatprep.mubr.f32.mxu0 0.0
      %3466 = vmatmul.mubr.f32.gmra.mxu0 %v3368
      %v3467 = vpop.f32.mrf.mxu0
      %v3468 = vadd.f32 0.0, %v3467
      %v3469 = vpop.f32.mrf.mxu0
      %3470 = vmatprep.mubr.f32.mxu0 0.0
      %3471 = vmatmul.mubr.f32.gmra.mxu0 %v3371
      %v3472 = vpop.f32.mrf.mxu0
      %v3473 = vadd.f32 0.0, %v3472
      %v3474 = vpop.f32.mrf.mxu0
      %3475 = vmatprep.mubr.f32.mxu0 0.0
      %3476 = vmatmul.mubr.f32.gmra.mxu0 %v3374
      %v3477 = vpop.f32.mrf.mxu0
      %v3478 = vadd.f32 0.0, %v3477
      %v3479 = vpop.f32.mrf.mxu0
      %3480 = vdwg.mxu0
      %v3481 = vadd.f32 %v3344, %v3443
      %v3482 = vadd.f32 %v3345, %v3448
      %v3483 = vadd.f32 %v3346, %v3453
      %v3484 = vadd.f32 %v3347, %v3458
      %v3485 = vadd.f32 %v3348, %v3463
      %v3486 = vadd.f32 %v3349, %v3468
      %v3487 = vadd.f32 %v3350, %v3473
      %v3488 = vadd.f32 %v3351, %v3478
      %v3490 = vsel %vm579, %v2807, 0
      %v3493 = vsel %vm579, %v2812, 0
      %v3496 = vsel %vm579, %v2817, 0
      %v3499 = vsel %vm579, %v2822, 0
      %v3502 = vsel %vm579, %v2827, 0
      %v3505 = vsel %vm579, %v2832, 0
      %v3508 = vsel %vm579, %v2837, 0
      %v3511 = vsel %vm579, %v2842, 0
      %3513 = vmatprep.subr.mxu0 0.0
      %3514 = vmatpush1.msra.mxu0 0.0
      %3515 = vmatprep.subr.mxu0 0.0
      %3516 = vmatpush1.msra.mxu0 0.0
      %3517 = vmatprep.subr.mxu0 0.0
      %3518 = vmatpush1.msra.mxu0 0.0
      %3519 = vmatprep.subr.mxu0 0.0
      %3520 = vmatpush1.msra.mxu0 0.0
      %3521 = vmatprep.subr.mxu0 0.0
      %3522 = vmatpush1.msra.mxu0 0.0
      %3523 = vmatprep.subr.mxu0 0.0
      %3524 = vmatpush1.msra.mxu0 0.0
      %3525 = vmatprep.subr.mxu0 0.0
      %3526 = vmatpush1.msra.mxu0 0.0
      %3527 = vmatprep.subr.mxu0 0.0
      %3528 = vmatpush1.msra.mxu0 0.0
      %3529 = vmatprep.subr.mxu0 0.0
      %3530 = vmatpush1.msra.mxu0 0.0
      %3531 = vmatprep.subr.mxu0 0.0
      %3532 = vmatpush1.msra.mxu0 0.0
      %3533 = vmatprep.subr.mxu0 0.0
      %3534 = vmatpush1.msra.mxu0 0.0
      %3535 = vmatprep.subr.mxu0 0.0
      %3536 = vmatpush1.msra.mxu0 0.0
      %3537 = vmatprep.subr.mxu0 0.0
      %3538 = vmatpush1.msra.mxu0 0.0
      %3539 = vmatprep.subr.mxu0 0.0
      %3540 = vmatpush1.msra.mxu0 0.0
      %3541 = vmatprep.subr.mxu0 0.0
      %3542 = vmatpush1.msra.mxu0 %v3052
      %3543 = vmatprep.subr.mxu0 0.0
      %3544 = vmatpush1.msra.mxu0 %v3051
      %3545 = vmatprep.subr.mxu0 0.0
      %3546 = vmatpush2.msra.mxu0 0.0
      %3547 = vmatprep.subr.mxu0 0.0
      %3548 = vmatpush2.msra.mxu0 0.0
      %3549 = vmatprep.subr.mxu0 0.0
      %3550 = vmatpush2.msra.mxu0 0.0
      %3551 = vmatprep.subr.mxu0 0.0
      %3552 = vmatpush2.msra.mxu0 0.0
      %3553 = vmatprep.subr.mxu0 0.0
      %3554 = vmatpush2.msra.mxu0 0.0
      %3555 = vmatprep.subr.mxu0 0.0
      %3556 = vmatpush2.msra.mxu0 0.0
      %3557 = vmatprep.subr.mxu0 0.0
      %3558 = vmatpush2.msra.mxu0 0.0
      %3559 = vmatprep.subr.mxu0 0.0
      %3560 = vmatpush2.msra.mxu0 0.0
      %3561 = vmatprep.subr.mxu0 0.0
      %3562 = vmatpush2.msra.mxu0 0.0
      %3563 = vmatprep.subr.mxu0 0.0
      %3564 = vmatpush2.msra.mxu0 0.0
      %3565 = vmatprep.subr.mxu0 0.0
      %3566 = vmatpush2.msra.mxu0 0.0
      %3567 = vmatprep.subr.mxu0 0.0
      %3568 = vmatpush2.msra.mxu0 0.0
      %3569 = vmatprep.subr.mxu0 0.0
      %3570 = vmatpush2.msra.mxu0 0.0
      %3571 = vmatprep.subr.mxu0 0.0
      %3572 = vmatpush2.msra.mxu0 0.0
      %3573 = vmatprep.subr.mxu0 0.0
      %3574 = vmatpush2.msra.mxu0 0.0
      %3575 = vmatprep.subr.mxu0 0.0
      %3576 = vmatpush2.msra.mxu0 0.0
      %3577 = vmatprep.mubr.f32.mxu0 0.0
      %3578 = vmatmul.mubr.f32.gmra.mxu0 %v3490
      %v3579 = vpop.f32.mrf.mxu0
      %v3580 = vadd.f32 0.0, %v3579
      %v3581 = vpop.f32.mrf.mxu0
      %3582 = vmatprep.mubr.f32.mxu0 0.0
      %3583 = vmatmul.mubr.f32.gmra.mxu0 %v3493
      %v3584 = vpop.f32.mrf.mxu0
      %v3585 = vadd.f32 0.0, %v3584
      %v3586 = vpop.f32.mrf.mxu0
      %3587 = vmatprep.mubr.f32.mxu0 0.0
      %3588 = vmatmul.mubr.f32.gmra.mxu0 %v3496
      %v3589 = vpop.f32.mrf.mxu0
      %v3590 = vadd.f32 0.0, %v3589
      %v3591 = vpop.f32.mrf.mxu0
      %3592 = vmatprep.mubr.f32.mxu0 0.0
      %3593 = vmatmul.mubr.f32.gmra.mxu0 %v3499
      %v3594 = vpop.f32.mrf.mxu0
      %v3595 = vadd.f32 0.0, %v3594
      %v3596 = vpop.f32.mrf.mxu0
      %3597 = vmatprep.mubr.f32.mxu0 0.0
      %3598 = vmatmul.mubr.f32.gmra.mxu0 %v3502
      %v3599 = vpop.f32.mrf.mxu0
      %v3600 = vadd.f32 0.0, %v3599
      %v3601 = vpop.f32.mrf.mxu0
      %3602 = vmatprep.mubr.f32.mxu0 0.0
      %3603 = vmatmul.mubr.f32.gmra.mxu0 %v3505
      %v3604 = vpop.f32.mrf.mxu0
      %v3605 = vadd.f32 0.0, %v3604
      %v3606 = vpop.f32.mrf.mxu0
      %3607 = vmatprep.mubr.f32.mxu0 0.0
      %3608 = vmatmul.mubr.f32.gmra.mxu0 %v3508
      %v3609 = vpop.f32.mrf.mxu0
      %v3610 = vadd.f32 0.0, %v3609
      %v3611 = vpop.f32.mrf.mxu0
      %3612 = vmatprep.mubr.f32.mxu0 0.0
      %3613 = vmatmul.mubr.f32.gmra.mxu0 %v3511
      %v3614 = vpop.f32.mrf.mxu0
      %v3615 = vadd.f32 0.0, %v3614
      %v3616 = vpop.f32.mrf.mxu0
      %3617 = vdwg.mxu0
      %v3618 = vadd.f32 %v3481, %v3580
      %v3619 = vadd.f32 %v3482, %v3585
      %v3620 = vadd.f32 %v3483, %v3590
      %v3621 = vadd.f32 %v3484, %v3595
      %v3622 = vadd.f32 %v3485, %v3600
      %v3623 = vadd.f32 %v3486, %v3605
      %v3624 = vadd.f32 %v3487, %v3610
      %v3625 = vadd.f32 %v3488, %v3615
      %v3627 = vsel %vm579, %v2847, 0
      %v3630 = vsel %vm579, %v2852, 0
      %v3633 = vsel %vm579, %v2857, 0
      %v3636 = vsel %vm579, %v2862, 0
      %v3639 = vsel %vm579, %v2867, 0
      %v3642 = vsel %vm579, %v2872, 0
      %v3645 = vsel %vm579, %v2877, 0
      %v3648 = vsel %vm579, %v2882, 0
      %3650 = vmatprep.subr.mxu0 0.0
      %3651 = vmatpush1.msra.mxu0 0.0
      %3652 = vmatprep.subr.mxu0 0.0
      %3653 = vmatpush1.msra.mxu0 0.0
      %3654 = vmatprep.subr.mxu0 0.0
      %3655 = vmatpush1.msra.mxu0 0.0
      %3656 = vmatprep.subr.mxu0 0.0
      %3657 = vmatpush1.msra.mxu0 0.0
      %3658 = vmatprep.subr.mxu0 0.0
      %3659 = vmatpush1.msra.mxu0 0.0
      %3660 = vmatprep.subr.mxu0 0.0
      %3661 = vmatpush1.msra.mxu0 0.0
      %3662 = vmatprep.subr.mxu0 0.0
      %3663 = vmatpush1.msra.mxu0 0.0
      %3664 = vmatprep.subr.mxu0 0.0
      %3665 = vmatpush1.msra.mxu0 0.0
      %3666 = vmatprep.subr.mxu0 0.0
      %3667 = vmatpush1.msra.mxu0 0.0
      %3668 = vmatprep.subr.mxu0 0.0
      %3669 = vmatpush1.msra.mxu0 0.0
      %3670 = vmatprep.subr.mxu0 0.0
      %3671 = vmatpush1.msra.mxu0 0.0
      %3672 = vmatprep.subr.mxu0 0.0
      %3673 = vmatpush1.msra.mxu0 0.0
      %3674 = vmatprep.subr.mxu0 0.0
      %3675 = vmatpush1.msra.mxu0 0.0
      %3676 = vmatprep.subr.mxu0 0.0
      %3677 = vmatpush1.msra.mxu0 0.0
      %3678 = vmatprep.subr.mxu0 0.0
      %3679 = vmatpush1.msra.mxu0 %v3054
      %3680 = vmatprep.subr.mxu0 0.0
      %3681 = vmatpush1.msra.mxu0 %v3053
      %3682 = vmatprep.subr.mxu0 0.0
      %3683 = vmatpush2.msra.mxu0 0.0
      %3684 = vmatprep.subr.mxu0 0.0
      %3685 = vmatpush2.msra.mxu0 0.0
      %3686 = vmatprep.subr.mxu0 0.0
      %3687 = vmatpush2.msra.mxu0 0.0
      %3688 = vmatprep.subr.mxu0 0.0
      %3689 = vmatpush2.msra.mxu0 0.0
      %3690 = vmatprep.subr.mxu0 0.0
      %3691 = vmatpush2.msra.mxu0 0.0
      %3692 = vmatprep.subr.mxu0 0.0
      %3693 = vmatpush2.msra.mxu0 0.0
      %3694 = vmatprep.subr.mxu0 0.0
      %3695 = vmatpush2.msra.mxu0 0.0
      %3696 = vmatprep.subr.mxu0 0.0
      %3697 = vmatpush2.msra.mxu0 0.0
      %3698 = vmatprep.subr.mxu0 0.0
      %3699 = vmatpush2.msra.mxu0 0.0
      %3700 = vmatprep.subr.mxu0 0.0
      %3701 = vmatpush2.msra.mxu0 0.0
      %3702 = vmatprep.subr.mxu0 0.0
      %3703 = vmatpush2.msra.mxu0 0.0
      %3704 = vmatprep.subr.mxu0 0.0
      %3705 = vmatpush2.msra.mxu0 0.0
      %3706 = vmatprep.subr.mxu0 0.0
      %3707 = vmatpush2.msra.mxu0 0.0
      %3708 = vmatprep.subr.mxu0 0.0
      %3709 = vmatpush2.msra.mxu0 0.0
      %3710 = vmatprep.subr.mxu0 0.0
      %3711 = vmatpush2.msra.mxu0 0.0
      %3712 = vmatprep.subr.mxu0 0.0
      %3713 = vmatpush2.msra.mxu0 0.0
      %3714 = vmatprep.mubr.f32.mxu0 0.0
      %3715 = vmatmul.mubr.f32.gmra.mxu0 %v3627
      %v3716 = vpop.f32.mrf.mxu0
      %v3717 = vadd.f32 0.0, %v3716
      %v3718 = vpop.f32.mrf.mxu0
      %3719 = vmatprep.mubr.f32.mxu0 0.0
      %3720 = vmatmul.mubr.f32.gmra.mxu0 %v3630
      %v3721 = vpop.f32.mrf.mxu0
      %v3722 = vadd.f32 0.0, %v3721
      %v3723 = vpop.f32.mrf.mxu0
      %3724 = vmatprep.mubr.f32.mxu0 0.0
      %3725 = vmatmul.mubr.f32.gmra.mxu0 %v3633
      %v3726 = vpop.f32.mrf.mxu0
      %v3727 = vadd.f32 0.0, %v3726
      %v3728 = vpop.f32.mrf.mxu0
      %3729 = vmatprep.mubr.f32.mxu0 0.0
      %3730 = vmatmul.mubr.f32.gmra.mxu0 %v3636
      %v3731 = vpop.f32.mrf.mxu0
      %v3732 = vadd.f32 0.0, %v3731
      %v3733 = vpop.f32.mrf.mxu0
      %3734 = vmatprep.mubr.f32.mxu0 0.0
      %3735 = vmatmul.mubr.f32.gmra.mxu0 %v3639
      %v3736 = vpop.f32.mrf.mxu0
      %v3737 = vadd.f32 0.0, %v3736
      %v3738 = vpop.f32.mrf.mxu0
      %3739 = vmatprep.mubr.f32.mxu0 0.0
      %3740 = vmatmul.mubr.f32.gmra.mxu0 %v3642
      %v3741 = vpop.f32.mrf.mxu0
      %v3742 = vadd.f32 0.0, %v3741
      %v3743 = vpop.f32.mrf.mxu0
      %3744 = vmatprep.mubr.f32.mxu0 0.0
      %3745 = vmatmul.mubr.f32.gmra.mxu0 %v3645
      %v3746 = vpop.f32.mrf.mxu0
      %v3747 = vadd.f32 0.0, %v3746
      %v3748 = vpop.f32.mrf.mxu0
      %3749 = vmatprep.mubr.f32.mxu0 0.0
      %3750 = vmatmul.mubr.f32.gmra.mxu0 %v3648
      %v3751 = vpop.f32.mrf.mxu0
      %v3752 = vadd.f32 0.0, %v3751
      %v3753 = vpop.f32.mrf.mxu0
      %3754 = vdwg.mxu0
      %v3755 = vadd.f32 %v3618, %v3717
      %v3756 = vadd.f32 %v3619, %v3722
      %v3757 = vadd.f32 %v3620, %v3727
      %v3758 = vadd.f32 %v3621, %v3732
      %v3759 = vadd.f32 %v3622, %v3737
      %v3760 = vadd.f32 %v3623, %v3742
      %v3761 = vadd.f32 %v3624, %v3747
      %v3762 = vadd.f32 %v3625, %v3752
      %v3764 = vsel %vm579, %v2887, 0
      %v3767 = vsel %vm579, %v2892, 0
      %v3770 = vsel %vm579, %v2897, 0
      %v3773 = vsel %vm579, %v2902, 0
      %v3776 = vsel %vm579, %v2907, 0
      %v3779 = vsel %vm579, %v2912, 0
      %v3782 = vsel %vm579, %v2917, 0
      %v3785 = vsel %vm579, %v2922, 0
      %3787 = vmatprep.subr.mxu0 0.0
      %3788 = vmatpush1.msra.mxu0 0.0
      %3789 = vmatprep.subr.mxu0 0.0
      %3790 = vmatpush1.msra.mxu0 0.0
      %3791 = vmatprep.subr.mxu0 0.0
      %3792 = vmatpush1.msra.mxu0 0.0
      %3793 = vmatprep.subr.mxu0 0.0
      %3794 = vmatpush1.msra.mxu0 0.0
      %3795 = vmatprep.subr.mxu0 0.0
      %3796 = vmatpush1.msra.mxu0 0.0
      %3797 = vmatprep.subr.mxu0 0.0
      %3798 = vmatpush1.msra.mxu0 0.0
      %3799 = vmatprep.subr.mxu0 0.0
      %3800 = vmatpush1.msra.mxu0 0.0
      %3801 = vmatprep.subr.mxu0 0.0
      %3802 = vmatpush1.msra.mxu0 0.0
      %3803 = vmatprep.subr.mxu0 0.0
      %3804 = vmatpush1.msra.mxu0 0.0
      %3805 = vmatprep.subr.mxu0 0.0
      %3806 = vmatpush1.msra.mxu0 0.0
      %3807 = vmatprep.subr.mxu0 0.0
      %3808 = vmatpush1.msra.mxu0 0.0
      %3809 = vmatprep.subr.mxu0 0.0
      %3810 = vmatpush1.msra.mxu0 0.0
      %3811 = vmatprep.subr.mxu0 0.0
      %3812 = vmatpush1.msra.mxu0 0.0
      %3813 = vmatprep.subr.mxu0 0.0
      %3814 = vmatpush1.msra.mxu0 0.0
      %3815 = vmatprep.subr.mxu0 0.0
      %3816 = vmatpush1.msra.mxu0 %v3056
      %3817 = vmatprep.subr.mxu0 0.0
      %3818 = vmatpush1.msra.mxu0 %v3055
      %3819 = vmatprep.subr.mxu0 0.0
      %3820 = vmatpush2.msra.mxu0 0.0
      %3821 = vmatprep.subr.mxu0 0.0
      %3822 = vmatpush2.msra.mxu0 0.0
      %3823 = vmatprep.subr.mxu0 0.0
      %3824 = vmatpush2.msra.mxu0 0.0
      %3825 = vmatprep.subr.mxu0 0.0
      %3826 = vmatpush2.msra.mxu0 0.0
      %3827 = vmatprep.subr.mxu0 0.0
      %3828 = vmatpush2.msra.mxu0 0.0
      %3829 = vmatprep.subr.mxu0 0.0
      %3830 = vmatpush2.msra.mxu0 0.0
      %3831 = vmatprep.subr.mxu0 0.0
      %3832 = vmatpush2.msra.mxu0 0.0
      %3833 = vmatprep.subr.mxu0 0.0
      %3834 = vmatpush2.msra.mxu0 0.0
      %3835 = vmatprep.subr.mxu0 0.0
      %3836 = vmatpush2.msra.mxu0 0.0
      %3837 = vmatprep.subr.mxu0 0.0
      %3838 = vmatpush2.msra.mxu0 0.0
      %3839 = vmatprep.subr.mxu0 0.0
      %3840 = vmatpush2.msra.mxu0 0.0
      %3841 = vmatprep.subr.mxu0 0.0
      %3842 = vmatpush2.msra.mxu0 0.0
      %3843 = vmatprep.subr.mxu0 0.0
      %3844 = vmatpush2.msra.mxu0 0.0
      %3845 = vmatprep.subr.mxu0 0.0
      %3846 = vmatpush2.msra.mxu0 0.0
      %3847 = vmatprep.subr.mxu0 0.0
      %3848 = vmatpush2.msra.mxu0 0.0
      %3849 = vmatprep.subr.mxu0 0.0
      %3850 = vmatpush2.msra.mxu0 0.0
      %3851 = vmatprep.mubr.f32.mxu0 0.0
      %3852 = vmatmul.mubr.f32.gmra.mxu0 %v3764
      %v3853 = vpop.f32.mrf.mxu0
      %v3854 = vadd.f32 0.0, %v3853
      %v3855 = vpop.f32.mrf.mxu0
      %3856 = vmatprep.mubr.f32.mxu0 0.0
      %3857 = vmatmul.mubr.f32.gmra.mxu0 %v3767
      %v3858 = vpop.f32.mrf.mxu0
      %v3859 = vadd.f32 0.0, %v3858
      %v3860 = vpop.f32.mrf.mxu0
      %3861 = vmatprep.mubr.f32.mxu0 0.0
      %3862 = vmatmul.mubr.f32.gmra.mxu0 %v3770
      %v3863 = vpop.f32.mrf.mxu0
      %v3864 = vadd.f32 0.0, %v3863
      %v3865 = vpop.f32.mrf.mxu0
      %3866 = vmatprep.mubr.f32.mxu0 0.0
      %3867 = vmatmul.mubr.f32.gmra.mxu0 %v3773
      %v3868 = vpop.f32.mrf.mxu0
      %v3869 = vadd.f32 0.0, %v3868
      %v3870 = vpop.f32.mrf.mxu0
      %3871 = vmatprep.mubr.f32.mxu0 0.0
      %3872 = vmatmul.mubr.f32.gmra.mxu0 %v3776
      %v3873 = vpop.f32.mrf.mxu0
      %v3874 = vadd.f32 0.0, %v3873
      %v3875 = vpop.f32.mrf.mxu0
      %3876 = vmatprep.mubr.f32.mxu0 0.0
      %3877 = vmatmul.mubr.f32.gmra.mxu0 %v3779
      %v3878 = vpop.f32.mrf.mxu0
      %v3879 = vadd.f32 0.0, %v3878
      %v3880 = vpop.f32.mrf.mxu0
      %3881 = vmatprep.mubr.f32.mxu0 0.0
      %3882 = vmatmul.mubr.f32.gmra.mxu0 %v3782
      %v3883 = vpop.f32.mrf.mxu0
      %v3884 = vadd.f32 0.0, %v3883
      %v3885 = vpop.f32.mrf.mxu0
      %3886 = vmatprep.mubr.f32.mxu0 0.0
      %3887 = vmatmul.mubr.f32.gmra.mxu0 %v3785
      %v3888 = vpop.f32.mrf.mxu0
      %v3889 = vadd.f32 0.0, %v3888
      %v3890 = vpop.f32.mrf.mxu0
      %3891 = vdwg.mxu0
      %v3892 = vadd.f32 %v3755, %v3854
      %v3893 = vadd.f32 %v3756, %v3859
      %v3894 = vadd.f32 %v3757, %v3864
      %v3895 = vadd.f32 %v3758, %v3869
      %v3896 = vadd.f32 %v3759, %v3874
      %v3897 = vadd.f32 %v3760, %v3879
      %v3898 = vadd.f32 %v3761, %v3884
      %v3899 = vadd.f32 %v3762, %v3889
      %v3901 = vsel %vm579, %v2927, 0
      %v3904 = vsel %vm579, %v2932, 0
      %v3907 = vsel %vm579, %v2937, 0
      %v3910 = vsel %vm579, %v2942, 0
      %v3913 = vsel %vm579, %v2947, 0
      %v3916 = vsel %vm579, %v2952, 0
      %v3919 = vsel %vm579, %v2957, 0
      %v3922 = vsel %vm579, %v2962, 0
      %3924 = vmatprep.subr.mxu0 0.0
      %3925 = vmatpush1.msra.mxu0 0.0
      %3926 = vmatprep.subr.mxu0 0.0
      %3927 = vmatpush1.msra.mxu0 0.0
      %3928 = vmatprep.subr.mxu0 0.0
      %3929 = vmatpush1.msra.mxu0 0.0
      %3930 = vmatprep.subr.mxu0 0.0
      %3931 = vmatpush1.msra.mxu0 0.0
      %3932 = vmatprep.subr.mxu0 0.0
      %3933 = vmatpush1.msra.mxu0 0.0
      %3934 = vmatprep.subr.mxu0 0.0
      %3935 = vmatpush1.msra.mxu0 0.0
      %3936 = vmatprep.subr.mxu0 0.0
      %3937 = vmatpush1.msra.mxu0 0.0
      %3938 = vmatprep.subr.mxu0 0.0
      %3939 = vmatpush1.msra.mxu0 0.0
      %3940 = vmatprep.subr.mxu0 0.0
      %3941 = vmatpush1.msra.mxu0 0.0
      %3942 = vmatprep.subr.mxu0 0.0
      %3943 = vmatpush1.msra.mxu0 0.0
      %3944 = vmatprep.subr.mxu0 0.0
      %3945 = vmatpush1.msra.mxu0 0.0
      %3946 = vmatprep.subr.mxu0 0.0
      %3947 = vmatpush1.msra.mxu0 0.0
      %3948 = vmatprep.subr.mxu0 0.0
      %3949 = vmatpush1.msra.mxu0 0.0
      %3950 = vmatprep.subr.mxu0 0.0
      %3951 = vmatpush1.msra.mxu0 0.0
      %3952 = vmatprep.subr.mxu0 0.0
      %3953 = vmatpush1.msra.mxu0 %v3058
      %3954 = vmatprep.subr.mxu0 0.0
      %3955 = vmatpush1.msra.mxu0 %v3057
      %3956 = vmatprep.subr.mxu0 0.0
      %3957 = vmatpush2.msra.mxu0 0.0
      %3958 = vmatprep.subr.mxu0 0.0
      %3959 = vmatpush2.msra.mxu0 0.0
      %3960 = vmatprep.subr.mxu0 0.0
      %3961 = vmatpush2.msra.mxu0 0.0
      %3962 = vmatprep.subr.mxu0 0.0
      %3963 = vmatpush2.msra.mxu0 0.0
      %3964 = vmatprep.subr.mxu0 0.0
      %3965 = vmatpush2.msra.mxu0 0.0
      %3966 = vmatprep.subr.mxu0 0.0
      %3967 = vmatpush2.msra.mxu0 0.0
      %3968 = vmatprep.subr.mxu0 0.0
      %3969 = vmatpush2.msra.mxu0 0.0
      %3970 = vmatprep.subr.mxu0 0.0
      %3971 = vmatpush2.msra.mxu0 0.0
      %3972 = vmatprep.subr.mxu0 0.0
      %3973 = vmatpush2.msra.mxu0 0.0
      %3974 = vmatprep.subr.mxu0 0.0
      %3975 = vmatpush2.msra.mxu0 0.0
      %3976 = vmatprep.subr.mxu0 0.0
      %3977 = vmatpush2.msra.mxu0 0.0
      %3978 = vmatprep.subr.mxu0 0.0
      %3979 = vmatpush2.msra.mxu0 0.0
      %3980 = vmatprep.subr.mxu0 0.0
      %3981 = vmatpush2.msra.mxu0 0.0
      %3982 = vmatprep.subr.mxu0 0.0
      %3983 = vmatpush2.msra.mxu0 0.0
      %3984 = vmatprep.subr.mxu0 0.0
      %3985 = vmatpush2.msra.mxu0 0.0
      %3986 = vmatprep.subr.mxu0 0.0
      %3987 = vmatpush2.msra.mxu0 0.0
      %3988 = vmatprep.mubr.f32.mxu0 0.0
      %3989 = vmatmul.mubr.f32.gmra.mxu0 %v3901
      %v3990 = vpop.f32.mrf.mxu0
      %v3991 = vadd.f32 0.0, %v3990
      %v3992 = vpop.f32.mrf.mxu0
      %3993 = vmatprep.mubr.f32.mxu0 0.0
      %3994 = vmatmul.mubr.f32.gmra.mxu0 %v3904
      %v3995 = vpop.f32.mrf.mxu0
      %v3996 = vadd.f32 0.0, %v3995
      %v3997 = vpop.f32.mrf.mxu0
      %3998 = vmatprep.mubr.f32.mxu0 0.0
      %3999 = vmatmul.mubr.f32.gmra.mxu0 %v3907
      %v4000 = vpop.f32.mrf.mxu0
      %v4001 = vadd.f32 0.0, %v4000
      %v4002 = vpop.f32.mrf.mxu0
      %4003 = vmatprep.mubr.f32.mxu0 0.0
      %4004 = vmatmul.mubr.f32.gmra.mxu0 %v3910
      %v4005 = vpop.f32.mrf.mxu0
      %v4006 = vadd.f32 0.0, %v4005
      %v4007 = vpop.f32.mrf.mxu0
      %4008 = vmatprep.mubr.f32.mxu0 0.0
      %4009 = vmatmul.mubr.f32.gmra.mxu0 %v3913
      %v4010 = vpop.f32.mrf.mxu0
      %v4011 = vadd.f32 0.0, %v4010
      %v4012 = vpop.f32.mrf.mxu0
      %4013 = vmatprep.mubr.f32.mxu0 0.0
      %4014 = vmatmul.mubr.f32.gmra.mxu0 %v3916
      %v4015 = vpop.f32.mrf.mxu0
      %v4016 = vadd.f32 0.0, %v4015
      %v4017 = vpop.f32.mrf.mxu0
      %4018 = vmatprep.mubr.f32.mxu0 0.0
      %4019 = vmatmul.mubr.f32.gmra.mxu0 %v3919
      %v4020 = vpop.f32.mrf.mxu0
      %v4021 = vadd.f32 0.0, %v4020
      %v4022 = vpop.f32.mrf.mxu0
      %4023 = vmatprep.mubr.f32.mxu0 0.0
      %4024 = vmatmul.mubr.f32.gmra.mxu0 %v3922
      %v4025 = vpop.f32.mrf.mxu0
      %v4026 = vadd.f32 0.0, %v4025
      %v4027 = vpop.f32.mrf.mxu0
      %4028 = vdwg.mxu0
      %v4029 = vadd.f32 %v3892, %v3991
      %v4030 = vadd.f32 %v3893, %v3996
      %v4031 = vadd.f32 %v3894, %v4001
      %v4032 = vadd.f32 %v3895, %v4006
      %v4033 = vadd.f32 %v3896, %v4011
      %v4034 = vadd.f32 %v3897, %v4016
      %v4035 = vadd.f32 %v3898, %v4021
      %v4036 = vadd.f32 %v3899, %v4026
      %v4038 = vsel %vm579, %v2967, 0
      %v4041 = vsel %vm579, %v2972, 0
      %v4044 = vsel %vm579, %v2977, 0
      %v4047 = vsel %vm579, %v2982, 0
      %v4050 = vsel %vm579, %v2987, 0
      %v4053 = vsel %vm579, %v2992, 0
      %v4056 = vsel %vm579, %v2997, 0
      %v4059 = vsel %vm579, %v3002, 0
      %4061 = vmatprep.subr.mxu0 0.0
      %4062 = vmatpush1.msra.mxu0 0.0
      %4063 = vmatprep.subr.mxu0 0.0
      %4064 = vmatpush1.msra.mxu0 0.0
      %4065 = vmatprep.subr.mxu0 0.0
      %4066 = vmatpush1.msra.mxu0 0.0
      %4067 = vmatprep.subr.mxu0 0.0
      %4068 = vmatpush1.msra.mxu0 0.0
      %4069 = vmatprep.subr.mxu0 0.0
      %4070 = vmatpush1.msra.mxu0 0.0
      %4071 = vmatprep.subr.mxu0 0.0
      %4072 = vmatpush1.msra.mxu0 0.0
      %4073 = vmatprep.subr.mxu0 0.0
      %4074 = vmatpush1.msra.mxu0 0.0
      %4075 = vmatprep.subr.mxu0 0.0
      %4076 = vmatpush1.msra.mxu0 0.0
      %4077 = vmatprep.subr.mxu0 0.0
      %4078 = vmatpush1.msra.mxu0 0.0
      %4079 = vmatprep.subr.mxu0 0.0
      %4080 = vmatpush1.msra.mxu0 0.0
      %4081 = vmatprep.subr.mxu0 0.0
      %4082 = vmatpush1.msra.mxu0 0.0
      %4083 = vmatprep.subr.mxu0 0.0
      %4084 = vmatpush1.msra.mxu0 0.0
      %4085 = vmatprep.subr.mxu0 0.0
      %4086 = vmatpush1.msra.mxu0 0.0
      %4087 = vmatprep.subr.mxu0 0.0
      %4088 = vmatpush1.msra.mxu0 0.0
      %4089 = vmatprep.subr.mxu0 0.0
      %4090 = vmatpush1.msra.mxu0 %v3060
      %4091 = vmatprep.subr.mxu0 0.0
      %4092 = vmatpush1.msra.mxu0 %v3059
      %4093 = vmatprep.subr.mxu0 0.0
      %4094 = vmatpush2.msra.mxu0 0.0
      %4095 = vmatprep.subr.mxu0 0.0
      %4096 = vmatpush2.msra.mxu0 0.0
      %4097 = vmatprep.subr.mxu0 0.0
      %4098 = vmatpush2.msra.mxu0 0.0
      %4099 = vmatprep.subr.mxu0 0.0
      %4100 = vmatpush2.msra.mxu0 0.0
      %4101 = vmatprep.subr.mxu0 0.0
      %4102 = vmatpush2.msra.mxu0 0.0
      %4103 = vmatprep.subr.mxu0 0.0
      %4104 = vmatpush2.msra.mxu0 0.0
      %4105 = vmatprep.subr.mxu0 0.0
      %4106 = vmatpush2.msra.mxu0 0.0
      %4107 = vmatprep.subr.mxu0 0.0
      %4108 = vmatpush2.msra.mxu0 0.0
      %4109 = vmatprep.subr.mxu0 0.0
      %4110 = vmatpush2.msra.mxu0 0.0
      %4111 = vmatprep.subr.mxu0 0.0
      %4112 = vmatpush2.msra.mxu0 0.0
      %4113 = vmatprep.subr.mxu0 0.0
      %4114 = vmatpush2.msra.mxu0 0.0
      %4115 = vmatprep.subr.mxu0 0.0
      %4116 = vmatpush2.msra.mxu0 0.0
      %4117 = vmatprep.subr.mxu0 0.0
      %4118 = vmatpush2.msra.mxu0 0.0
      %4119 = vmatprep.subr.mxu0 0.0
      %4120 = vmatpush2.msra.mxu0 0.0
      %4121 = vmatprep.subr.mxu0 0.0
      %4122 = vmatpush2.msra.mxu0 0.0
      %4123 = vmatprep.subr.mxu0 0.0
      %4124 = vmatpush2.msra.mxu0 0.0
      %4125 = vmatprep.mubr.f32.mxu0 0.0
      %4126 = vmatmul.mubr.f32.gmra.mxu0 %v4038
      %v4127 = vpop.f32.mrf.mxu0
      %v4128 = vadd.f32 0.0, %v4127
      %v4129 = vpop.f32.mrf.mxu0
      %4130 = vmatprep.mubr.f32.mxu0 0.0
      %4131 = vmatmul.mubr.f32.gmra.mxu0 %v4041
      %v4132 = vpop.f32.mrf.mxu0
      %v4133 = vadd.f32 0.0, %v4132
      %v4134 = vpop.f32.mrf.mxu0
      %4135 = vmatprep.mubr.f32.mxu0 0.0
      %4136 = vmatmul.mubr.f32.gmra.mxu0 %v4044
      %v4137 = vpop.f32.mrf.mxu0
      %v4138 = vadd.f32 0.0, %v4137
      %v4139 = vpop.f32.mrf.mxu0
      %4140 = vmatprep.mubr.f32.mxu0 0.0
      %4141 = vmatmul.mubr.f32.gmra.mxu0 %v4047
      %v4142 = vpop.f32.mrf.mxu0
      %v4143 = vadd.f32 0.0, %v4142
      %v4144 = vpop.f32.mrf.mxu0
      %4145 = vmatprep.mubr.f32.mxu0 0.0
      %4146 = vmatmul.mubr.f32.gmra.mxu0 %v4050
      %v4147 = vpop.f32.mrf.mxu0
      %v4148 = vadd.f32 0.0, %v4147
      %v4149 = vpop.f32.mrf.mxu0
      %4150 = vmatprep.mubr.f32.mxu0 0.0
      %4151 = vmatmul.mubr.f32.gmra.mxu0 %v4053
      %v4152 = vpop.f32.mrf.mxu0
      %v4153 = vadd.f32 0.0, %v4152
      %v4154 = vpop.f32.mrf.mxu0
      %4155 = vmatprep.mubr.f32.mxu0 0.0
      %4156 = vmatmul.mubr.f32.gmra.mxu0 %v4056
      %v4157 = vpop.f32.mrf.mxu0
      %v4158 = vadd.f32 0.0, %v4157
      %v4159 = vpop.f32.mrf.mxu0
      %4160 = vmatprep.mubr.f32.mxu0 0.0
      %4161 = vmatmul.mubr.f32.gmra.mxu0 %v4059
      %v4162 = vpop.f32.mrf.mxu0
      %v4163 = vadd.f32 0.0, %v4162
      %v4164 = vpop.f32.mrf.mxu0
      %4165 = vdwg.mxu0
      %v4166 = vadd.f32 %v4029, %v4128
      %v4167 = vadd.f32 %v4030, %v4133
      %v4168 = vadd.f32 %v4031, %v4138
      %v4169 = vadd.f32 %v4032, %v4143
      %v4170 = vadd.f32 %v4033, %v4148
      %v4171 = vadd.f32 %v4034, %v4153
      %v4172 = vadd.f32 %v4035, %v4158
      %v4173 = vadd.f32 %v4036, %v4163
      %v4175 = vsel %vm579, %v3007, 0
      %v4178 = vsel %vm579, %v3012, 0
      %v4181 = vsel %vm579, %v3017, 0
      %v4184 = vsel %vm579, %v3022, 0
      %v4187 = vsel %vm579, %v3027, 0
      %v4190 = vsel %vm579, %v3032, 0
      %v4193 = vsel %vm579, %v3037, 0
      %v4196 = vsel %vm579, %v3042, 0
      %4198 = vmatprep.subr.mxu0 0.0
      %4199 = vmatpush1.msra.mxu0 0.0
      %4200 = vmatprep.subr.mxu0 0.0
      %4201 = vmatpush1.msra.mxu0 0.0
      %4202 = vmatprep.subr.mxu0 0.0
      %4203 = vmatpush1.msra.mxu0 0.0
      %4204 = vmatprep.subr.mxu0 0.0
      %4205 = vmatpush1.msra.mxu0 0.0
      %4206 = vmatprep.subr.mxu0 0.0
      %4207 = vmatpush1.msra.mxu0 0.0
      %4208 = vmatprep.subr.mxu0 0.0
      %4209 = vmatpush1.msra.mxu0 0.0
      %4210 = vmatprep.subr.mxu0 0.0
      %4211 = vmatpush1.msra.mxu0 0.0
      %4212 = vmatprep.subr.mxu0 0.0
      %4213 = vmatpush1.msra.mxu0 0.0
      %4214 = vmatprep.subr.mxu0 0.0
      %4215 = vmatpush1.msra.mxu0 0.0
      %4216 = vmatprep.subr.mxu0 0.0
      %4217 = vmatpush1.msra.mxu0 0.0
      %4218 = vmatprep.subr.mxu0 0.0
      %4219 = vmatpush1.msra.mxu0 0.0
      %4220 = vmatprep.subr.mxu0 0.0
      %4221 = vmatpush1.msra.mxu0 0.0
      %4222 = vmatprep.subr.mxu0 0.0
      %4223 = vmatpush1.msra.mxu0 0.0
      %4224 = vmatprep.subr.mxu0 0.0
      %4225 = vmatpush1.msra.mxu0 0.0
      %4226 = vmatprep.subr.mxu0 0.0
      %4227 = vmatpush1.msra.mxu0 %v3062
      %4228 = vmatprep.subr.mxu0 0.0
      %4229 = vmatpush1.msra.mxu0 %v3061
      %4230 = vmatprep.subr.mxu0 0.0
      %4231 = vmatpush2.msra.mxu0 0.0
      %4232 = vmatprep.subr.mxu0 0.0
      %4233 = vmatpush2.msra.mxu0 0.0
      %4234 = vmatprep.subr.mxu0 0.0
      %4235 = vmatpush2.msra.mxu0 0.0
      %4236 = vmatprep.subr.mxu0 0.0
      %4237 = vmatpush2.msra.mxu0 0.0
      %4238 = vmatprep.subr.mxu0 0.0
      %4239 = vmatpush2.msra.mxu0 0.0
      %4240 = vmatprep.subr.mxu0 0.0
      %4241 = vmatpush2.msra.mxu0 0.0
      %4242 = vmatprep.subr.mxu0 0.0
      %4243 = vmatpush2.msra.mxu0 0.0
      %4244 = vmatprep.subr.mxu0 0.0
      %4245 = vmatpush2.msra.mxu0 0.0
      %4246 = vmatprep.subr.mxu0 0.0
      %4247 = vmatpush2.msra.mxu0 0.0
      %4248 = vmatprep.subr.mxu0 0.0
      %4249 = vmatpush2.msra.mxu0 0.0
      %4250 = vmatprep.subr.mxu0 0.0
      %4251 = vmatpush2.msra.mxu0 0.0
      %4252 = vmatprep.subr.mxu0 0.0
      %4253 = vmatpush2.msra.mxu0 0.0
      %4254 = vmatprep.subr.mxu0 0.0
      %4255 = vmatpush2.msra.mxu0 0.0
      %4256 = vmatprep.subr.mxu0 0.0
      %4257 = vmatpush2.msra.mxu0 0.0
      %4258 = vmatprep.subr.mxu0 0.0
      %4259 = vmatpush2.msra.mxu0 0.0
      %4260 = vmatprep.subr.mxu0 0.0
      %4261 = vmatpush2.msra.mxu0 0.0
      %4262 = vmatprep.mubr.f32.mxu0 0.0
      %4263 = vmatmul.mubr.f32.gmra.mxu0 %v4175
      %v4264 = vpop.f32.mrf.mxu0
      %v4265 = vadd.f32 0.0, %v4264
      %v4266 = vpop.f32.mrf.mxu0
      %4267 = vmatprep.mubr.f32.mxu0 0.0
      %4268 = vmatmul.mubr.f32.gmra.mxu0 %v4178
      %v4269 = vpop.f32.mrf.mxu0
      %v4270 = vadd.f32 0.0, %v4269
      %v4271 = vpop.f32.mrf.mxu0
      %4272 = vmatprep.mubr.f32.mxu0 0.0
      %4273 = vmatmul.mubr.f32.gmra.mxu0 %v4181
      %v4274 = vpop.f32.mrf.mxu0
      %v4275 = vadd.f32 0.0, %v4274
      %v4276 = vpop.f32.mrf.mxu0
      %4277 = vmatprep.mubr.f32.mxu0 0.0
      %4278 = vmatmul.mubr.f32.gmra.mxu0 %v4184
      %v4279 = vpop.f32.mrf.mxu0
      %v4280 = vadd.f32 0.0, %v4279
      %v4281 = vpop.f32.mrf.mxu0
      %4282 = vmatprep.mubr.f32.mxu0 0.0
      %4283 = vmatmul.mubr.f32.gmra.mxu0 %v4187
      %v4284 = vpop.f32.mrf.mxu0
      %v4285 = vadd.f32 0.0, %v4284
      %v4286 = vpop.f32.mrf.mxu0
      %4287 = vmatprep.mubr.f32.mxu0 0.0
      %4288 = vmatmul.mubr.f32.gmra.mxu0 %v4190
      %v4289 = vpop.f32.mrf.mxu0
      %v4290 = vadd.f32 0.0, %v4289
      %v4291 = vpop.f32.mrf.mxu0
      %4292 = vmatprep.mubr.f32.mxu0 0.0
      %4293 = vmatmul.mubr.f32.gmra.mxu0 %v4193
      %v4294 = vpop.f32.mrf.mxu0
      %v4295 = vadd.f32 0.0, %v4294
      %v4296 = vpop.f32.mrf.mxu0
      %4297 = vmatprep.mubr.f32.mxu0 0.0
      %4298 = vmatmul.mubr.f32.gmra.mxu0 %v4196
      %v4299 = vpop.f32.mrf.mxu0
      %v4300 = vadd.f32 0.0, %v4299
      %v4301 = vpop.f32.mrf.mxu0
      %4302 = vdwg.mxu0
      %v4303 = vadd.f32 %v4166, %v4265
      %v4304 = vadd.f32 %v4167, %v4270
      %v4305 = vadd.f32 %v4168, %v4275
      %v4306 = vadd.f32 %v4169, %v4280
      %v4307 = vadd.f32 %v4170, %v4285
      %v4308 = vadd.f32 %v4171, %v4290
      %v4309 = vadd.f32 %v4172, %v4295
      %v4310 = vadd.f32 %v4173, %v4300
      %4311 = vst.msk [vmem:[%s514] sm:$0xff] %vm579, %v4303
      %4312 = vst.msk [vmem:[%s514 + $0x8] sm:$0xff] %vm579, %v4304
      %4313 = vst.msk [vmem:[%s514 + $0x10] sm:$0xff] %vm579, %v4305
      %4314 = vst.msk [vmem:[%s514 + $0x18] sm:$0xff] %vm579, %v4306
      %4315 = vst.msk [vmem:[%s514 + $0x20] sm:$0xff] %vm579, %v4307
      %4316 = vst.msk [vmem:[%s514 + $0x28] sm:$0xff] %vm579, %v4308
      %4317 = vst.msk [vmem:[%s514 + $0x30] sm:$0xff] %vm579, %v4309
      %4318 = vst.msk [vmem:[%s514 + $0x38] sm:$0xff] %vm579, %v4310
      %p4319 = scmp.lt.s32.totalorder %s26, 1
      %s4320 = scalar_select %p4319, %s26, 1
      %s4321 = smul.addr %s4320, 8
      %s4322 = smul.addr %s4321, 8
      %s4323 = scalar_lea.vmem %s15, %s4322
      // Predicated region
      $region81: #{swin_attention_forward.1} parent=79 // pred_check
        %p4324 = pneg %p369
      $region82: #{swin_attention_forward.1} parent=79 // pred_check_branch
        %4326 = sbr.rel (%p4324) target = $region84
      $region83: #{swin_attention_forward.1} parent=79 // pred_region
        _
      $region84: #{swin_attention_forward.1} parent=79 // pred_fallthru
        _
    $region80: #{swin_attention_forward.1} parent=5 // pred_fallthru
      _
    %p4327 = scmp.le.s32.totalorder 2, %s21
    // Predicated region
    $region85: #{swin_attention_forward.1} parent=5 // pred_check
      %p4328 = pneg %p4327
    $region86: #{swin_attention_forward.1} parent=5 // pred_check_branch
      %4330 = sbr.rel (%p4328) target = $region88
    $region87: #{swin_attention_forward.1} parent=5 // pred_region
      %s4331 = ssub.s32 %s21, 2
      // Predicated region
      $region89: #{swin_attention_forward.1} parent=87 // pred_check
        %p4332 = pneg %p375
      $region90: #{swin_attention_forward.1} parent=87 // pred_check_branch
        %4334 = sbr.rel (%p4332) target = $region92
      $region91: #{swin_attention_forward.1} parent=87 // pred_region
        %p4335 = scmp.lt.s32.totalorder %s27, 1
        %s4336 = scalar_select %p4335, %s27, 1
        %s4337 = smul.addr %s4336, 8
        %s4338 = smul.addr %s4337, 8
        %s4339 = scalar_lea.vmem %s15, %s4338
      $region92: #{swin_attention_forward.1} parent=87 // pred_fallthru
        _
    $region88: #{swin_attention_forward.1} parent=5 // pred_fallthru
      _
  $region6: #{swin_attention_forward.1} parent=0 // loop_footer
    %s25 = sadd.s32 1, %s21
  $region7: #{swin_attention_forward.1} parent=0 // loop_footer_branch
    %20 = sbr.rel target = $region3
  $region8: #{swin_attention_forward.1} parent=0 // loop_exit
    _

</llo_original>
